<compile_context>
chip_gen: v7x
topology: tpu7x:2x2x1
jax: 0.10.0
libtpu: 0.0.40
codegen_flags: <defaults>
</compile_context>

<pallas_src>
import functools

import jax
import jax.numpy as jnp
import numpy as np
from jax import lax
from jax.experimental import pallas as pl
from jax.experimental.pallas import tpu as pltpu  # noqa: F401  (TPU backend)

LANE = 128


def _round_up(x, m):
    return (x + m - 1) // m * m


# ----------------------------------------------------------------------------
# Pallas kernel: fused  out = act(A @ B + bias)   (B / bias pre-padded to N=128)
# ----------------------------------------------------------------------------
def _matmul_bias_kernel(a_ref, b_ref, bias_ref, o_ref, *, relu: bool):
    acc = jnp.dot(a_ref[...], b_ref[...], preferred_element_type=jnp.float32)
    acc = acc + bias_ref[...]              # (1, N) broadcasts over rows
    if relu:
        acc = jnp.maximum(acc, 0.0)
    o_ref[...] = acc.astype(o_ref.dtype)


def pallas_matmul_bias(a, b, bias2d, *, relu: bool):
    """a: (M, K) f32, b: (K, N=128k) f32, bias2d: (1, N) f32 -> (M, N) f32."""
    M, K = a.shape
    K2, N = b.shape
    assert K == K2, (K, K2)
    assert N % LANE == 0, N
    kernel = functools.partial(_matmul_bias_kernel, relu=relu)
    return pl.pallas_call(
        kernel,
        out_shape=jax.ShapeDtypeStruct((M, N), jnp.float32),
        # Problem sizes are tiny (M <= 800, K <= 3136, N = 128); whole operands
        # fit comfortably in VMEM, so use full-array blocks with a trivial grid.
        in_specs=[
            pl.BlockSpec((M, K), lambda: (0, 0)),
            pl.BlockSpec((K, N), lambda: (0, 0)),
            pl.BlockSpec((1, N), lambda: (0, 0)),
        ],
        out_specs=pl.BlockSpec((M, N), lambda: (0, 0)),
    )(a, b, bias2d)


# ----------------------------------------------------------------------------
# im2col glue (plain JAX) — NHWC, patch columns ordered (kh, kw, c)
# ----------------------------------------------------------------------------
def im2col_nhwc(x, kh, kw, stride):
    """x: (N, H, W, C) -> (N*OH*OW, KH*KW*C), plus (OH, OW)."""
    n, h, w, c = x.shape
    oh = (h - kh) // stride + 1
    ow = (w - kw) // stride + 1
    cols = []
    for i in range(kh):
        for j in range(kw):
            cols.append(
                x[:,
                  i: i + stride * (oh - 1) + 1: stride,
                  j: j + stride * (ow - 1) + 1: stride,
                  :])                                   # (N, OH, OW, C)
    patches = jnp.stack(cols, axis=3)                   # (N, OH, OW, KH*KW, C)
    return patches.reshape(n * oh * ow, kh * kw * c), oh, ow


def conv2d_relu_nhwc(x, w2d, b2d, *, kh, kw, c_out, stride):
    """Conv2d (padding=0) + ReLU via NHWC im2col + Pallas matmul.

    x: (N, H, W, C_in); w2d: (KH*KW*C_in, 128-padded C_out); b2d: (1, padded).
    returns (N, OH, OW, C_out)  (NHWC, no transpose needed).
    """
    n = x.shape[0]
    patches, oh, ow = im2col_nhwc(x, kh, kw, stride)    # (N*OH*OW, KH*KW*C_in)
    out = pallas_matmul_bias(patches, w2d, b2d, relu=True)   # (N*OH*OW, 128)
    return out[:, :c_out].reshape(n, oh, ow, c_out)


# ----------------------------------------------------------------------------
# Parameter init (PyTorch-like) and one-time repacking for the Pallas path
# ----------------------------------------------------------------------------
def init_params(key, in_channels, output_shape):
    ks = jax.random.split(key, 8)

    def u(k, shape, fan_in):
        bound = 1.0 / np.sqrt(fan_in)
        return jax.random.uniform(k, shape, jnp.float32, -bound, bound)

    p = {}
    p["w1"] = u(ks[0], (32, in_channels, 8, 8), in_channels * 8 * 8)
    p["b1"] = u(ks[1], (32,), in_channels * 8 * 8)
    p["w2"] = u(ks[2], (64, 32, 3, 3), 32 * 3 * 3)
    p["b2"] = u(ks[3], (64,), 32 * 3 * 3)
    p["w3"] = u(ks[4], (64, 64, 3, 3), 64 * 3 * 3)
    p["b3"] = u(ks[5], (64,), 64 * 3 * 3)
    p["wo"] = u(ks[6], (output_shape, 64 * 7 * 7), 64 * 7 * 7)
    p["bo"] = u(ks[7], (output_shape,), 64 * 7 * 7)
    return p


def pack_params(params):
    """Repack PyTorch-layout weights once: (kh,kw,cin)-major rows, N padded to 128."""

    def pack_conv(w, b):
        c_out, c_in, kh, kw = w.shape
        w2d = w.transpose(2, 3, 1, 0).reshape(kh * kw * c_in, c_out)
        n_pad = _round_up(c_out, LANE)
        w2d = jnp.pad(w2d, ((0, 0), (0, n_pad - c_out))).astype(jnp.float32)
        b2d = jnp.pad(b, (0, n_pad - c_out)).reshape(1, n_pad).astype(jnp.float32)
        return w2d, b2d

    def pack_fc(w, b, c, h, ww):
        # torch flattens NCHW -> columns in (c,h,w) order; our activations are
        # NHWC-flattened (h,w,c), so permute the FC weight columns once here.
        out_f = w.shape[0]
        w2d = w.reshape(out_f, c, h, ww).transpose(2, 3, 1, 0).reshape(h * ww * c, out_f)
        n_pad = _round_up(out_f, LANE)
        w2d = jnp.pad(w2d, ((0, 0), (0, n_pad - out_f))).astype(jnp.float32)
        b2d = jnp.pad(b, (0, n_pad - out_f)).reshape(1, n_pad).astype(jnp.float32)
        return w2d, b2d

    w1, b1 = pack_conv(params["w1"], params["b1"])
    w2, b2 = pack_conv(params["w2"], params["b2"])
    w3, b3 = pack_conv(params["w3"], params["b3"])
    wo, bo = pack_fc(params["wo"], params["bo"], 64, 7, 7)
    return dict(w1=w1, b1=b1, w2=w2, b2=b2, w3=w3, b3=b3, wo=wo, bo=bo)


# ----------------------------------------------------------------------------
# CNN forward (Pallas path)
# ----------------------------------------------------------------------------
def cnn_forward(packed, x, *, output_shape):
    """x: (N, C, 84, 84) float32 (NCHW, as torch) -> (N, output_shape) float32."""
    x = x.astype(jnp.float32).transpose(0, 2, 3, 1)                       # -> NHWC once
    x = conv2d_relu_nhwc(x, packed["w1"], packed["b1"], kh=8, kw=8, c_out=32, stride=4)
    x = conv2d_relu_nhwc(x, packed["w2"], packed["b2"], kh=3, kw=3, c_out=64, stride=2)
    x = conv2d_relu_nhwc(x, packed["w3"], packed["b3"], kh=3, kw=3, c_out=64, stride=1)
    x = x.reshape(x.shape[0], -1)                                         # (N, 7*7*64) NHWC-flatten
    y = pallas_matmul_bias(x, packed["wo"], packed["bo"], relu=False)     # (N, 128)
    return y[:, :output_shape]


# ----------------------------------------------------------------------------
# Pure-JAX reference (for the sanity check)
# ----------------------------------------------------------------------------
def cnn_reference(params, x):
    def conv(x, w, b, s):
        y = lax.conv_general_dilated(x, w, (s, s), "VALID",
                                     dimension_numbers=("NCHW", "OIHW", "NCHW"),
                                     precision=lax.Precision.HIGHEST)
        return jax.nn.relu(y + b[None, :, None, None])

    x = x.astype(jnp.float32)
    x = conv(x, params["w1"], params["b1"], 4)
    x = conv(x, params["w2"], params["b2"], 2)
    x = conv(x, params["w3"], params["b3"], 1)
    x = x.reshape(x.shape[0], -1)
    return jnp.dot(x, params["wo"].T, precision=lax.Precision.HIGHEST) + params["bo"]


if __name__ == "__main__":
    # The module's Linear layer hardcodes 64*7*7, which implies 84x84 spatial
    # input; keep batch and channel counts small.
    batch, in_channels, H, W = 2, 4, 84, 84
    output_shape = 6

    key = jax.random.PRNGKey(0)
    k_param, k_x = jax.random.split(key)
    params = init_params(k_param, in_channels, output_shape)
    packed = pack_params(params)
    x = jax.random.normal(k_x, (batch, in_channels, H, W), jnp.float32)

    fwd = jax.jit(functools.partial(cnn_forward, output_shape=output_shape))
    out = jax.block_until_ready(fwd(packed, x))
    ref = jax.block_until_ready(cnn_reference(params, x))

    assert out.shape == (batch, output_shape), out.shape
    # All-f32 path; tolerance allows for MXU multi-pass vs XLA conv rounding.
    np.testing.assert_allclose(np.asarray(out), np.asarray(ref), rtol=5e-3, atol=5e-3)
    print("KERNEL_OK")
</pallas_src>

<mosaic_0001>
module attributes {stable_mosaic.version = 11 : i64} {
  func.func @_matmul_bias_kernel(%arg0: memref<800x256xf32, #tpu.memory_space<vmem>>, %arg1: memref<256x128xf32, #tpu.memory_space<vmem>>, %arg2: memref<1x128xf32, #tpu.memory_space<vmem>>, %arg3: memref<800x128xf32, #tpu.memory_space<vmem>>) attributes {dimension_semantics = [], scalar_prefetch = 0 : i64, scratch_operands = 0 : i64, tpu.core_type = #tpu.core_type<tc>} {
    %c0 = arith.constant 0 : index
    %c0_0 = arith.constant 0 : index
    %0 = vector.load %arg0[%c0, %c0_0] : memref<800x256xf32, #tpu.memory_space<vmem>>, vector<800x256xf32>
    %c0_1 = arith.constant 0 : index
    %c0_2 = arith.constant 0 : index
    %1 = vector.load %arg1[%c0_1, %c0_2] : memref<256x128xf32, #tpu.memory_space<vmem>>, vector<256x128xf32>
    %cst = arith.constant dense<0.000000e+00> : vector<800x128xf32>
    %2 = tpu.matmul %0, %1, %cst {dimension_numbers = #tpu.dot_dimension_numbers<[1], [0], [0], [1], [0, 0, 1, 1], [], []>} : vector<800x256xf32>, vector<256x128xf32>, vector<800x128xf32> -> vector<800x128xf32>
    %c0_3 = arith.constant 0 : index
    %c0_4 = arith.constant 0 : index
    %3 = vector.load %arg2[%c0_3, %c0_4] : memref<1x128xf32, #tpu.memory_space<vmem>>, vector<1x128xf32>
    %4 = vector.broadcast %3 : vector<1x128xf32> to vector<800x128xf32>
    %5 = arith.addf %2, %4 : vector<800x128xf32>
    %cst_5 = arith.constant 0.000000e+00 : f32
    %6 = vector.broadcast %cst_5 : f32 to vector<800x128xf32>
    %7 = arith.maximumf %5, %6 : vector<800x128xf32>
    %c0_6 = arith.constant 0 : index
    %c0_7 = arith.constant 0 : index
    %8 = vector.load %arg3[%c0_6, %c0_7] : memref<800x128xf32, #tpu.memory_space<vmem>>, vector<800x128xf32>
    tpu.vector_store %arg3[%c0_6, %c0_7], %7 {strides = array<i32>} : memref<800x128xf32, #tpu.memory_space<vmem>>, vector<800x128xf32>,
    return
  }
}

module attributes {stable_mosaic.version = 11 : i64} {
  func.func @_matmul_bias_kernel(%arg0: memref<162x288xf32, #tpu.memory_space<vmem>>, %arg1: memref<288x128xf32, #tpu.memory_space<vmem>>, %arg2: memref<1x128xf32, #tpu.memory_space<vmem>>, %arg3: memref<162x128xf32, #tpu.memory_space<vmem>>) attributes {dimension_semantics = [], scalar_prefetch = 0 : i64, scratch_operands = 0 : i64, tpu.core_type = #tpu.core_type<tc>} {
    %c0 = arith.constant 0 : index
    %c0_0 = arith.constant 0 : index
    %0 = vector.load %arg0[%c0, %c0_0] : memref<162x288xf32, #tpu.memory_space<vmem>>, vector<162x288xf32>
    %c0_1 = arith.constant 0 : index
    %c0_2 = arith.constant 0 : index
    %1 = vector.load %arg1[%c0_1, %c0_2] : memref<288x128xf32, #tpu.memory_space<vmem>>, vector<288x128xf32>
    %cst = arith.constant dense<0.000000e+00> : vector<162x128xf32>
    %2 = tpu.matmul %0, %1, %cst {dimension_numbers = #tpu.dot_dimension_numbers<[1], [0], [0], [1], [0, 0, 1, 1], [], []>} : vector<162x288xf32>, vector<288x128xf32>, vector<162x128xf32> -> vector<162x128xf32>
    %c0_3 = arith.constant 0 : index
    %c0_4 = arith.constant 0 : index
    %3 = vector.load %arg2[%c0_3, %c0_4] : memref<1x128xf32, #tpu.memory_space<vmem>>, vector<1x128xf32>
    %4 = vector.broadcast %3 : vector<1x128xf32> to vector<162x128xf32>
    %5 = arith.addf %2, %4 : vector<162x128xf32>
    %cst_5 = arith.constant 0.000000e+00 : f32
    %6 = vector.broadcast %cst_5 : f32 to vector<162x128xf32>
    %7 = arith.maximumf %5, %6 : vector<162x128xf32>
    %c0_6 = arith.constant 0 : index
    %c0_7 = arith.constant 0 : index
    %8 = vector.load %arg3[%c0_6, %c0_7] : memref<162x128xf32, #tpu.memory_space<vmem>>, vector<162x128xf32>
    tpu.vector_store %arg3[%c0_6, %c0_7], %7 {strides = array<i32>} : memref<162x128xf32, #tpu.memory_space<vmem>>, vector<162x128xf32>,
    return
  }
}

module attributes {stable_mosaic.version = 11 : i64} {
  func.func @_matmul_bias_kernel(%arg0: memref<98x576xf32, #tpu.memory_space<vmem>>, %arg1: memref<576x128xf32, #tpu.memory_space<vmem>>, %arg2: memref<1x128xf32, #tpu.memory_space<vmem>>, %arg3: memref<98x128xf32, #tpu.memory_space<vmem>>) attributes {dimension_semantics = [], scalar_prefetch = 0 : i64, scratch_operands = 0 : i64, tpu.core_type = #tpu.core_type<tc>} {
    %c0 = arith.constant 0 : index
    %c0_0 = arith.constant 0 : index
    %0 = vector.load %arg0[%c0, %c0_0] : memref<98x576xf32, #tpu.memory_space<vmem>>, vector<98x576xf32>
    %c0_1 = arith.constant 0 : index
    %c0_2 = arith.constant 0 : index
    %1 = vector.load %arg1[%c0_1, %c0_2] : memref<576x128xf32, #tpu.memory_space<vmem>>, vector<576x128xf32>
    %cst = arith.constant dense<0.000000e+00> : vector<98x128xf32>
    %2 = tpu.matmul %0, %1, %cst {dimension_numbers = #tpu.dot_dimension_numbers<[1], [0], [0], [1], [0, 0, 1, 1], [], []>} : vector<98x576xf32>, vector<576x128xf32>, vector<98x128xf32> -> vector<98x128xf32>
    %c0_3 = arith.constant 0 : index
    %c0_4 = arith.constant 0 : index
    %3 = vector.load %arg2[%c0_3, %c0_4] : memref<1x128xf32, #tpu.memory_space<vmem>>, vector<1x128xf32>
    %4 = vector.broadcast %3 : vector<1x128xf32> to vector<98x128xf32>
    %5 = arith.addf %2, %4 : vector<98x128xf32>
    %cst_5 = arith.constant 0.000000e+00 : f32
    %6 = vector.broadcast %cst_5 : f32 to vector<98x128xf32>
    %7 = arith.maximumf %5, %6 : vector<98x128xf32>
    %c0_6 = arith.constant 0 : index
    %c0_7 = arith.constant 0 : index
    %8 = vector.load %arg3[%c0_6, %c0_7] : memref<98x128xf32, #tpu.memory_space<vmem>>, vector<98x128xf32>
    tpu.vector_store %arg3[%c0_6, %c0_7], %7 {strides = array<i32>} : memref<98x128xf32, #tpu.memory_space<vmem>>, vector<98x128xf32>,
    return
  }
}

module attributes {stable_mosaic.version = 11 : i64} {
  func.func @_matmul_bias_kernel(%arg0: memref<2x3136xf32, #tpu.memory_space<vmem>>, %arg1: memref<3136x128xf32, #tpu.memory_space<vmem>>, %arg2: memref<1x128xf32, #tpu.memory_space<vmem>>, %arg3: memref<2x128xf32, #tpu.memory_space<vmem>>) attributes {dimension_semantics = [], scalar_prefetch = 0 : i64, scratch_operands = 0 : i64, tpu.core_type = #tpu.core_type<tc>} {
    %c0 = arith.constant 0 : index
    %c0_0 = arith.constant 0 : index
    %0 = vector.load %arg0[%c0, %c0_0] : memref<2x3136xf32, #tpu.memory_space<vmem>>, vector<2x3136xf32>
    %c0_1 = arith.constant 0 : index
    %c0_2 = arith.constant 0 : index
    %1 = vector.load %arg1[%c0_1, %c0_2] : memref<3136x128xf32, #tpu.memory_space<vmem>>, vector<3136x128xf32>
    %cst = arith.constant dense<0.000000e+00> : vector<2x128xf32>
    %2 = tpu.matmul %0, %1, %cst {dimension_numbers = #tpu.dot_dimension_numbers<[1], [0], [0], [1], [0, 0, 1, 1], [], []>} : vector<2x3136xf32>, vector<3136x128xf32>, vector<2x128xf32> -> vector<2x128xf32>
    %c0_3 = arith.constant 0 : index
    %c0_4 = arith.constant 0 : index
    %3 = vector.load %arg2[%c0_3, %c0_4] : memref<1x128xf32, #tpu.memory_space<vmem>>, vector<1x128xf32>
    %4 = vector.broadcast %3 : vector<1x128xf32> to vector<2x128xf32>
    %5 = arith.addf %2, %4 : vector<2x128xf32>
    %c0_5 = arith.constant 0 : index
    %c0_6 = arith.constant 0 : index
    %6 = vector.load %arg3[%c0_5, %c0_6] : memref<2x128xf32, #tpu.memory_space<vmem>>, vector<2x128xf32>
    tpu.vector_store %arg3[%c0_5, %c0_6], %5 {strides = array<i32>} : memref<2x128xf32, #tpu.memory_space<vmem>>, vector<2x128xf32>,
    return
  }
}

</mosaic_0001>

<llo_original>
// kernel: cnn_forward.4
$region0: #{cnn_forward.4}
  #allocation0 [shape = 'u32[]', space=smem, size = 0x4, offset = 0x4, fixed_abs, tag = 'smem constant byte address 0x4 - core index']
  #allocation1 [shape = 'u32[144,128]{1,0:T(1,128)}', space=vmem, size = 0x12000, scoped, tag = 'internal scratch']
  %s0 = inlined_call_operand.vmem [shape: f32[800,256], index: 0, kind: input, shape index: {}]
  %s1 = inlined_call_operand.vmem [shape: f32[256,128], index: 1, kind: input, shape index: {}]
  %s2 = inlined_call_operand.vmem [shape: f32[1,128], index: 2, kind: input, shape index: {}]
  %s3 = inlined_call_operand.vmem [shape: f32[800,128], index: 3, kind: output, shape index: {}]
  %s4 = sld [smem:[#allocation0]]
  $region22: #{cnn_forward.4} parent=0
    _
  %s6 = ssub.s32 1, %s4
  %s7 = scalar_select 0, %s6, %s4
  // Predicated region
  $region2: #{cnn_forward.4} parent=0 // pred_check
    _
  $region3: #{cnn_forward.4} parent=0 // pred_check_branch
    %9 = sbr.rel (0) target = $region5
  $region4: #{cnn_forward.4} parent=0 // pred_region
    _
  $region5: #{cnn_forward.4} parent=0 // pred_fallthru
    _
  // Predicated region
  $region6: #{cnn_forward.4} parent=0 // pred_check
    _
  $region7: #{cnn_forward.4} parent=0 // pred_check_branch
    %11 = sbr.rel (0) target = $region9
  $region8: #{cnn_forward.4} parent=0 // pred_region
    _
  $region9: #{cnn_forward.4} parent=0 // pred_fallthru
    _
  // Predicated region
  $region10: #{cnn_forward.4} parent=0 // pred_check
    _
  $region11: #{cnn_forward.4} parent=0 // pred_check_branch
    %13 = sbr.rel (0) target = $region13
  $region12: #{cnn_forward.4} parent=0 // pred_region
    _
  $region13: #{cnn_forward.4} parent=0 // pred_fallthru
    _
  %v14 = vld [vmem:[%s0] sm:$0xff]
  %v15 = vld [vmem:[%s0 + $0x8] sm:$0xff]
  %v16 = vld [vmem:[%s0 + $0x10] sm:$0xff]
  %v17 = vld [vmem:[%s0 + $0x18] sm:$0xff]
  %v18 = vld [vmem:[%s0 + $0x20] sm:$0xff]
  %v19 = vld [vmem:[%s0 + $0x28] sm:$0xff]
  %v20 = vld [vmem:[%s0 + $0x30] sm:$0xff]
  %v21 = vld [vmem:[%s0 + $0x38] sm:$0xff]
  %v22 = vld [vmem:[%s0 + $0x40] sm:$0xff]
  %v23 = vld [vmem:[%s0 + $0x48] sm:$0xff]
  %v24 = vld [vmem:[%s0 + $0x50] sm:$0xff]
  %v25 = vld [vmem:[%s0 + $0x58] sm:$0xff]
  %v26 = vld [vmem:[%s0 + $0x60] sm:$0xff]
  %v27 = vld [vmem:[%s0 + $0x68] sm:$0xff]
  %v28 = vld [vmem:[%s0 + $0x70] sm:$0xff]
  %v29 = vld [vmem:[%s0 + $0x78] sm:$0xff]
  %v30 = vld [vmem:[%s0 + $0x80] sm:$0xff]
  %v31 = vld [vmem:[%s0 + $0x88] sm:$0xff]
  %v32 = vld [vmem:[%s0 + $0x90] sm:$0xff]
  %v33 = vld [vmem:[%s0 + $0x98] sm:$0xff]
  %v34 = vld [vmem:[%s0 + $0xa0] sm:$0xff]
  %v35 = vld [vmem:[%s0 + $0xa8] sm:$0xff]
  %v36 = vld [vmem:[%s0 + $0xb0] sm:$0xff]
  %v37 = vld [vmem:[%s0 + $0xb8] sm:$0xff]
  %v38 = vld [vmem:[%s0 + $0xc0] sm:$0xff]
  %v39 = vld [vmem:[%s0 + $0xc8] sm:$0xff]
  %v40 = vld [vmem:[%s0 + $0xd0] sm:$0xff]
  %v41 = vld [vmem:[%s0 + $0xd8] sm:$0xff]
  %v42 = vld [vmem:[%s0 + $0xe0] sm:$0xff]
  %v43 = vld [vmem:[%s0 + $0xe8] sm:$0xff]
  %v44 = vld [vmem:[%s0 + $0xf0] sm:$0xff]
  %v45 = vld [vmem:[%s0 + $0xf8] sm:$0xff]
  %v46 = vld [vmem:[%s0 + $0x100] sm:$0xff]
  %v47 = vld [vmem:[%s0 + $0x108] sm:$0xff]
  %v48 = vld [vmem:[%s0 + $0x110] sm:$0xff]
  %v49 = vld [vmem:[%s0 + $0x118] sm:$0xff]
  %v50 = vld [vmem:[%s0 + $0x120] sm:$0xff]
  %v51 = vld [vmem:[%s0 + $0x128] sm:$0xff]
  %v52 = vld [vmem:[%s0 + $0x130] sm:$0xff]
  %v53 = vld [vmem:[%s0 + $0x138] sm:$0xff]
  %v54 = vld [vmem:[%s0 + $0x140] sm:$0xff]
  %v55 = vld [vmem:[%s0 + $0x148] sm:$0xff]
  %v56 = vld [vmem:[%s0 + $0x150] sm:$0xff]
  %v57 = vld [vmem:[%s0 + $0x158] sm:$0xff]
  %v58 = vld [vmem:[%s0 + $0x160] sm:$0xff]
  %v59 = vld [vmem:[%s0 + $0x168] sm:$0xff]
  %v60 = vld [vmem:[%s0 + $0x170] sm:$0xff]
  %v61 = vld [vmem:[%s0 + $0x178] sm:$0xff]
  %v62 = vld [vmem:[%s0 + $0x180] sm:$0xff]
  %v63 = vld [vmem:[%s0 + $0x188] sm:$0xff]
  %v64 = vld [vmem:[%s0 + $0x190] sm:$0xff]
  %v65 = vld [vmem:[%s0 + $0x198] sm:$0xff]
  %v66 = vld [vmem:[%s0 + $0x1a0] sm:$0xff]
  %v67 = vld [vmem:[%s0 + $0x1a8] sm:$0xff]
  %v68 = vld [vmem:[%s0 + $0x1b0] sm:$0xff]
  %v69 = vld [vmem:[%s0 + $0x1b8] sm:$0xff]
  %v70 = vld [vmem:[%s0 + $0x1c0] sm:$0xff]
  %v71 = vld [vmem:[%s0 + $0x1c8] sm:$0xff]
  %v72 = vld [vmem:[%s0 + $0x1d0] sm:$0xff]
  %v73 = vld [vmem:[%s0 + $0x1d8] sm:$0xff]
  %v74 = vld [vmem:[%s0 + $0x1e0] sm:$0xff]
  %v75 = vld [vmem:[%s0 + $0x1e8] sm:$0xff]
  %v76 = vld [vmem:[%s0 + $0x1f0] sm:$0xff]
  %v77 = vld [vmem:[%s0 + $0x1f8] sm:$0xff]
  %v78 = vld [vmem:[%s0 + $0x200] sm:$0xff]
  %v79 = vld [vmem:[%s0 + $0x208] sm:$0xff]
  %v80 = vld [vmem:[%s0 + $0x210] sm:$0xff]
  %v81 = vld [vmem:[%s0 + $0x218] sm:$0xff]
  %v82 = vld [vmem:[%s0 + $0x220] sm:$0xff]
  %v83 = vld [vmem:[%s0 + $0x228] sm:$0xff]
  %v84 = vld [vmem:[%s0 + $0x230] sm:$0xff]
  %v85 = vld [vmem:[%s0 + $0x238] sm:$0xff]
  %v86 = vld [vmem:[%s0 + $0x240] sm:$0xff]
  %v87 = vld [vmem:[%s0 + $0x248] sm:$0xff]
  %v88 = vld [vmem:[%s0 + $0x250] sm:$0xff]
  %v89 = vld [vmem:[%s0 + $0x258] sm:$0xff]
  %v90 = vld [vmem:[%s0 + $0x260] sm:$0xff]
  %v91 = vld [vmem:[%s0 + $0x268] sm:$0xff]
  %v92 = vld [vmem:[%s0 + $0x270] sm:$0xff]
  %v93 = vld [vmem:[%s0 + $0x278] sm:$0xff]
  %v94 = vld [vmem:[%s0 + $0x280] sm:$0xff]
  %v95 = vld [vmem:[%s0 + $0x288] sm:$0xff]
  %v96 = vld [vmem:[%s0 + $0x290] sm:$0xff]
  %v97 = vld [vmem:[%s0 + $0x298] sm:$0xff]
  %v98 = vld [vmem:[%s0 + $0x2a0] sm:$0xff]
  %v99 = vld [vmem:[%s0 + $0x2a8] sm:$0xff]
  %v100 = vld [vmem:[%s0 + $0x2b0] sm:$0xff]
  %v101 = vld [vmem:[%s0 + $0x2b8] sm:$0xff]
  %v102 = vld [vmem:[%s0 + $0x2c0] sm:$0xff]
  %v103 = vld [vmem:[%s0 + $0x2c8] sm:$0xff]
  %v104 = vld [vmem:[%s0 + $0x2d0] sm:$0xff]
  %v105 = vld [vmem:[%s0 + $0x2d8] sm:$0xff]
  %v106 = vld [vmem:[%s0 + $0x2e0] sm:$0xff]
  %v107 = vld [vmem:[%s0 + $0x2e8] sm:$0xff]
  %v108 = vld [vmem:[%s0 + $0x2f0] sm:$0xff]
  %v109 = vld [vmem:[%s0 + $0x2f8] sm:$0xff]
  %v110 = vld [vmem:[%s0 + $0x300] sm:$0xff]
  %v111 = vld [vmem:[%s0 + $0x308] sm:$0xff]
  %v112 = vld [vmem:[%s0 + $0x310] sm:$0xff]
  %v113 = vld [vmem:[%s0 + $0x318] sm:$0xff]
  %v114 = vld [vmem:[%s0 + $0x320] sm:$0xff]
  %v115 = vld [vmem:[%s0 + $0x328] sm:$0xff]
  %v116 = vld [vmem:[%s0 + $0x330] sm:$0xff]
  %v117 = vld [vmem:[%s0 + $0x338] sm:$0xff]
  %v118 = vld [vmem:[%s0 + $0x340] sm:$0xff]
  %v119 = vld [vmem:[%s0 + $0x348] sm:$0xff]
  %v120 = vld [vmem:[%s0 + $0x350] sm:$0xff]
  %v121 = vld [vmem:[%s0 + $0x358] sm:$0xff]
  %v122 = vld [vmem:[%s0 + $0x360] sm:$0xff]
  %v123 = vld [vmem:[%s0 + $0x368] sm:$0xff]
  %v124 = vld [vmem:[%s0 + $0x370] sm:$0xff]
  %v125 = vld [vmem:[%s0 + $0x378] sm:$0xff]
  %v126 = vld [vmem:[%s0 + $0x380] sm:$0xff]
  %v127 = vld [vmem:[%s0 + $0x388] sm:$0xff]
  %v128 = vld [vmem:[%s0 + $0x390] sm:$0xff]
  %v129 = vld [vmem:[%s0 + $0x398] sm:$0xff]
  %v130 = vld [vmem:[%s0 + $0x3a0] sm:$0xff]
  %v131 = vld [vmem:[%s0 + $0x3a8] sm:$0xff]
  %v132 = vld [vmem:[%s0 + $0x3b0] sm:$0xff]
  %v133 = vld [vmem:[%s0 + $0x3b8] sm:$0xff]
  %v134 = vld [vmem:[%s0 + $0x3c0] sm:$0xff]
  %v135 = vld [vmem:[%s0 + $0x3c8] sm:$0xff]
  %v136 = vld [vmem:[%s0 + $0x3d0] sm:$0xff]
  %v137 = vld [vmem:[%s0 + $0x3d8] sm:$0xff]
  %v138 = vld [vmem:[%s0 + $0x3e0] sm:$0xff]
  %v139 = vld [vmem:[%s0 + $0x3e8] sm:$0xff]
  %v140 = vld [vmem:[%s0 + $0x3f0] sm:$0xff]
  %v141 = vld [vmem:[%s0 + $0x3f8] sm:$0xff]
  %v142 = vld [vmem:[%s0 + $0x400] sm:$0xff]
  %v143 = vld [vmem:[%s0 + $0x408] sm:$0xff]
  %v144 = vld [vmem:[%s0 + $0x410] sm:$0xff]
  %v145 = vld [vmem:[%s0 + $0x418] sm:$0xff]
  %v146 = vld [vmem:[%s0 + $0x420] sm:$0xff]
  %v147 = vld [vmem:[%s0 + $0x428] sm:$0xff]
  %v148 = vld [vmem:[%s0 + $0x430] sm:$0xff]
  %v149 = vld [vmem:[%s0 + $0x438] sm:$0xff]
  %v150 = vld [vmem:[%s0 + $0x440] sm:$0xff]
  %v151 = vld [vmem:[%s0 + $0x448] sm:$0xff]
  %v152 = vld [vmem:[%s0 + $0x450] sm:$0xff]
  %v153 = vld [vmem:[%s0 + $0x458] sm:$0xff]
  %v154 = vld [vmem:[%s0 + $0x460] sm:$0xff]
  %v155 = vld [vmem:[%s0 + $0x468] sm:$0xff]
  %v156 = vld [vmem:[%s0 + $0x470] sm:$0xff]
  %v157 = vld [vmem:[%s0 + $0x478] sm:$0xff]
  %v158 = vld [vmem:[%s0 + $0x480] sm:$0xff]
  %v159 = vld [vmem:[%s0 + $0x488] sm:$0xff]
  %v160 = vld [vmem:[%s0 + $0x490] sm:$0xff]
  %v161 = vld [vmem:[%s0 + $0x498] sm:$0xff]
  %v162 = vld [vmem:[%s0 + $0x4a0] sm:$0xff]
  %v163 = vld [vmem:[%s0 + $0x4a8] sm:$0xff]
  %v164 = vld [vmem:[%s0 + $0x4b0] sm:$0xff]
  %v165 = vld [vmem:[%s0 + $0x4b8] sm:$0xff]
  %v166 = vld [vmem:[%s0 + $0x4c0] sm:$0xff]
  %v167 = vld [vmem:[%s0 + $0x4c8] sm:$0xff]
  %v168 = vld [vmem:[%s0 + $0x4d0] sm:$0xff]
  %v169 = vld [vmem:[%s0 + $0x4d8] sm:$0xff]
  %v170 = vld [vmem:[%s0 + $0x4e0] sm:$0xff]
  %v171 = vld [vmem:[%s0 + $0x4e8] sm:$0xff]
  %v172 = vld [vmem:[%s0 + $0x4f0] sm:$0xff]
  %v173 = vld [vmem:[%s0 + $0x4f8] sm:$0xff]
  %v174 = vld [vmem:[%s0 + $0x500] sm:$0xff]
  %v175 = vld [vmem:[%s0 + $0x508] sm:$0xff]
  %v176 = vld [vmem:[%s0 + $0x510] sm:$0xff]
  %v177 = vld [vmem:[%s0 + $0x518] sm:$0xff]
  %v178 = vld [vmem:[%s0 + $0x520] sm:$0xff]
  %v179 = vld [vmem:[%s0 + $0x528] sm:$0xff]
  %v180 = vld [vmem:[%s0 + $0x530] sm:$0xff]
  %v181 = vld [vmem:[%s0 + $0x538] sm:$0xff]
  %v182 = vld [vmem:[%s0 + $0x540] sm:$0xff]
  %v183 = vld [vmem:[%s0 + $0x548] sm:$0xff]
  %v184 = vld [vmem:[%s0 + $0x550] sm:$0xff]
  %v185 = vld [vmem:[%s0 + $0x558] sm:$0xff]
  %v186 = vld [vmem:[%s0 + $0x560] sm:$0xff]
  %v187 = vld [vmem:[%s0 + $0x568] sm:$0xff]
  %v188 = vld [vmem:[%s0 + $0x570] sm:$0xff]
  %v189 = vld [vmem:[%s0 + $0x578] sm:$0xff]
  %v190 = vld [vmem:[%s0 + $0x580] sm:$0xff]
  %v191 = vld [vmem:[%s0 + $0x588] sm:$0xff]
  %v192 = vld [vmem:[%s0 + $0x590] sm:$0xff]
  %v193 = vld [vmem:[%s0 + $0x598] sm:$0xff]
  %v194 = vld [vmem:[%s0 + $0x5a0] sm:$0xff]
  %v195 = vld [vmem:[%s0 + $0x5a8] sm:$0xff]
  %v196 = vld [vmem:[%s0 + $0x5b0] sm:$0xff]
  %v197 = vld [vmem:[%s0 + $0x5b8] sm:$0xff]
  %v198 = vld [vmem:[%s0 + $0x5c0] sm:$0xff]
  %v199 = vld [vmem:[%s0 + $0x5c8] sm:$0xff]
  %v200 = vld [vmem:[%s0 + $0x5d0] sm:$0xff]
  %v201 = vld [vmem:[%s0 + $0x5d8] sm:$0xff]
  %v202 = vld [vmem:[%s0 + $0x5e0] sm:$0xff]
  %v203 = vld [vmem:[%s0 + $0x5e8] sm:$0xff]
  %v204 = vld [vmem:[%s0 + $0x5f0] sm:$0xff]
  %v205 = vld [vmem:[%s0 + $0x5f8] sm:$0xff]
  %v206 = vld [vmem:[%s0 + $0x600] sm:$0xff]
  %v207 = vld [vmem:[%s0 + $0x608] sm:$0xff]
  %v208 = vld [vmem:[%s0 + $0x610] sm:$0xff]
  %v209 = vld [vmem:[%s0 + $0x618] sm:$0xff]
  %v210 = vld [vmem:[%s0 + $0x620] sm:$0xff]
  %v211 = vld [vmem:[%s0 + $0x628] sm:$0xff]
  %v212 = vld [vmem:[%s0 + $0x630] sm:$0xff]
  %v213 = vld [vmem:[%s0 + $0x638] sm:$0xff]
  %v214 = vld [vmem:[%s1] sm:$0xff]
  %v215 = vld [vmem:[%s1 + $0x8] sm:$0xff]
  %v216 = vld [vmem:[%s1 + $0x10] sm:$0xff]
  %v217 = vld [vmem:[%s1 + $0x18] sm:$0xff]
  %v218 = vld [vmem:[%s1 + $0x20] sm:$0xff]
  %v219 = vld [vmem:[%s1 + $0x28] sm:$0xff]
  %v220 = vld [vmem:[%s1 + $0x30] sm:$0xff]
  %v221 = vld [vmem:[%s1 + $0x38] sm:$0xff]
  %v222 = vld [vmem:[%s1 + $0x40] sm:$0xff]
  %v223 = vld [vmem:[%s1 + $0x48] sm:$0xff]
  %v224 = vld [vmem:[%s1 + $0x50] sm:$0xff]
  %v225 = vld [vmem:[%s1 + $0x58] sm:$0xff]
  %v226 = vld [vmem:[%s1 + $0x60] sm:$0xff]
  %v227 = vld [vmem:[%s1 + $0x68] sm:$0xff]
  %v228 = vld [vmem:[%s1 + $0x70] sm:$0xff]
  %v229 = vld [vmem:[%s1 + $0x78] sm:$0xff]
  %v230 = vld [vmem:[%s1 + $0x80] sm:$0xff]
  %v231 = vld [vmem:[%s1 + $0x88] sm:$0xff]
  %v232 = vld [vmem:[%s1 + $0x90] sm:$0xff]
  %v233 = vld [vmem:[%s1 + $0x98] sm:$0xff]
  %v234 = vld [vmem:[%s1 + $0xa0] sm:$0xff]
  %v235 = vld [vmem:[%s1 + $0xa8] sm:$0xff]
  %v236 = vld [vmem:[%s1 + $0xb0] sm:$0xff]
  %v237 = vld [vmem:[%s1 + $0xb8] sm:$0xff]
  %v238 = vld [vmem:[%s1 + $0xc0] sm:$0xff]
  %v239 = vld [vmem:[%s1 + $0xc8] sm:$0xff]
  %v240 = vld [vmem:[%s1 + $0xd0] sm:$0xff]
  %v241 = vld [vmem:[%s1 + $0xd8] sm:$0xff]
  %v242 = vld [vmem:[%s1 + $0xe0] sm:$0xff]
  %v243 = vld [vmem:[%s1 + $0xe8] sm:$0xff]
  %v244 = vld [vmem:[%s1 + $0xf0] sm:$0xff]
  %v245 = vld [vmem:[%s1 + $0xf8] sm:$0xff]
  %v246 = vld [vmem:[%s2] sm:$0x1]
  %v248 = vlaneseq
  %v249 = vshrl.u32 %v248, 7
  %v250 = vsub.s32 0, %v249
  %v251 = vrot.slane %v246, %v250
  %253 = vmatprep.subr.mxu0 0.0
  %254 = vmatpush1.msra.mxu0 %v214
  %255 = vmatprep.subr.mxu0 0.0
  %256 = vmatpush1.msra.mxu0 %v215
  %257 = vmatprep.subr.mxu0 0.0
  %258 = vmatpush1.msra.mxu0 %v216
  %259 = vmatprep.subr.mxu0 0.0
  %260 = vmatpush1.msra.mxu0 %v217
  %261 = vmatprep.subr.mxu0 0.0
  %262 = vmatpush1.msra.mxu0 %v218
  %263 = vmatprep.subr.mxu0 0.0
  %264 = vmatpush1.msra.mxu0 %v219
  %265 = vmatprep.subr.mxu0 0.0
  %266 = vmatpush1.msra.mxu0 %v220
  %267 = vmatprep.subr.mxu0 0.0
  %268 = vmatpush1.msra.mxu0 %v221
  %269 = vmatprep.subr.mxu0 0.0
  %270 = vmatpush1.msra.mxu0 %v222
  %271 = vmatprep.subr.mxu0 0.0
  %272 = vmatpush1.msra.mxu0 %v223
  %273 = vmatprep.subr.mxu0 0.0
  %274 = vmatpush1.msra.mxu0 %v224
  %275 = vmatprep.subr.mxu0 0.0
  %276 = vmatpush1.msra.mxu0 %v225
  %277 = vmatprep.subr.mxu0 0.0
  %278 = vmatpush1.msra.mxu0 %v226
  %279 = vmatprep.subr.mxu0 0.0
  %280 = vmatpush1.msra.mxu0 %v227
  %281 = vmatprep.subr.mxu0 0.0
  %282 = vmatpush1.msra.mxu0 %v228
  %283 = vmatprep.subr.mxu0 0.0
  %284 = vmatpush1.msra.mxu0 %v229
  %285 = vmatprep.subr.mxu0 0.0
  %286 = vmatpush1.msra.mxu0 %v230
  %287 = vmatprep.subr.mxu0 0.0
  %288 = vmatpush1.msra.mxu0 %v231
  %289 = vmatprep.subr.mxu0 0.0
  %290 = vmatpush1.msra.mxu0 %v232
  %291 = vmatprep.subr.mxu0 0.0
  %292 = vmatpush1.msra.mxu0 %v233
  %293 = vmatprep.subr.mxu0 0.0
  %294 = vmatpush1.msra.mxu0 %v234
  %295 = vmatprep.subr.mxu0 0.0
  %296 = vmatpush1.msra.mxu0 %v235
  %297 = vmatprep.subr.mxu0 0.0
  %298 = vmatpush1.msra.mxu0 %v236
  %299 = vmatprep.subr.mxu0 0.0
  %300 = vmatpush1.msra.mxu0 %v237
  %301 = vmatprep.subr.mxu0 0.0
  %302 = vmatpush1.msra.mxu0 %v238
  %303 = vmatprep.subr.mxu0 0.0
  %304 = vmatpush1.msra.mxu0 %v239
  %305 = vmatprep.subr.mxu0 0.0
  %306 = vmatpush1.msra.mxu0 %v240
  %307 = vmatprep.subr.mxu0 0.0
  %308 = vmatpush1.msra.mxu0 %v241
  %309 = vmatprep.subr.mxu0 0.0
  %310 = vmatpush1.msra.mxu0 %v242
  %311 = vmatprep.subr.mxu0 0.0
  %312 = vmatpush1.msra.mxu0 %v243
  %313 = vmatprep.subr.mxu0 0.0
  %314 = vmatpush1.msra.mxu0 %v244
  %315 = vmatprep.subr.mxu0 0.0
  %316 = vmatpush1.msra.mxu0 %v245
  %317 = vmatprep.mubr.f32.mxu0 %v15
  %318 = vmatmul.mubr.f32.gmra.mrb[0].mxu0 %v14
  %v319 = vpop.f32.mrb[0].mxu0
  %v320 = vadd.f32 %v251, %v319
  %v321 = vpop.f32.mrb[0].mxu0
  %322 = vmatprep.mubr.f32.mxu0 %v17
  %323 = vmatmul.mubr.f32.gmra.mrb[0].mxu0 %v16
  %v324 = vpop.f32.mrb[0].mxu0
  %v325 = vadd.f32 %v251, %v324
  %v326 = vpop.f32.mrb[0].mxu0
  %327 = vmatprep.mubr.f32.mxu0 %v19
  %328 = vmatmul.mubr.f32.gmra.mrb[0].mxu0 %v18
  %v329 = vpop.f32.mrb[0].mxu0
  %v330 = vadd.f32 %v251, %v329
  %v331 = vpop.f32.mrb[0].mxu0
  %332 = vmatprep.mubr.f32.mxu0 %v21
  %333 = vmatmul.mubr.f32.gmra.mrb[0].mxu0 %v20
  %v334 = vpop.f32.mrb[0].mxu0
  %v335 = vadd.f32 %v251, %v334
  %v336 = vpop.f32.mrb[0].mxu0
  %337 = vmatprep.mubr.f32.mxu0 %v23
  %338 = vmatmul.mubr.f32.gmra.mrb[0].mxu0 %v22
  %v339 = vpop.f32.mrb[0].mxu0
  %v340 = vadd.f32 %v251, %v339
  %v341 = vpop.f32.mrb[0].mxu0
  %342 = vmatprep.mubr.f32.mxu0 %v25
  %343 = vmatmul.mubr.f32.gmra.mrb[0].mxu0 %v24
  %v344 = vpop.f32.mrb[0].mxu0
  %v345 = vadd.f32 %v251, %v344
  %v346 = vpop.f32.mrb[0].mxu0
  %347 = vmatprep.mubr.f32.mxu0 %v27
  %348 = vmatmul.mubr.f32.gmra.mrb[0].mxu0 %v26
  %v349 = vpop.f32.mrb[0].mxu0
  %v350 = vadd.f32 %v251, %v349
  %v351 = vpop.f32.mrb[0].mxu0
  %352 = vmatprep.mubr.f32.mxu0 %v29
  %353 = vmatmul.mubr.f32.gmra.mrb[0].mxu0 %v28
  %v354 = vpop.f32.mrb[0].mxu0
  %v355 = vadd.f32 %v251, %v354
  %v356 = vpop.f32.mrb[0].mxu0
  %357 = vmatprep.mubr.f32.mxu0 %v31
  %358 = vmatmul.mubr.f32.gmra.mrb[0].mxu0 %v30
  %v359 = vpop.f32.mrb[0].mxu0
  %v360 = vadd.f32 %v251, %v359
  %v361 = vpop.f32.mrb[0].mxu0
  %362 = vmatprep.mubr.f32.mxu0 %v33
  %363 = vmatmul.mubr.f32.gmra.mrb[0].mxu0 %v32
  %v364 = vpop.f32.mrb[0].mxu0
  %v365 = vadd.f32 %v251, %v364
  %v366 = vpop.f32.mrb[0].mxu0
  %367 = vmatprep.mubr.f32.mxu0 %v35
  %368 = vmatmul.mubr.f32.gmra.mrb[0].mxu0 %v34
  %v369 = vpop.f32.mrb[0].mxu0
  %v370 = vadd.f32 %v251, %v369
  %v371 = vpop.f32.mrb[0].mxu0
  %372 = vmatprep.mubr.f32.mxu0 %v37
  %373 = vmatmul.mubr.f32.gmra.mrb[0].mxu0 %v36
  %v374 = vpop.f32.mrb[0].mxu0
  %v375 = vadd.f32 %v251, %v374
  %v376 = vpop.f32.mrb[0].mxu0
  %377 = vmatprep.mubr.f32.mxu0 %v39
  %378 = vmatmul.mubr.f32.gmra.mrb[0].mxu0 %v38
  %v379 = vpop.f32.mrb[0].mxu0
  %v380 = vadd.f32 %v251, %v379
  %v381 = vpop.f32.mrb[0].mxu0
  %382 = vmatprep.mubr.f32.mxu0 %v41
  %383 = vmatmul.mubr.f32.gmra.mrb[0].mxu0 %v40
  %v384 = vpop.f32.mrb[0].mxu0
  %v385 = vadd.f32 %v251, %v384
  %v386 = vpop.f32.mrb[0].mxu0
  %387 = vmatprep.mubr.f32.mxu0 %v43
  %388 = vmatmul.mubr.f32.gmra.mrb[0].mxu0 %v42
  %v389 = vpop.f32.mrb[0].mxu0
  %v390 = vadd.f32 %v251, %v389
  %v391 = vpop.f32.mrb[0].mxu0
  %392 = vmatprep.mubr.f32.mxu0 %v45
  %393 = vmatmul.mubr.f32.gmra.mrb[0].mxu0 %v44
  %v394 = vpop.f32.mrb[0].mxu0
  %v395 = vadd.f32 %v251, %v394
  %v396 = vpop.f32.mrb[0].mxu0
  %397 = vmatprep.mubr.f32.mxu0 %v47
  %398 = vmatmul.mubr.f32.gmra.mrb[0].mxu0 %v46
  %v399 = vpop.f32.mrb[0].mxu0
  %v400 = vadd.f32 %v251, %v399
  %v401 = vpop.f32.mrb[0].mxu0
  %402 = vmatprep.mubr.f32.mxu0 %v49
  %403 = vmatmul.mubr.f32.gmra.mrb[0].mxu0 %v48
  %v404 = vpop.f32.mrb[0].mxu0
  %v405 = vadd.f32 %v251, %v404
  %v406 = vpop.f32.mrb[0].mxu0
  %407 = vmatprep.mubr.f32.mxu0 %v51
  %408 = vmatmul.mubr.f32.gmra.mrb[0].mxu0 %v50
  %v409 = vpop.f32.mrb[0].mxu0
  %v410 = vadd.f32 %v251, %v409
  %v411 = vpop.f32.mrb[0].mxu0
  %412 = vmatprep.mubr.f32.mxu0 %v53
  %413 = vmatmul.mubr.f32.gmra.mrb[0].mxu0 %v52
  %v414 = vpop.f32.mrb[0].mxu0
  %v415 = vadd.f32 %v251, %v414
  %v416 = vpop.f32.mrb[0].mxu0
  %417 = vmatprep.mubr.f32.mxu0 %v55
  %418 = vmatmul.mubr.f32.gmra.mrb[0].mxu0 %v54
  %v419 = vpop.f32.mrb[0].mxu0
  %v420 = vadd.f32 %v251, %v419
  %v421 = vpop.f32.mrb[0].mxu0
  %422 = vmatprep.mubr.f32.mxu0 %v57
  %423 = vmatmul.mubr.f32.gmra.mrb[0].mxu0 %v56
  %v424 = vpop.f32.mrb[0].mxu0
  %v425 = vadd.f32 %v251, %v424
  %v426 = vpop.f32.mrb[0].mxu0
  %427 = vmatprep.mubr.f32.mxu0 %v59
  %428 = vmatmul.mubr.f32.gmra.mrb[0].mxu0 %v58
  %v429 = vpop.f32.mrb[0].mxu0
  %v430 = vadd.f32 %v251, %v429
  %v431 = vpop.f32.mrb[0].mxu0
  %432 = vmatprep.mubr.f32.mxu0 %v61
  %433 = vmatmul.mubr.f32.gmra.mrb[0].mxu0 %v60
  %v434 = vpop.f32.mrb[0].mxu0
  %v435 = vadd.f32 %v251, %v434
  %v436 = vpop.f32.mrb[0].mxu0
  %437 = vmatprep.mubr.f32.mxu0 %v63
  %438 = vmatmul.mubr.f32.gmra.mrb[0].mxu0 %v62
  %v439 = vpop.f32.mrb[0].mxu0
  %v440 = vadd.f32 %v251, %v439
  %v441 = vpop.f32.mrb[0].mxu0
  %442 = vmatprep.mubr.f32.mxu0 %v65
  %443 = vmatmul.mubr.f32.gmra.mrb[0].mxu0 %v64
  %v444 = vpop.f32.mrb[0].mxu0
  %v445 = vadd.f32 %v251, %v444
  %v446 = vpop.f32.mrb[0].mxu0
  %447 = vmatprep.mubr.f32.mxu0 %v67
  %448 = vmatmul.mubr.f32.gmra.mrb[0].mxu0 %v66
  %v449 = vpop.f32.mrb[0].mxu0
  %v450 = vadd.f32 %v251, %v449
  %v451 = vpop.f32.mrb[0].mxu0
  %452 = vmatprep.mubr.f32.mxu0 %v69
  %453 = vmatmul.mubr.f32.gmra.mrb[0].mxu0 %v68
  %v454 = vpop.f32.mrb[0].mxu0
  %v455 = vadd.f32 %v251, %v454
  %v456 = vpop.f32.mrb[0].mxu0
  %457 = vmatprep.mubr.f32.mxu0 %v71
  %458 = vmatmul.mubr.f32.gmra.mrb[0].mxu0 %v70
  %v459 = vpop.f32.mrb[0].mxu0
  %v460 = vadd.f32 %v251, %v459
  %v461 = vpop.f32.mrb[0].mxu0
  %462 = vmatprep.mubr.f32.mxu0 %v73
  %463 = vmatmul.mubr.f32.gmra.mrb[0].mxu0 %v72
  %v464 = vpop.f32.mrb[0].mxu0
  %v465 = vadd.f32 %v251, %v464
  %v466 = vpop.f32.mrb[0].mxu0
  %467 = vmatprep.mubr.f32.mxu0 %v75
  %468 = vmatmul.mubr.f32.gmra.mrb[0].mxu0 %v74
  %v469 = vpop.f32.mrb[0].mxu0
  %v470 = vadd.f32 %v251, %v469
  %v471 = vpop.f32.mrb[0].mxu0
  %472 = vmatprep.mubr.f32.mxu0 %v77
  %473 = vmatmul.mubr.f32.gmra.mrb[0].mxu0 %v76
  %v474 = vpop.f32.mrb[0].mxu0
  %v475 = vadd.f32 %v251, %v474
  %v476 = vpop.f32.mrb[0].mxu0
  %477 = vmatprep.mubr.f32.mxu0 %v79
  %478 = vmatmul.mubr.f32.gmra.mrb[0].mxu0 %v78
  %v479 = vpop.f32.mrb[0].mxu0
  %v480 = vadd.f32 %v251, %v479
  %v481 = vpop.f32.mrb[0].mxu0
  %482 = vmatprep.mubr.f32.mxu0 %v81
  %483 = vmatmul.mubr.f32.gmra.mrb[0].mxu0 %v80
  %v484 = vpop.f32.mrb[0].mxu0
  %v485 = vadd.f32 %v251, %v484
  %v486 = vpop.f32.mrb[0].mxu0
  %487 = vmatprep.mubr.f32.mxu0 %v83
  %488 = vmatmul.mubr.f32.gmra.mrb[0].mxu0 %v82
  %v489 = vpop.f32.mrb[0].mxu0
  %v490 = vadd.f32 %v251, %v489
  %v491 = vpop.f32.mrb[0].mxu0
  %492 = vmatprep.mubr.f32.mxu0 %v85
  %493 = vmatmul.mubr.f32.gmra.mrb[0].mxu0 %v84
  %v494 = vpop.f32.mrb[0].mxu0
  %v495 = vadd.f32 %v251, %v494
  %v496 = vpop.f32.mrb[0].mxu0
  %497 = vmatprep.mubr.f32.mxu0 %v87
  %498 = vmatmul.mubr.f32.gmra.mrb[0].mxu0 %v86
  %v499 = vpop.f32.mrb[0].mxu0
  %v500 = vadd.f32 %v251, %v499
  %v501 = vpop.f32.mrb[0].mxu0
  %502 = vmatprep.mubr.f32.mxu0 %v89
  %503 = vmatmul.mubr.f32.gmra.mrb[0].mxu0 %v88
  %v504 = vpop.f32.mrb[0].mxu0
  %v505 = vadd.f32 %v251, %v504
  %v506 = vpop.f32.mrb[0].mxu0
  %507 = vmatprep.mubr.f32.mxu0 %v91
  %508 = vmatmul.mubr.f32.gmra.mrb[0].mxu0 %v90
  %v509 = vpop.f32.mrb[0].mxu0
  %v510 = vadd.f32 %v251, %v509
  %v511 = vpop.f32.mrb[0].mxu0
  %512 = vmatprep.mubr.f32.mxu0 %v93
  %513 = vmatmul.mubr.f32.gmra.mrb[0].mxu0 %v92
  %v514 = vpop.f32.mrb[0].mxu0
  %v515 = vadd.f32 %v251, %v514
  %v516 = vpop.f32.mrb[0].mxu0
  %517 = vmatprep.mubr.f32.mxu0 %v95
  %518 = vmatmul.mubr.f32.gmra.mrb[0].mxu0 %v94
  %v519 = vpop.f32.mrb[0].mxu0
  %v520 = vadd.f32 %v251, %v519
  %v521 = vpop.f32.mrb[0].mxu0
  %522 = vmatprep.mubr.f32.mxu0 %v97
  %523 = vmatmul.mubr.f32.gmra.mrb[0].mxu0 %v96
  %v524 = vpop.f32.mrb[0].mxu0
  %v525 = vadd.f32 %v251, %v524
  %v526 = vpop.f32.mrb[0].mxu0
  %527 = vmatprep.mubr.f32.mxu0 %v99
  %528 = vmatmul.mubr.f32.gmra.mrb[0].mxu0 %v98
  %v529 = vpop.f32.mrb[0].mxu0
  %v530 = vadd.f32 %v251, %v529
  %v531 = vpop.f32.mrb[0].mxu0
  %532 = vmatprep.mubr.f32.mxu0 %v101
  %533 = vmatmul.mubr.f32.gmra.mrb[0].mxu0 %v100
  %v534 = vpop.f32.mrb[0].mxu0
  %v535 = vadd.f32 %v251, %v534
  %v536 = vpop.f32.mrb[0].mxu0
  %537 = vmatprep.mubr.f32.mxu0 %v103
  %538 = vmatmul.mubr.f32.gmra.mrb[0].mxu0 %v102
  %v539 = vpop.f32.mrb[0].mxu0
  %v540 = vadd.f32 %v251, %v539
  %v541 = vpop.f32.mrb[0].mxu0
  %542 = vmatprep.mubr.f32.mxu0 %v105
  %543 = vmatmul.mubr.f32.gmra.mrb[0].mxu0 %v104
  %v544 = vpop.f32.mrb[0].mxu0
  %v545 = vadd.f32 %v251, %v544
  %v546 = vpop.f32.mrb[0].mxu0
  %547 = vmatprep.mubr.f32.mxu0 %v107
  %548 = vmatmul.mubr.f32.gmra.mrb[0].mxu0 %v106
  %v549 = vpop.f32.mrb[0].mxu0
  %v550 = vadd.f32 %v251, %v549
  %v551 = vpop.f32.mrb[0].mxu0
  %552 = vmatprep.mubr.f32.mxu0 %v109
  %553 = vmatmul.mubr.f32.gmra.mrb[0].mxu0 %v108
  %v554 = vpop.f32.mrb[0].mxu0
  %v555 = vadd.f32 %v251, %v554
  %v556 = vpop.f32.mrb[0].mxu0
  %557 = vmatprep.mubr.f32.mxu0 %v111
  %558 = vmatmul.mubr.f32.gmra.mrb[0].mxu0 %v110
  %v559 = vpop.f32.mrb[0].mxu0
  %v560 = vadd.f32 %v251, %v559
  %v561 = vpop.f32.mrb[0].mxu0
  %562 = vmatprep.mubr.f32.mxu0 %v113
  %563 = vmatmul.mubr.f32.gmra.mrb[0].mxu0 %v112
  %v564 = vpop.f32.mrb[0].mxu0
  %v565 = vadd.f32 %v251, %v564
  %v566 = vpop.f32.mrb[0].mxu0
  %567 = vmatprep.mubr.f32.mxu0 %v115
  %568 = vmatmul.mubr.f32.gmra.mrb[0].mxu0 %v114
  %v569 = vpop.f32.mrb[0].mxu0
  %v570 = vadd.f32 %v251, %v569
  %v571 = vpop.f32.mrb[0].mxu0
  %572 = vmatprep.mubr.f32.mxu0 %v117
  %573 = vmatmul.mubr.f32.gmra.mrb[0].mxu0 %v116
  %v574 = vpop.f32.mrb[0].mxu0
  %v575 = vadd.f32 %v251, %v574
  %v576 = vpop.f32.mrb[0].mxu0
  %577 = vmatprep.mubr.f32.mxu0 %v119
  %578 = vmatmul.mubr.f32.gmra.mrb[0].mxu0 %v118
  %v579 = vpop.f32.mrb[0].mxu0
  %v580 = vadd.f32 %v251, %v579
  %v581 = vpop.f32.mrb[0].mxu0
  %582 = vmatprep.mubr.f32.mxu0 %v121
  %583 = vmatmul.mubr.f32.gmra.mrb[0].mxu0 %v120
  %v584 = vpop.f32.mrb[0].mxu0
  %v585 = vadd.f32 %v251, %v584
  %v586 = vpop.f32.mrb[0].mxu0
  %587 = vmatprep.mubr.f32.mxu0 %v123
  %588 = vmatmul.mubr.f32.gmra.mrb[0].mxu0 %v122
  %v589 = vpop.f32.mrb[0].mxu0
  %v590 = vadd.f32 %v251, %v589
  %v591 = vpop.f32.mrb[0].mxu0
  %592 = vmatprep.mubr.f32.mxu0 %v125
  %593 = vmatmul.mubr.f32.gmra.mrb[0].mxu0 %v124
  %v594 = vpop.f32.mrb[0].mxu0
  %v595 = vadd.f32 %v251, %v594
  %v596 = vpop.f32.mrb[0].mxu0
  %597 = vmatprep.mubr.f32.mxu0 %v127
  %598 = vmatmul.mubr.f32.gmra.mrb[0].mxu0 %v126
  %v599 = vpop.f32.mrb[0].mxu0
  %v600 = vadd.f32 %v251, %v599
  %v601 = vpop.f32.mrb[0].mxu0
  %602 = vmatprep.mubr.f32.mxu0 %v129
  %603 = vmatmul.mubr.f32.gmra.mrb[0].mxu0 %v128
  %v604 = vpop.f32.mrb[0].mxu0
  %v605 = vadd.f32 %v251, %v604
  %v606 = vpop.f32.mrb[0].mxu0
  %607 = vmatprep.mubr.f32.mxu0 %v131
  %608 = vmatmul.mubr.f32.gmra.mrb[0].mxu0 %v130
  %v609 = vpop.f32.mrb[0].mxu0
  %v610 = vadd.f32 %v251, %v609
  %v611 = vpop.f32.mrb[0].mxu0
  %612 = vmatprep.mubr.f32.mxu0 %v133
  %613 = vmatmul.mubr.f32.gmra.mrb[0].mxu0 %v132
  %v614 = vpop.f32.mrb[0].mxu0
  %v615 = vadd.f32 %v251, %v614
  %v616 = vpop.f32.mrb[0].mxu0
  %617 = vmatprep.mubr.f32.mxu0 %v135
  %618 = vmatmul.mubr.f32.gmra.mrb[0].mxu0 %v134
  %v619 = vpop.f32.mrb[0].mxu0
  %v620 = vadd.f32 %v251, %v619
  %v621 = vpop.f32.mrb[0].mxu0
  %622 = vmatprep.mubr.f32.mxu0 %v137
  %623 = vmatmul.mubr.f32.gmra.mrb[0].mxu0 %v136
  %v624 = vpop.f32.mrb[0].mxu0
  %v625 = vadd.f32 %v251, %v624
  %v626 = vpop.f32.mrb[0].mxu0
  %627 = vmatprep.mubr.f32.mxu0 %v139
  %628 = vmatmul.mubr.f32.gmra.mrb[0].mxu0 %v138
  %v629 = vpop.f32.mrb[0].mxu0
  %v630 = vadd.f32 %v251, %v629
  %v631 = vpop.f32.mrb[0].mxu0
  %632 = vmatprep.mubr.f32.mxu0 %v141
  %633 = vmatmul.mubr.f32.gmra.mrb[0].mxu0 %v140
  %v634 = vpop.f32.mrb[0].mxu0
  %v635 = vadd.f32 %v251, %v634
  %v636 = vpop.f32.mrb[0].mxu0
  %637 = vmatprep.mubr.f32.mxu0 %v143
  %638 = vmatmul.mubr.f32.gmra.mrb[0].mxu0 %v142
  %v639 = vpop.f32.mrb[0].mxu0
  %v640 = vadd.f32 %v251, %v639
  %v641 = vpop.f32.mrb[0].mxu0
  %642 = vmatprep.mubr.f32.mxu0 %v145
  %643 = vmatmul.mubr.f32.gmra.mrb[0].mxu0 %v144
  %v644 = vpop.f32.mrb[0].mxu0
  %v645 = vadd.f32 %v251, %v644
  %v646 = vpop.f32.mrb[0].mxu0
  %647 = vmatprep.mubr.f32.mxu0 %v147
  %648 = vmatmul.mubr.f32.gmra.mrb[0].mxu0 %v146
  %v649 = vpop.f32.mrb[0].mxu0
  %v650 = vadd.f32 %v251, %v649
  %v651 = vpop.f32.mrb[0].mxu0
  %652 = vmatprep.mubr.f32.mxu0 %v149
  %653 = vmatmul.mubr.f32.gmra.mrb[0].mxu0 %v148
  %v654 = vpop.f32.mrb[0].mxu0
  %v655 = vadd.f32 %v251, %v654
  %v656 = vpop.f32.mrb[0].mxu0
  %657 = vmatprep.mubr.f32.mxu0 %v151
  %658 = vmatmul.mubr.f32.gmra.mrb[0].mxu0 %v150
  %v659 = vpop.f32.mrb[0].mxu0
  %v660 = vadd.f32 %v251, %v659
  %v661 = vpop.f32.mrb[0].mxu0
  %662 = vmatprep.mubr.f32.mxu0 %v153
  %663 = vmatmul.mubr.f32.gmra.mrb[0].mxu0 %v152
  %v664 = vpop.f32.mrb[0].mxu0
  %v665 = vadd.f32 %v251, %v664
  %v666 = vpop.f32.mrb[0].mxu0
  %667 = vmatprep.mubr.f32.mxu0 %v155
  %668 = vmatmul.mubr.f32.gmra.mrb[0].mxu0 %v154
  %v669 = vpop.f32.mrb[0].mxu0
  %v670 = vadd.f32 %v251, %v669
  %v671 = vpop.f32.mrb[0].mxu0
  %672 = vmatprep.mubr.f32.mxu0 %v157
  %673 = vmatmul.mubr.f32.gmra.mrb[0].mxu0 %v156
  %v674 = vpop.f32.mrb[0].mxu0
  %v675 = vadd.f32 %v251, %v674
  %v676 = vpop.f32.mrb[0].mxu0
  %677 = vmatprep.mubr.f32.mxu0 %v159
  %678 = vmatmul.mubr.f32.gmra.mrb[0].mxu0 %v158
  %v679 = vpop.f32.mrb[0].mxu0
  %v680 = vadd.f32 %v251, %v679
  %v681 = vpop.f32.mrb[0].mxu0
  %682 = vmatprep.mubr.f32.mxu0 %v161
  %683 = vmatmul.mubr.f32.gmra.mrb[0].mxu0 %v160
  %v684 = vpop.f32.mrb[0].mxu0
  %v685 = vadd.f32 %v251, %v684
  %v686 = vpop.f32.mrb[0].mxu0
  %687 = vmatprep.mubr.f32.mxu0 %v163
  %688 = vmatmul.mubr.f32.gmra.mrb[0].mxu0 %v162
  %v689 = vpop.f32.mrb[0].mxu0
  %v690 = vadd.f32 %v251, %v689
  %v691 = vpop.f32.mrb[0].mxu0
  %692 = vmatprep.mubr.f32.mxu0 %v165
  %693 = vmatmul.mubr.f32.gmra.mrb[0].mxu0 %v164
  %v694 = vpop.f32.mrb[0].mxu0
  %v695 = vadd.f32 %v251, %v694
  %v696 = vpop.f32.mrb[0].mxu0
  %697 = vmatprep.mubr.f32.mxu0 %v167
  %698 = vmatmul.mubr.f32.gmra.mrb[0].mxu0 %v166
  %v699 = vpop.f32.mrb[0].mxu0
  %v700 = vadd.f32 %v251, %v699
  %v701 = vpop.f32.mrb[0].mxu0
  %702 = vmatprep.mubr.f32.mxu0 %v169
  %703 = vmatmul.mubr.f32.gmra.mrb[0].mxu0 %v168
  %v704 = vpop.f32.mrb[0].mxu0
  %v705 = vadd.f32 %v251, %v704
  %v706 = vpop.f32.mrb[0].mxu0
  %707 = vmatprep.mubr.f32.mxu0 %v171
  %708 = vmatmul.mubr.f32.gmra.mrb[0].mxu0 %v170
  %v709 = vpop.f32.mrb[0].mxu0
  %v710 = vadd.f32 %v251, %v709
  %v711 = vpop.f32.mrb[0].mxu0
  %712 = vmatprep.mubr.f32.mxu0 %v173
  %713 = vmatmul.mubr.f32.gmra.mrb[0].mxu0 %v172
  %v714 = vpop.f32.mrb[0].mxu0
  %v715 = vadd.f32 %v251, %v714
  %v716 = vpop.f32.mrb[0].mxu0
  %717 = vmatprep.mubr.f32.mxu0 %v175
  %718 = vmatmul.mubr.f32.gmra.mrb[0].mxu0 %v174
  %v719 = vpop.f32.mrb[0].mxu0
  %v720 = vadd.f32 %v251, %v719
  %v721 = vpop.f32.mrb[0].mxu0
  %722 = vmatprep.mubr.f32.mxu0 %v177
  %723 = vmatmul.mubr.f32.gmra.mrb[0].mxu0 %v176
  %v724 = vpop.f32.mrb[0].mxu0
  %v725 = vadd.f32 %v251, %v724
  %v726 = vpop.f32.mrb[0].mxu0
  %727 = vmatprep.mubr.f32.mxu0 %v179
  %728 = vmatmul.mubr.f32.gmra.mrb[0].mxu0 %v178
  %v729 = vpop.f32.mrb[0].mxu0
  %v730 = vadd.f32 %v251, %v729
  %v731 = vpop.f32.mrb[0].mxu0
  %732 = vmatprep.mubr.f32.mxu0 %v181
  %733 = vmatmul.mubr.f32.gmra.mrb[0].mxu0 %v180
  %v734 = vpop.f32.mrb[0].mxu0
  %v735 = vadd.f32 %v251, %v734
  %v736 = vpop.f32.mrb[0].mxu0
  %737 = vmatprep.mubr.f32.mxu0 %v183
  %738 = vmatmul.mubr.f32.gmra.mrb[0].mxu0 %v182
  %v739 = vpop.f32.mrb[0].mxu0
  %v740 = vadd.f32 %v251, %v739
  %v741 = vpop.f32.mrb[0].mxu0
  %742 = vmatprep.mubr.f32.mxu0 %v185
  %743 = vmatmul.mubr.f32.gmra.mrb[0].mxu0 %v184
  %v744 = vpop.f32.mrb[0].mxu0
  %v745 = vadd.f32 %v251, %v744
  %v746 = vpop.f32.mrb[0].mxu0
  %747 = vmatprep.mubr.f32.mxu0 %v187
  %748 = vmatmul.mubr.f32.gmra.mrb[0].mxu0 %v186
  %v749 = vpop.f32.mrb[0].mxu0
  %v750 = vadd.f32 %v251, %v749
  %v751 = vpop.f32.mrb[0].mxu0
  %752 = vmatprep.mubr.f32.mxu0 %v189
  %753 = vmatmul.mubr.f32.gmra.mrb[0].mxu0 %v188
  %v754 = vpop.f32.mrb[0].mxu0
  %v755 = vadd.f32 %v251, %v754
  %v756 = vpop.f32.mrb[0].mxu0
  %757 = vmatprep.mubr.f32.mxu0 %v191
  %758 = vmatmul.mubr.f32.gmra.mrb[0].mxu0 %v190
  %v759 = vpop.f32.mrb[0].mxu0
  %v760 = vadd.f32 %v251, %v759
  %v761 = vpop.f32.mrb[0].mxu0
  %762 = vmatprep.mubr.f32.mxu0 %v193
  %763 = vmatmul.mubr.f32.gmra.mrb[0].mxu0 %v192
  %v764 = vpop.f32.mrb[0].mxu0
  %v765 = vadd.f32 %v251, %v764
  %v766 = vpop.f32.mrb[0].mxu0
  %767 = vmatprep.mubr.f32.mxu0 %v195
  %768 = vmatmul.mubr.f32.gmra.mrb[0].mxu0 %v194
  %v769 = vpop.f32.mrb[0].mxu0
  %v770 = vadd.f32 %v251, %v769
  %v771 = vpop.f32.mrb[0].mxu0
  %772 = vmatprep.mubr.f32.mxu0 %v197
  %773 = vmatmul.mubr.f32.gmra.mrb[0].mxu0 %v196
  %v774 = vpop.f32.mrb[0].mxu0
  %v775 = vadd.f32 %v251, %v774
  %v776 = vpop.f32.mrb[0].mxu0
  %777 = vmatprep.mubr.f32.mxu0 %v199
  %778 = vmatmul.mubr.f32.gmra.mrb[0].mxu0 %v198
  %v779 = vpop.f32.mrb[0].mxu0
  %v780 = vadd.f32 %v251, %v779
  %v781 = vpop.f32.mrb[0].mxu0
  %782 = vmatprep.mubr.f32.mxu0 %v201
  %783 = vmatmul.mubr.f32.gmra.mrb[0].mxu0 %v200
  %v784 = vpop.f32.mrb[0].mxu0
  %v785 = vadd.f32 %v251, %v784
  %v786 = vpop.f32.mrb[0].mxu0
  %787 = vmatprep.mubr.f32.mxu0 %v203
  %788 = vmatmul.mubr.f32.gmra.mrb[0].mxu0 %v202
  %v789 = vpop.f32.mrb[0].mxu0
  %v790 = vadd.f32 %v251, %v789
  %v791 = vpop.f32.mrb[0].mxu0
  %792 = vmatprep.mubr.f32.mxu0 %v205
  %793 = vmatmul.mubr.f32.gmra.mrb[0].mxu0 %v204
  %v794 = vpop.f32.mrb[0].mxu0
  %v795 = vadd.f32 %v251, %v794
  %v796 = vpop.f32.mrb[0].mxu0
  %797 = vmatprep.mubr.f32.mxu0 %v207
  %798 = vmatmul.mubr.f32.gmra.mrb[0].mxu0 %v206
  %v799 = vpop.f32.mrb[0].mxu0
  %v800 = vadd.f32 %v251, %v799
  %v801 = vpop.f32.mrb[0].mxu0
  %802 = vmatprep.mubr.f32.mxu0 %v209
  %803 = vmatmul.mubr.f32.gmra.mrb[0].mxu0 %v208
  %v804 = vpop.f32.mrb[0].mxu0
  %v805 = vadd.f32 %v251, %v804
  %v806 = vpop.f32.mrb[0].mxu0
  %807 = vmatprep.mubr.f32.mxu0 %v211
  %808 = vmatmul.mubr.f32.gmra.mrb[0].mxu0 %v210
  %v809 = vpop.f32.mrb[0].mxu0
  %v810 = vadd.f32 %v251, %v809
  %v811 = vpop.f32.mrb[0].mxu0
  %812 = vmatprep.mubr.f32.mxu0 %v213
  %813 = vmatmul.mubr.f32.gmra.mrb[0].mxu0 %v212
  %v814 = vpop.f32.mrb[0].mxu0
  %v815 = vadd.f32 %v251, %v814
  %v816 = vpop.f32.mrb[0].mxu0
  %817 = vdwg.mxu0
  %v818 = vmax.f32 %v320, 0.0
  %v819 = vmax.f32 %v325, 0.0
  %v820 = vmax.f32 %v330, 0.0
  %v821 = vmax.f32 %v335, 0.0
  %v822 = vmax.f32 %v340, 0.0
  %v823 = vmax.f32 %v345, 0.0
  %v824 = vmax.f32 %v350, 0.0
  %v825 = vmax.f32 %v355, 0.0
  %v826 = vmax.f32 %v360, 0.0
  %v827 = vmax.f32 %v365, 0.0
  %v828 = vmax.f32 %v370, 0.0
  %v829 = vmax.f32 %v375, 0.0
  %v830 = vmax.f32 %v380, 0.0
  %v831 = vmax.f32 %v385, 0.0
  %v832 = vmax.f32 %v390, 0.0
  %v833 = vmax.f32 %v395, 0.0
  %v834 = vmax.f32 %v400, 0.0
  %v835 = vmax.f32 %v405, 0.0
  %v836 = vmax.f32 %v410, 0.0
  %v837 = vmax.f32 %v415, 0.0
  %v838 = vmax.f32 %v420, 0.0
  %v839 = vmax.f32 %v425, 0.0
  %v840 = vmax.f32 %v430, 0.0
  %v841 = vmax.f32 %v435, 0.0
  %v842 = vmax.f32 %v440, 0.0
  %v843 = vmax.f32 %v445, 0.0
  %v844 = vmax.f32 %v450, 0.0
  %v845 = vmax.f32 %v455, 0.0
  %v846 = vmax.f32 %v460, 0.0
  %v847 = vmax.f32 %v465, 0.0
  %v848 = vmax.f32 %v470, 0.0
  %v849 = vmax.f32 %v475, 0.0
  %v850 = vmax.f32 %v480, 0.0
  %v851 = vmax.f32 %v485, 0.0
  %v852 = vmax.f32 %v490, 0.0
  %v853 = vmax.f32 %v495, 0.0
  %v854 = vmax.f32 %v500, 0.0
  %v855 = vmax.f32 %v505, 0.0
  %v856 = vmax.f32 %v510, 0.0
  %v857 = vmax.f32 %v515, 0.0
  %v858 = vmax.f32 %v520, 0.0
  %v859 = vmax.f32 %v525, 0.0
  %v860 = vmax.f32 %v530, 0.0
  %v861 = vmax.f32 %v535, 0.0
  %v862 = vmax.f32 %v540, 0.0
  %v863 = vmax.f32 %v545, 0.0
  %v864 = vmax.f32 %v550, 0.0
  %v865 = vmax.f32 %v555, 0.0
  %v866 = vmax.f32 %v560, 0.0
  %v867 = vmax.f32 %v565, 0.0
  %v868 = vmax.f32 %v570, 0.0
  %v869 = vmax.f32 %v575, 0.0
  %v870 = vmax.f32 %v580, 0.0
  %v871 = vmax.f32 %v585, 0.0
  %v872 = vmax.f32 %v590, 0.0
  %v873 = vmax.f32 %v595, 0.0
  %v874 = vmax.f32 %v600, 0.0
  %v875 = vmax.f32 %v605, 0.0
  %v876 = vmax.f32 %v610, 0.0
  %v877 = vmax.f32 %v615, 0.0
  %v878 = vmax.f32 %v620, 0.0
  %v879 = vmax.f32 %v625, 0.0
  %v880 = vmax.f32 %v630, 0.0
  %v881 = vmax.f32 %v635, 0.0
  %v882 = vmax.f32 %v640, 0.0
  %v883 = vmax.f32 %v645, 0.0
  %v884 = vmax.f32 %v650, 0.0
  %v885 = vmax.f32 %v655, 0.0
  %v886 = vmax.f32 %v660, 0.0
  %v887 = vmax.f32 %v665, 0.0
  %v888 = vmax.f32 %v670, 0.0
  %v889 = vmax.f32 %v675, 0.0
  %v890 = vmax.f32 %v680, 0.0
  %v891 = vmax.f32 %v685, 0.0
  %v892 = vmax.f32 %v690, 0.0
  %v893 = vmax.f32 %v695, 0.0
  %v894 = vmax.f32 %v700, 0.0
  %v895 = vmax.f32 %v705, 0.0
  %v896 = vmax.f32 %v710, 0.0
  %v897 = vmax.f32 %v715, 0.0
  %v898 = vmax.f32 %v720, 0.0
  %v899 = vmax.f32 %v725, 0.0
  %v900 = vmax.f32 %v730, 0.0
  %v901 = vmax.f32 %v735, 0.0
  %v902 = vmax.f32 %v740, 0.0
  %v903 = vmax.f32 %v745, 0.0
  %v904 = vmax.f32 %v750, 0.0
  %v905 = vmax.f32 %v755, 0.0
  %v906 = vmax.f32 %v760, 0.0
  %v907 = vmax.f32 %v765, 0.0
  %v908 = vmax.f32 %v770, 0.0
  %v909 = vmax.f32 %v775, 0.0
  %v910 = vmax.f32 %v780, 0.0
  %v911 = vmax.f32 %v785, 0.0
  %v912 = vmax.f32 %v790, 0.0
  %v913 = vmax.f32 %v795, 0.0
  %v914 = vmax.f32 %v800, 0.0
  %v915 = vmax.f32 %v805, 0.0
  %v916 = vmax.f32 %v810, 0.0
  %v917 = vmax.f32 %v815, 0.0
  %918 = vst [vmem:[%s3] sm:$0xff] %v818
  %919 = vst [vmem:[%s3 + $0x8] sm:$0xff] %v819
  %920 = vst [vmem:[%s3 + $0x10] sm:$0xff] %v820
  %921 = vst [vmem:[%s3 + $0x18] sm:$0xff] %v821
  %922 = vst [vmem:[%s3 + $0x20] sm:$0xff] %v822
  %923 = vst [vmem:[%s3 + $0x28] sm:$0xff] %v823
  %924 = vst [vmem:[%s3 + $0x30] sm:$0xff] %v824
  %925 = vst [vmem:[%s3 + $0x38] sm:$0xff] %v825
  %926 = vst [vmem:[%s3 + $0x40] sm:$0xff] %v826
  %927 = vst [vmem:[%s3 + $0x48] sm:$0xff] %v827
  %928 = vst [vmem:[%s3 + $0x50] sm:$0xff] %v828
  %929 = vst [vmem:[%s3 + $0x58] sm:$0xff] %v829
  %930 = vst [vmem:[%s3 + $0x60] sm:$0xff] %v830
  %931 = vst [vmem:[%s3 + $0x68] sm:$0xff] %v831
  %932 = vst [vmem:[%s3 + $0x70] sm:$0xff] %v832
  %933 = vst [vmem:[%s3 + $0x78] sm:$0xff] %v833
  %934 = vst [vmem:[%s3 + $0x80] sm:$0xff] %v834
  %935 = vst [vmem:[%s3 + $0x88] sm:$0xff] %v835
  %936 = vst [vmem:[%s3 + $0x90] sm:$0xff] %v836
  %937 = vst [vmem:[%s3 + $0x98] sm:$0xff] %v837
  %938 = vst [vmem:[%s3 + $0xa0] sm:$0xff] %v838
  %939 = vst [vmem:[%s3 + $0xa8] sm:$0xff] %v839
  %940 = vst [vmem:[%s3 + $0xb0] sm:$0xff] %v840
  %941 = vst [vmem:[%s3 + $0xb8] sm:$0xff] %v841
  %942 = vst [vmem:[%s3 + $0xc0] sm:$0xff] %v842
  %943 = vst [vmem:[%s3 + $0xc8] sm:$0xff] %v843
  %944 = vst [vmem:[%s3 + $0xd0] sm:$0xff] %v844
  %945 = vst [vmem:[%s3 + $0xd8] sm:$0xff] %v845
  %946 = vst [vmem:[%s3 + $0xe0] sm:$0xff] %v846
  %947 = vst [vmem:[%s3 + $0xe8] sm:$0xff] %v847
  %948 = vst [vmem:[%s3 + $0xf0] sm:$0xff] %v848
  %949 = vst [vmem:[%s3 + $0xf8] sm:$0xff] %v849
  %950 = vst [vmem:[%s3 + $0x100] sm:$0xff] %v850
  %951 = vst [vmem:[%s3 + $0x108] sm:$0xff] %v851
  %952 = vst [vmem:[%s3 + $0x110] sm:$0xff] %v852
  %953 = vst [vmem:[%s3 + $0x118] sm:$0xff] %v853
  %954 = vst [vmem:[%s3 + $0x120] sm:$0xff] %v854
  %955 = vst [vmem:[%s3 + $0x128] sm:$0xff] %v855
  %956 = vst [vmem:[%s3 + $0x130] sm:$0xff] %v856
  %957 = vst [vmem:[%s3 + $0x138] sm:$0xff] %v857
  %958 = vst [vmem:[%s3 + $0x140] sm:$0xff] %v858
  %959 = vst [vmem:[%s3 + $0x148] sm:$0xff] %v859
  %960 = vst [vmem:[%s3 + $0x150] sm:$0xff] %v860
  %961 = vst [vmem:[%s3 + $0x158] sm:$0xff] %v861
  %962 = vst [vmem:[%s3 + $0x160] sm:$0xff] %v862
  %963 = vst [vmem:[%s3 + $0x168] sm:$0xff] %v863
  %964 = vst [vmem:[%s3 + $0x170] sm:$0xff] %v864
  %965 = vst [vmem:[%s3 + $0x178] sm:$0xff] %v865
  %966 = vst [vmem:[%s3 + $0x180] sm:$0xff] %v866
  %967 = vst [vmem:[%s3 + $0x188] sm:$0xff] %v867
  %968 = vst [vmem:[%s3 + $0x190] sm:$0xff] %v868
  %969 = vst [vmem:[%s3 + $0x198] sm:$0xff] %v869
  %970 = vst [vmem:[%s3 + $0x1a0] sm:$0xff] %v870
  %971 = vst [vmem:[%s3 + $0x1a8] sm:$0xff] %v871
  %972 = vst [vmem:[%s3 + $0x1b0] sm:$0xff] %v872
  %973 = vst [vmem:[%s3 + $0x1b8] sm:$0xff] %v873
  %974 = vst [vmem:[%s3 + $0x1c0] sm:$0xff] %v874
  %975 = vst [vmem:[%s3 + $0x1c8] sm:$0xff] %v875
  %976 = vst [vmem:[%s3 + $0x1d0] sm:$0xff] %v876
  %977 = vst [vmem:[%s3 + $0x1d8] sm:$0xff] %v877
  %978 = vst [vmem:[%s3 + $0x1e0] sm:$0xff] %v878
  %979 = vst [vmem:[%s3 + $0x1e8] sm:$0xff] %v879
  %980 = vst [vmem:[%s3 + $0x1f0] sm:$0xff] %v880
  %981 = vst [vmem:[%s3 + $0x1f8] sm:$0xff] %v881
  %982 = vst [vmem:[%s3 + $0x200] sm:$0xff] %v882
  %983 = vst [vmem:[%s3 + $0x208] sm:$0xff] %v883
  %984 = vst [vmem:[%s3 + $0x210] sm:$0xff] %v884
  %985 = vst [vmem:[%s3 + $0x218] sm:$0xff] %v885
  %986 = vst [vmem:[%s3 + $0x220] sm:$0xff] %v886
  %987 = vst [vmem:[%s3 + $0x228] sm:$0xff] %v887
  %988 = vst [vmem:[%s3 + $0x230] sm:$0xff] %v888
  %989 = vst [vmem:[%s3 + $0x238] sm:$0xff] %v889
  %990 = vst [vmem:[%s3 + $0x240] sm:$0xff] %v890
  %991 = vst [vmem:[%s3 + $0x248] sm:$0xff] %v891
  %992 = vst [vmem:[%s3 + $0x250] sm:$0xff] %v892
  %993 = vst [vmem:[%s3 + $0x258] sm:$0xff] %v893
  %994 = vst [vmem:[%s3 + $0x260] sm:$0xff] %v894
  %995 = vst [vmem:[%s3 + $0x268] sm:$0xff] %v895
  %996 = vst [vmem:[%s3 + $0x270] sm:$0xff] %v896
  %997 = vst [vmem:[%s3 + $0x278] sm:$0xff] %v897
  %998 = vst [vmem:[%s3 + $0x280] sm:$0xff] %v898
  %999 = vst [vmem:[%s3 + $0x288] sm:$0xff] %v899
  %1000 = vst [vmem:[%s3 + $0x290] sm:$0xff] %v900
  %1001 = vst [vmem:[%s3 + $0x298] sm:$0xff] %v901
  %1002 = vst [vmem:[%s3 + $0x2a0] sm:$0xff] %v902
  %1003 = vst [vmem:[%s3 + $0x2a8] sm:$0xff] %v903
  %1004 = vst [vmem:[%s3 + $0x2b0] sm:$0xff] %v904
  %1005 = vst [vmem:[%s3 + $0x2b8] sm:$0xff] %v905
  %1006 = vst [vmem:[%s3 + $0x2c0] sm:$0xff] %v906
  %1007 = vst [vmem:[%s3 + $0x2c8] sm:$0xff] %v907
  %1008 = vst [vmem:[%s3 + $0x2d0] sm:$0xff] %v908
  %1009 = vst [vmem:[%s3 + $0x2d8] sm:$0xff] %v909
  %1010 = vst [vmem:[%s3 + $0x2e0] sm:$0xff] %v910
  %1011 = vst [vmem:[%s3 + $0x2e8] sm:$0xff] %v911
  %1012 = vst [vmem:[%s3 + $0x2f0] sm:$0xff] %v912
  %1013 = vst [vmem:[%s3 + $0x2f8] sm:$0xff] %v913
  %1014 = vst [vmem:[%s3 + $0x300] sm:$0xff] %v914
  %1015 = vst [vmem:[%s3 + $0x308] sm:$0xff] %v915
  %1016 = vst [vmem:[%s3 + $0x310] sm:$0xff] %v916
  %1017 = vst [vmem:[%s3 + $0x318] sm:$0xff] %v917
  // Predicated region
  $region14: #{cnn_forward.4} parent=0 // pred_check
    _
  $region15: #{cnn_forward.4} parent=0 // pred_check_branch
    %1019 = sbr.rel (0) target = $region17
  $region16: #{cnn_forward.4} parent=0 // pred_region
    _
  $region17: #{cnn_forward.4} parent=0 // pred_fallthru
    _
  // Predicated region
  $region18: #{cnn_forward.4} parent=0 // pred_check
    _
  $region19: #{cnn_forward.4} parent=0 // pred_check_branch
    %1021 = sbr.rel (0) target = $region21
  $region20: #{cnn_forward.4} parent=0 // pred_region
    _
  $region21: #{cnn_forward.4} parent=0 // pred_fallthru
    _

// kernel: cnn_forward.5
$region0: #{cnn_forward.5}
  #allocation0 [shape = 'u32[]', space=smem, size = 0x4, offset = 0x4, fixed_abs, tag = 'smem constant byte address 0x4 - core index']
  #allocation1 [shape = 'u32[144,128]{1,0:T(1,128)}', space=vmem, size = 0x12000, scoped, tag = 'internal scratch']
  %s0 = inlined_call_operand.vmem [shape: f32[162,288], index: 0, kind: input, shape index: {}]
  %s1 = inlined_call_operand.vmem [shape: f32[288,128], index: 1, kind: input, shape index: {}]
  %s2 = inlined_call_operand.vmem [shape: f32[1,128], index: 2, kind: input, shape index: {}]
  %s3 = inlined_call_operand.vmem [shape: f32[162,128], index: 3, kind: output, shape index: {}]
  %s4 = sld [smem:[#allocation0]]
  $region22: #{cnn_forward.5} parent=0
    _
  %s6 = ssub.s32 1, %s4
  %s7 = scalar_select 0, %s6, %s4
  // Predicated region
  $region2: #{cnn_forward.5} parent=0 // pred_check
    _
  $region3: #{cnn_forward.5} parent=0 // pred_check_branch
    %9 = sbr.rel (0) target = $region5
  $region4: #{cnn_forward.5} parent=0 // pred_region
    _
  $region5: #{cnn_forward.5} parent=0 // pred_fallthru
    _
  // Predicated region
  $region6: #{cnn_forward.5} parent=0 // pred_check
    _
  $region7: #{cnn_forward.5} parent=0 // pred_check_branch
    %11 = sbr.rel (0) target = $region9
  $region8: #{cnn_forward.5} parent=0 // pred_region
    _
  $region9: #{cnn_forward.5} parent=0 // pred_fallthru
    _
  // Predicated region
  $region10: #{cnn_forward.5} parent=0 // pred_check
    _
  $region11: #{cnn_forward.5} parent=0 // pred_check_branch
    %13 = sbr.rel (0) target = $region13
  $region12: #{cnn_forward.5} parent=0 // pred_region
    _
  $region13: #{cnn_forward.5} parent=0 // pred_fallthru
    _
  %v14 = vld [vmem:[%s0] sm:$0xff]
  %v15 = vld [vmem:[%s0 + $0x8] sm:$0xff]
  %v16 = vld [vmem:[%s0 + $0x10] sm:$0xff]
  %v17 = vld [vmem:[%s0 + $0x18] sm:$0xff]
  %v18 = vld [vmem:[%s0 + $0x20] sm:$0xff]
  %v19 = vld [vmem:[%s0 + $0x28] sm:$0xff]
  %v20 = vld [vmem:[%s0 + $0x30] sm:$0xff]
  %v21 = vld [vmem:[%s0 + $0x38] sm:$0xff]
  %v22 = vld [vmem:[%s0 + $0x40] sm:$0xff]
  %v23 = vld [vmem:[%s0 + $0x48] sm:$0xff]
  %v24 = vld [vmem:[%s0 + $0x50] sm:$0xff]
  %v25 = vld [vmem:[%s0 + $0x58] sm:$0xff]
  %v26 = vld [vmem:[%s0 + $0x60] sm:$0xff]
  %v27 = vld [vmem:[%s0 + $0x68] sm:$0xff]
  %v28 = vld [vmem:[%s0 + $0x70] sm:$0xff]
  %v29 = vld [vmem:[%s0 + $0x78] sm:$0xff]
  %v30 = vld [vmem:[%s0 + $0x80] sm:$0xff]
  %v31 = vld [vmem:[%s0 + $0x88] sm:$0xff]
  %v32 = vld [vmem:[%s0 + $0x90] sm:$0xff]
  %v33 = vld [vmem:[%s0 + $0x98] sm:$0xff]
  %v34 = vld [vmem:[%s0 + $0xa0] sm:$0xff]
  %v35 = vld [vmem:[%s0 + $0xa8] sm:$0xff]
  %v36 = vld [vmem:[%s0 + $0xb0] sm:$0xff]
  %v37 = vld [vmem:[%s0 + $0xb8] sm:$0xff]
  %v38 = vld [vmem:[%s0 + $0xc0] sm:$0xff]
  %v39 = vld [vmem:[%s0 + $0xc8] sm:$0xff]
  %v40 = vld [vmem:[%s0 + $0xd0] sm:$0xff]
  %v41 = vld [vmem:[%s0 + $0xd8] sm:$0xff]
  %v42 = vld [vmem:[%s0 + $0xe0] sm:$0xff]
  %v43 = vld [vmem:[%s0 + $0xe8] sm:$0xff]
  %v44 = vld [vmem:[%s0 + $0xf0] sm:$0xff]
  %v45 = vld [vmem:[%s0 + $0xf8] sm:$0xff]
  %v46 = vld [vmem:[%s0 + $0x100] sm:$0xff]
  %v47 = vld [vmem:[%s0 + $0x108] sm:$0xff]
  %v48 = vld [vmem:[%s0 + $0x110] sm:$0xff]
  %v49 = vld [vmem:[%s0 + $0x118] sm:$0xff]
  %v50 = vld [vmem:[%s0 + $0x120] sm:$0xff]
  %v51 = vld [vmem:[%s0 + $0x128] sm:$0xff]
  %v52 = vld [vmem:[%s0 + $0x130] sm:$0xff]
  %v53 = vld [vmem:[%s0 + $0x138] sm:$0xff]
  %v54 = vld [vmem:[%s0 + $0x140] sm:$0xff]
  %v55 = vld [vmem:[%s0 + $0x148] sm:$0xff]
  %v56 = vld [vmem:[%s0 + $0x150] sm:$0xff]
  %v57 = vld [vmem:[%s0 + $0x158] sm:$0xff]
  %v58 = vld [vmem:[%s0 + $0x160] sm:$0xff]
  %v59 = vld [vmem:[%s0 + $0x168] sm:$0xff]
  %v60 = vld [vmem:[%s0 + $0x170] sm:$0xff]
  %v61 = vld [vmem:[%s0 + $0x178] sm:$0xff]
  %v62 = vld [vmem:[%s0 + $0x180] sm:$0xff]
  %v63 = vld [vmem:[%s0 + $0x188] sm:$0xff]
  %v64 = vld [vmem:[%s0 + $0x190] sm:$0xff]
  %v65 = vld [vmem:[%s0 + $0x198] sm:$0xff]
  %v66 = vld [vmem:[%s0 + $0x1a0] sm:$0xff]
  %v67 = vld [vmem:[%s0 + $0x1a8] sm:$0xff]
  %v68 = vld [vmem:[%s0 + $0x1b0] sm:$0xff]
  %v69 = vld [vmem:[%s0 + $0x1b8] sm:$0xff]
  %v70 = vld [vmem:[%s0 + $0x1c0] sm:$0xff]
  %v71 = vld [vmem:[%s0 + $0x1c8] sm:$0xff]
  %v72 = vld [vmem:[%s0 + $0x1d0] sm:$0xff]
  %v73 = vld [vmem:[%s0 + $0x1d8] sm:$0xff]
  %v74 = vld [vmem:[%s0 + $0x1e0] sm:$0x3]
  %v75 = vld [vmem:[%s0 + $0x1e8] sm:$0x3]
  %v76 = vld [vmem:[%s0 + $0x1f0] sm:$0x3]
  %v77 = vld [vmem:[%s1] sm:$0xff]
  %v78 = vld [vmem:[%s1 + $0x8] sm:$0xff]
  %v79 = vld [vmem:[%s1 + $0x10] sm:$0xff]
  %v80 = vld [vmem:[%s1 + $0x18] sm:$0xff]
  %v81 = vld [vmem:[%s1 + $0x20] sm:$0xff]
  %v82 = vld [vmem:[%s1 + $0x28] sm:$0xff]
  %v83 = vld [vmem:[%s1 + $0x30] sm:$0xff]
  %v84 = vld [vmem:[%s1 + $0x38] sm:$0xff]
  %v85 = vld [vmem:[%s1 + $0x40] sm:$0xff]
  %v86 = vld [vmem:[%s1 + $0x48] sm:$0xff]
  %v87 = vld [vmem:[%s1 + $0x50] sm:$0xff]
  %v88 = vld [vmem:[%s1 + $0x58] sm:$0xff]
  %v89 = vld [vmem:[%s1 + $0x60] sm:$0xff]
  %v90 = vld [vmem:[%s1 + $0x68] sm:$0xff]
  %v91 = vld [vmem:[%s1 + $0x70] sm:$0xff]
  %v92 = vld [vmem:[%s1 + $0x78] sm:$0xff]
  %v93 = vld [vmem:[%s1 + $0x80] sm:$0xff]
  %v94 = vld [vmem:[%s1 + $0x88] sm:$0xff]
  %v95 = vld [vmem:[%s1 + $0x90] sm:$0xff]
  %v96 = vld [vmem:[%s1 + $0x98] sm:$0xff]
  %v97 = vld [vmem:[%s1 + $0xa0] sm:$0xff]
  %v98 = vld [vmem:[%s1 + $0xa8] sm:$0xff]
  %v99 = vld [vmem:[%s1 + $0xb0] sm:$0xff]
  %v100 = vld [vmem:[%s1 + $0xb8] sm:$0xff]
  %v101 = vld [vmem:[%s1 + $0xc0] sm:$0xff]
  %v102 = vld [vmem:[%s1 + $0xc8] sm:$0xff]
  %v103 = vld [vmem:[%s1 + $0xd0] sm:$0xff]
  %v104 = vld [vmem:[%s1 + $0xd8] sm:$0xff]
  %v105 = vld [vmem:[%s1 + $0xe0] sm:$0xff]
  %v106 = vld [vmem:[%s1 + $0xe8] sm:$0xff]
  %v107 = vld [vmem:[%s1 + $0xf0] sm:$0xff]
  %v108 = vld [vmem:[%s1 + $0xf8] sm:$0xff]
  %v109 = vld [vmem:[%s1 + $0x100] sm:$0xff]
  %v110 = vld [vmem:[%s1 + $0x108] sm:$0xff]
  %v111 = vld [vmem:[%s1 + $0x110] sm:$0xff]
  %v112 = vld [vmem:[%s1 + $0x118] sm:$0xff]
  %v113 = vld [vmem:[%s2] sm:$0x1]
  %v115 = vlaneseq
  %v116 = vshrl.u32 %v115, 7
  %v117 = vsub.s32 0, %v116
  %v118 = vrot.slane %v113, %v117
  %vm120 = vcmask 261120
  %v122 = vsel %vm120, %v16, 0
  %v125 = vsel %vm120, %v19, 0
  %v128 = vsel %vm120, %v22, 0
  %v131 = vsel %vm120, %v25, 0
  %v134 = vsel %vm120, %v28, 0
  %v137 = vsel %vm120, %v31, 0
  %v140 = vsel %vm120, %v34, 0
  %v143 = vsel %vm120, %v37, 0
  %v146 = vsel %vm120, %v40, 0
  %v149 = vsel %vm120, %v43, 0
  %v152 = vsel %vm120, %v46, 0
  %v155 = vsel %vm120, %v49, 0
  %v158 = vsel %vm120, %v52, 0
  %v161 = vsel %vm120, %v55, 0
  %v164 = vsel %vm120, %v58, 0
  %v167 = vsel %vm120, %v61, 0
  %v170 = vsel %vm120, %v64, 0
  %v173 = vsel %vm120, %v67, 0
  %v176 = vsel %vm120, %v70, 0
  %v179 = vsel %vm120, %v73, 0
  %v182 = vsel %vm120, %v76, 0
  %184 = vmatprep.subr.mxu0 0.0
  %185 = vmatpush1.msra.mxu0 %v77
  %186 = vmatprep.subr.mxu0 0.0
  %187 = vmatpush1.msra.mxu0 %v78
  %188 = vmatprep.subr.mxu0 0.0
  %189 = vmatpush1.msra.mxu0 %v79
  %190 = vmatprep.subr.mxu0 0.0
  %191 = vmatpush1.msra.mxu0 %v80
  %192 = vmatprep.subr.mxu0 0.0
  %193 = vmatpush1.msra.mxu0 %v81
  %194 = vmatprep.subr.mxu0 0.0
  %195 = vmatpush1.msra.mxu0 %v82
  %196 = vmatprep.subr.mxu0 0.0
  %197 = vmatpush1.msra.mxu0 %v83
  %198 = vmatprep.subr.mxu0 0.0
  %199 = vmatpush1.msra.mxu0 %v84
  %200 = vmatprep.subr.mxu0 0.0
  %201 = vmatpush1.msra.mxu0 %v85
  %202 = vmatprep.subr.mxu0 0.0
  %203 = vmatpush1.msra.mxu0 %v86
  %204 = vmatprep.subr.mxu0 0.0
  %205 = vmatpush1.msra.mxu0 %v87
  %206 = vmatprep.subr.mxu0 0.0
  %207 = vmatpush1.msra.mxu0 %v88
  %208 = vmatprep.subr.mxu0 0.0
  %209 = vmatpush1.msra.mxu0 %v89
  %210 = vmatprep.subr.mxu0 0.0
  %211 = vmatpush1.msra.mxu0 %v90
  %212 = vmatprep.subr.mxu0 0.0
  %213 = vmatpush1.msra.mxu0 %v91
  %214 = vmatprep.subr.mxu0 0.0
  %215 = vmatpush1.msra.mxu0 %v92
  %216 = vmatprep.subr.mxu0 0.0
  %217 = vmatpush1.msra.mxu0 %v93
  %218 = vmatprep.subr.mxu0 0.0
  %219 = vmatpush1.msra.mxu0 %v94
  %220 = vmatprep.subr.mxu0 0.0
  %221 = vmatpush1.msra.mxu0 %v95
  %222 = vmatprep.subr.mxu0 0.0
  %223 = vmatpush1.msra.mxu0 %v96
  %224 = vmatprep.subr.mxu0 0.0
  %225 = vmatpush1.msra.mxu0 %v97
  %226 = vmatprep.subr.mxu0 0.0
  %227 = vmatpush1.msra.mxu0 %v98
  %228 = vmatprep.subr.mxu0 0.0
  %229 = vmatpush1.msra.mxu0 %v99
  %230 = vmatprep.subr.mxu0 0.0
  %231 = vmatpush1.msra.mxu0 %v100
  %232 = vmatprep.subr.mxu0 0.0
  %233 = vmatpush1.msra.mxu0 %v101
  %234 = vmatprep.subr.mxu0 0.0
  %235 = vmatpush1.msra.mxu0 %v102
  %236 = vmatprep.subr.mxu0 0.0
  %237 = vmatpush1.msra.mxu0 %v103
  %238 = vmatprep.subr.mxu0 0.0
  %239 = vmatpush1.msra.mxu0 %v104
  %240 = vmatprep.subr.mxu0 0.0
  %241 = vmatpush1.msra.mxu0 %v105
  %242 = vmatprep.subr.mxu0 0.0
  %243 = vmatpush1.msra.mxu0 %v106
  %244 = vmatprep.subr.mxu0 0.0
  %245 = vmatpush1.msra.mxu0 %v107
  %246 = vmatprep.subr.mxu0 0.0
  %247 = vmatpush1.msra.mxu0 %v108
  %248 = vmatprep.mubr.f32.mxu0 %v15
  %249 = vmatmul.mubr.f32.gmra.mrb[0].mxu0 %v14
  %v250 = vpop.f32.mrb[0].mxu0
  %v251 = vadd.f32 %v118, %v250
  %v252 = vpop.f32.mrb[0].mxu0
  %253 = vmatprep.mubr.f32.mxu0 %v18
  %254 = vmatmul.mubr.f32.gmra.mrb[0].mxu0 %v17
  %v255 = vpop.f32.mrb[0].mxu0
  %v256 = vadd.f32 %v118, %v255
  %v257 = vpop.f32.mrb[0].mxu0
  %258 = vmatprep.mubr.f32.mxu0 %v21
  %259 = vmatmul.mubr.f32.gmra.mrb[0].mxu0 %v20
  %v260 = vpop.f32.mrb[0].mxu0
  %v261 = vadd.f32 %v118, %v260
  %v262 = vpop.f32.mrb[0].mxu0
  %263 = vmatprep.mubr.f32.mxu0 %v24
  %264 = vmatmul.mubr.f32.gmra.mrb[0].mxu0 %v23
  %v265 = vpop.f32.mrb[0].mxu0
  %v266 = vadd.f32 %v118, %v265
  %v267 = vpop.f32.mrb[0].mxu0
  %268 = vmatprep.mubr.f32.mxu0 %v27
  %269 = vmatmul.mubr.f32.gmra.mrb[0].mxu0 %v26
  %v270 = vpop.f32.mrb[0].mxu0
  %v271 = vadd.f32 %v118, %v270
  %v272 = vpop.f32.mrb[0].mxu0
  %273 = vmatprep.mubr.f32.mxu0 %v30
  %274 = vmatmul.mubr.f32.gmra.mrb[0].mxu0 %v29
  %v275 = vpop.f32.mrb[0].mxu0
  %v276 = vadd.f32 %v118, %v275
  %v277 = vpop.f32.mrb[0].mxu0
  %278 = vmatprep.mubr.f32.mxu0 %v33
  %279 = vmatmul.mubr.f32.gmra.mrb[0].mxu0 %v32
  %v280 = vpop.f32.mrb[0].mxu0
  %v281 = vadd.f32 %v118, %v280
  %v282 = vpop.f32.mrb[0].mxu0
  %283 = vmatprep.mubr.f32.mxu0 %v36
  %284 = vmatmul.mubr.f32.gmra.mrb[0].mxu0 %v35
  %v285 = vpop.f32.mrb[0].mxu0
  %v286 = vadd.f32 %v118, %v285
  %v287 = vpop.f32.mrb[0].mxu0
  %288 = vmatprep.mubr.f32.mxu0 %v39
  %289 = vmatmul.mubr.f32.gmra.mrb[0].mxu0 %v38
  %v290 = vpop.f32.mrb[0].mxu0
  %v291 = vadd.f32 %v118, %v290
  %v292 = vpop.f32.mrb[0].mxu0
  %293 = vmatprep.mubr.f32.mxu0 %v42
  %294 = vmatmul.mubr.f32.gmra.mrb[0].mxu0 %v41
  %v295 = vpop.f32.mrb[0].mxu0
  %v296 = vadd.f32 %v118, %v295
  %v297 = vpop.f32.mrb[0].mxu0
  %298 = vmatprep.mubr.f32.mxu0 %v45
  %299 = vmatmul.mubr.f32.gmra.mrb[0].mxu0 %v44
  %v300 = vpop.f32.mrb[0].mxu0
  %v301 = vadd.f32 %v118, %v300
  %v302 = vpop.f32.mrb[0].mxu0
  %303 = vmatprep.mubr.f32.mxu0 %v48
  %304 = vmatmul.mubr.f32.gmra.mrb[0].mxu0 %v47
  %v305 = vpop.f32.mrb[0].mxu0
  %v306 = vadd.f32 %v118, %v305
  %v307 = vpop.f32.mrb[0].mxu0
  %308 = vmatprep.mubr.f32.mxu0 %v51
  %309 = vmatmul.mubr.f32.gmra.mrb[0].mxu0 %v50
  %v310 = vpop.f32.mrb[0].mxu0
  %v311 = vadd.f32 %v118, %v310
  %v312 = vpop.f32.mrb[0].mxu0
  %313 = vmatprep.mubr.f32.mxu0 %v54
  %314 = vmatmul.mubr.f32.gmra.mrb[0].mxu0 %v53
  %v315 = vpop.f32.mrb[0].mxu0
  %v316 = vadd.f32 %v118, %v315
  %v317 = vpop.f32.mrb[0].mxu0
  %318 = vmatprep.mubr.f32.mxu0 %v57
  %319 = vmatmul.mubr.f32.gmra.mrb[0].mxu0 %v56
  %v320 = vpop.f32.mrb[0].mxu0
  %v321 = vadd.f32 %v118, %v320
  %v322 = vpop.f32.mrb[0].mxu0
  %323 = vmatprep.mubr.f32.mxu0 %v60
  %324 = vmatmul.mubr.f32.gmra.mrb[0].mxu0 %v59
  %v325 = vpop.f32.mrb[0].mxu0
  %v326 = vadd.f32 %v118, %v325
  %v327 = vpop.f32.mrb[0].mxu0
  %328 = vmatprep.mubr.f32.mxu0 %v63
  %329 = vmatmul.mubr.f32.gmra.mrb[0].mxu0 %v62
  %v330 = vpop.f32.mrb[0].mxu0
  %v331 = vadd.f32 %v118, %v330
  %v332 = vpop.f32.mrb[0].mxu0
  %333 = vmatprep.mubr.f32.mxu0 %v66
  %334 = vmatmul.mubr.f32.gmra.mrb[0].mxu0 %v65
  %v335 = vpop.f32.mrb[0].mxu0
  %v336 = vadd.f32 %v118, %v335
  %v337 = vpop.f32.mrb[0].mxu0
  %338 = vmatprep.mubr.f32.mxu0 %v69
  %339 = vmatmul.mubr.f32.gmra.mrb[0].mxu0 %v68
  %v340 = vpop.f32.mrb[0].mxu0
  %v341 = vadd.f32 %v118, %v340
  %v342 = vpop.f32.mrb[0].mxu0
  %343 = vmatprep.mubr.f32.mxu0 %v72
  %344 = vmatmul.mubr.f32.gmra.mrb[0].mxu0 %v71
  %v345 = vpop.f32.mrb[0].mxu0
  %v346 = vadd.f32 %v118, %v345
  %v347 = vpop.f32.mrb[0].mxu0
  %348 = vmatprep.mubr.f32.mxu0 %v75
  %349 = vmatmul.mubr.f32.gmra.mrb[0].mxu0 %v74
  %v350 = vpop.f32.mrb[0].mxu0
  %v351 = vadd.f32 %v118, %v350
  %v352 = vpop.f32.mrb[0].mxu0
  %353 = vdwg.mxu0
  %354 = vmatprep.subr.mxu0 0.0
  %355 = vmatpush1.msra.mxu0 %v109
  %356 = vmatprep.subr.mxu0 0.0
  %357 = vmatpush1.msra.mxu0 %v110
  %358 = vmatprep.subr.mxu0 0.0
  %359 = vmatpush1.msra.mxu0 %v111
  %360 = vmatprep.subr.mxu0 0.0
  %361 = vmatpush1.msra.mxu0 %v112
  %362 = vmatprep.subr.mxu0 0.0
  %363 = vmatpush1.msra.mxu0 0.0
  %364 = vmatprep.subr.mxu0 0.0
  %365 = vmatpush1.msra.mxu0 0.0
  %366 = vmatprep.subr.mxu0 0.0
  %367 = vmatpush1.msra.mxu0 0.0
  %368 = vmatprep.subr.mxu0 0.0
  %369 = vmatpush1.msra.mxu0 0.0
  %370 = vmatprep.subr.mxu0 0.0
  %371 = vmatpush1.msra.mxu0 0.0
  %372 = vmatprep.subr.mxu0 0.0
  %373 = vmatpush1.msra.mxu0 0.0
  %374 = vmatprep.subr.mxu0 0.0
  %375 = vmatpush1.msra.mxu0 0.0
  %376 = vmatprep.subr.mxu0 0.0
  %377 = vmatpush1.msra.mxu0 0.0
  %378 = vmatprep.subr.mxu0 0.0
  %379 = vmatpush1.msra.mxu0 0.0
  %380 = vmatprep.subr.mxu0 0.0
  %381 = vmatpush1.msra.mxu0 0.0
  %382 = vmatprep.subr.mxu0 0.0
  %383 = vmatpush1.msra.mxu0 0.0
  %384 = vmatprep.subr.mxu0 0.0
  %385 = vmatpush1.msra.mxu0 0.0
  %386 = vmatprep.subr.mxu0 0.0
  %387 = vmatpush1.msra.mxu0 0.0
  %388 = vmatprep.subr.mxu0 0.0
  %389 = vmatpush1.msra.mxu0 0.0
  %390 = vmatprep.subr.mxu0 0.0
  %391 = vmatpush1.msra.mxu0 0.0
  %392 = vmatprep.subr.mxu0 0.0
  %393 = vmatpush1.msra.mxu0 0.0
  %394 = vmatprep.subr.mxu0 0.0
  %395 = vmatpush1.msra.mxu0 0.0
  %396 = vmatprep.subr.mxu0 0.0
  %397 = vmatpush1.msra.mxu0 0.0
  %398 = vmatprep.subr.mxu0 0.0
  %399 = vmatpush1.msra.mxu0 0.0
  %400 = vmatprep.subr.mxu0 0.0
  %401 = vmatpush1.msra.mxu0 0.0
  %402 = vmatprep.subr.mxu0 0.0
  %403 = vmatpush1.msra.mxu0 0.0
  %404 = vmatprep.subr.mxu0 0.0
  %405 = vmatpush1.msra.mxu0 0.0
  %406 = vmatprep.subr.mxu0 0.0
  %407 = vmatpush1.msra.mxu0 0.0
  %408 = vmatprep.subr.mxu0 0.0
  %409 = vmatpush1.msra.mxu0 0.0
  %410 = vmatprep.subr.mxu0 0.0
  %411 = vmatpush1.msra.mxu0 0.0
  %412 = vmatprep.subr.mxu0 0.0
  %413 = vmatpush1.msra.mxu0 0.0
  %414 = vmatprep.subr.mxu0 0.0
  %415 = vmatpush1.msra.mxu0 0.0
  %416 = vmatprep.subr.mxu0 0.0
  %417 = vmatpush1.msra.mxu0 0.0
  %418 = vmatprep.mubr.f32.mxu0 0.0
  %419 = vmatmul.mubr.f32.gmra.mrb[0].mxu0 %v122
  %v420 = vpop.f32.mrb[0].mxu0
  %v421 = vadd.f32 %v251, %v420
  %v422 = vpop.f32.mrb[0].mxu0
  %423 = vmatprep.mubr.f32.mxu0 0.0
  %424 = vmatmul.mubr.f32.gmra.mrb[0].mxu0 %v125
  %v425 = vpop.f32.mrb[0].mxu0
  %v426 = vadd.f32 %v256, %v425
  %v427 = vpop.f32.mrb[0].mxu0
  %428 = vmatprep.mubr.f32.mxu0 0.0
  %429 = vmatmul.mubr.f32.gmra.mrb[0].mxu0 %v128
  %v430 = vpop.f32.mrb[0].mxu0
  %v431 = vadd.f32 %v261, %v430
  %v432 = vpop.f32.mrb[0].mxu0
  %433 = vmatprep.mubr.f32.mxu0 0.0
  %434 = vmatmul.mubr.f32.gmra.mrb[0].mxu0 %v131
  %v435 = vpop.f32.mrb[0].mxu0
  %v436 = vadd.f32 %v266, %v435
  %v437 = vpop.f32.mrb[0].mxu0
  %438 = vmatprep.mubr.f32.mxu0 0.0
  %439 = vmatmul.mubr.f32.gmra.mrb[0].mxu0 %v134
  %v440 = vpop.f32.mrb[0].mxu0
  %v441 = vadd.f32 %v271, %v440
  %v442 = vpop.f32.mrb[0].mxu0
  %443 = vmatprep.mubr.f32.mxu0 0.0
  %444 = vmatmul.mubr.f32.gmra.mrb[0].mxu0 %v137
  %v445 = vpop.f32.mrb[0].mxu0
  %v446 = vadd.f32 %v276, %v445
  %v447 = vpop.f32.mrb[0].mxu0
  %448 = vmatprep.mubr.f32.mxu0 0.0
  %449 = vmatmul.mubr.f32.gmra.mrb[0].mxu0 %v140
  %v450 = vpop.f32.mrb[0].mxu0
  %v451 = vadd.f32 %v281, %v450
  %v452 = vpop.f32.mrb[0].mxu0
  %453 = vmatprep.mubr.f32.mxu0 0.0
  %454 = vmatmul.mubr.f32.gmra.mrb[0].mxu0 %v143
  %v455 = vpop.f32.mrb[0].mxu0
  %v456 = vadd.f32 %v286, %v455
  %v457 = vpop.f32.mrb[0].mxu0
  %458 = vmatprep.mubr.f32.mxu0 0.0
  %459 = vmatmul.mubr.f32.gmra.mrb[0].mxu0 %v146
  %v460 = vpop.f32.mrb[0].mxu0
  %v461 = vadd.f32 %v291, %v460
  %v462 = vpop.f32.mrb[0].mxu0
  %463 = vmatprep.mubr.f32.mxu0 0.0
  %464 = vmatmul.mubr.f32.gmra.mrb[0].mxu0 %v149
  %v465 = vpop.f32.mrb[0].mxu0
  %v466 = vadd.f32 %v296, %v465
  %v467 = vpop.f32.mrb[0].mxu0
  %468 = vmatprep.mubr.f32.mxu0 0.0
  %469 = vmatmul.mubr.f32.gmra.mrb[0].mxu0 %v152
  %v470 = vpop.f32.mrb[0].mxu0
  %v471 = vadd.f32 %v301, %v470
  %v472 = vpop.f32.mrb[0].mxu0
  %473 = vmatprep.mubr.f32.mxu0 0.0
  %474 = vmatmul.mubr.f32.gmra.mrb[0].mxu0 %v155
  %v475 = vpop.f32.mrb[0].mxu0
  %v476 = vadd.f32 %v306, %v475
  %v477 = vpop.f32.mrb[0].mxu0
  %478 = vmatprep.mubr.f32.mxu0 0.0
  %479 = vmatmul.mubr.f32.gmra.mrb[0].mxu0 %v158
  %v480 = vpop.f32.mrb[0].mxu0
  %v481 = vadd.f32 %v311, %v480
  %v482 = vpop.f32.mrb[0].mxu0
  %483 = vmatprep.mubr.f32.mxu0 0.0
  %484 = vmatmul.mubr.f32.gmra.mrb[0].mxu0 %v161
  %v485 = vpop.f32.mrb[0].mxu0
  %v486 = vadd.f32 %v316, %v485
  %v487 = vpop.f32.mrb[0].mxu0
  %488 = vmatprep.mubr.f32.mxu0 0.0
  %489 = vmatmul.mubr.f32.gmra.mrb[0].mxu0 %v164
  %v490 = vpop.f32.mrb[0].mxu0
  %v491 = vadd.f32 %v321, %v490
  %v492 = vpop.f32.mrb[0].mxu0
  %493 = vmatprep.mubr.f32.mxu0 0.0
  %494 = vmatmul.mubr.f32.gmra.mrb[0].mxu0 %v167
  %v495 = vpop.f32.mrb[0].mxu0
  %v496 = vadd.f32 %v326, %v495
  %v497 = vpop.f32.mrb[0].mxu0
  %498 = vmatprep.mubr.f32.mxu0 0.0
  %499 = vmatmul.mubr.f32.gmra.mrb[0].mxu0 %v170
  %v500 = vpop.f32.mrb[0].mxu0
  %v501 = vadd.f32 %v331, %v500
  %v502 = vpop.f32.mrb[0].mxu0
  %503 = vmatprep.mubr.f32.mxu0 0.0
  %504 = vmatmul.mubr.f32.gmra.mrb[0].mxu0 %v173
  %v505 = vpop.f32.mrb[0].mxu0
  %v506 = vadd.f32 %v336, %v505
  %v507 = vpop.f32.mrb[0].mxu0
  %508 = vmatprep.mubr.f32.mxu0 0.0
  %509 = vmatmul.mubr.f32.gmra.mrb[0].mxu0 %v176
  %v510 = vpop.f32.mrb[0].mxu0
  %v511 = vadd.f32 %v341, %v510
  %v512 = vpop.f32.mrb[0].mxu0
  %513 = vmatprep.mubr.f32.mxu0 0.0
  %514 = vmatmul.mubr.f32.gmra.mrb[0].mxu0 %v179
  %v515 = vpop.f32.mrb[0].mxu0
  %v516 = vadd.f32 %v346, %v515
  %v517 = vpop.f32.mrb[0].mxu0
  %518 = vmatprep.mubr.f32.mxu0 0.0
  %519 = vmatmul.mubr.f32.gmra.mrb[0].mxu0 %v182
  %v520 = vpop.f32.mrb[0].mxu0
  %v521 = vadd.f32 %v351, %v520
  %v522 = vpop.f32.mrb[0].mxu0
  %523 = vdwg.mxu0
  %v524 = vmax.f32 %v421, 0.0
  %v525 = vmax.f32 %v426, 0.0
  %v526 = vmax.f32 %v431, 0.0
  %v527 = vmax.f32 %v436, 0.0
  %v528 = vmax.f32 %v441, 0.0
  %v529 = vmax.f32 %v446, 0.0
  %v530 = vmax.f32 %v451, 0.0
  %v531 = vmax.f32 %v456, 0.0
  %v532 = vmax.f32 %v461, 0.0
  %v533 = vmax.f32 %v466, 0.0
  %v534 = vmax.f32 %v471, 0.0
  %v535 = vmax.f32 %v476, 0.0
  %v536 = vmax.f32 %v481, 0.0
  %v537 = vmax.f32 %v486, 0.0
  %v538 = vmax.f32 %v491, 0.0
  %v539 = vmax.f32 %v496, 0.0
  %v540 = vmax.f32 %v501, 0.0
  %v541 = vmax.f32 %v506, 0.0
  %v542 = vmax.f32 %v511, 0.0
  %v543 = vmax.f32 %v516, 0.0
  %v544 = vmax.f32 %v521, 0.0
  %545 = vst [vmem:[%s3] sm:$0xff] %v524
  %546 = vst [vmem:[%s3 + $0x8] sm:$0xff] %v525
  %547 = vst [vmem:[%s3 + $0x10] sm:$0xff] %v526
  %548 = vst [vmem:[%s3 + $0x18] sm:$0xff] %v527
  %549 = vst [vmem:[%s3 + $0x20] sm:$0xff] %v528
  %550 = vst [vmem:[%s3 + $0x28] sm:$0xff] %v529
  %551 = vst [vmem:[%s3 + $0x30] sm:$0xff] %v530
  %552 = vst [vmem:[%s3 + $0x38] sm:$0xff] %v531
  %553 = vst [vmem:[%s3 + $0x40] sm:$0xff] %v532
  %554 = vst [vmem:[%s3 + $0x48] sm:$0xff] %v533
  %555 = vst [vmem:[%s3 + $0x50] sm:$0xff] %v534
  %556 = vst [vmem:[%s3 + $0x58] sm:$0xff] %v535
  %557 = vst [vmem:[%s3 + $0x60] sm:$0xff] %v536
  %558 = vst [vmem:[%s3 + $0x68] sm:$0xff] %v537
  %559 = vst [vmem:[%s3 + $0x70] sm:$0xff] %v538
  %560 = vst [vmem:[%s3 + $0x78] sm:$0xff] %v539
  %561 = vst [vmem:[%s3 + $0x80] sm:$0xff] %v540
  %562 = vst [vmem:[%s3 + $0x88] sm:$0xff] %v541
  %563 = vst [vmem:[%s3 + $0x90] sm:$0xff] %v542
  %564 = vst [vmem:[%s3 + $0x98] sm:$0xff] %v543
  %565 = vst [vmem:[%s3 + $0xa0] sm:$0x3] %v544
  // Predicated region
  $region14: #{cnn_forward.5} parent=0 // pred_check
    _
  $region15: #{cnn_forward.5} parent=0 // pred_check_branch
    %567 = sbr.rel (0) target = $region17
  $region16: #{cnn_forward.5} parent=0 // pred_region
    _
  $region17: #{cnn_forward.5} parent=0 // pred_fallthru
    _
  // Predicated region
  $region18: #{cnn_forward.5} parent=0 // pred_check
    _
  $region19: #{cnn_forward.5} parent=0 // pred_check_branch
    %569 = sbr.rel (0) target = $region21
  $region20: #{cnn_forward.5} parent=0 // pred_region
    _
  $region21: #{cnn_forward.5} parent=0 // pred_fallthru
    _

// kernel: cnn_forward.6
$region0: #{cnn_forward.6}
  #allocation0 [shape = 'u32[]', space=smem, size = 0x4, offset = 0x4, fixed_abs, tag = 'smem constant byte address 0x4 - core index']
  #allocation1 [shape = 'u32[144,128]{1,0:T(1,128)}', space=vmem, size = 0x12000, scoped, tag = 'internal scratch']
  %s0 = inlined_call_operand.vmem [shape: f32[98,576], index: 0, kind: input, shape index: {}]
  %s1 = inlined_call_operand.vmem [shape: f32[576,128], index: 1, kind: input, shape index: {}]
  %s2 = inlined_call_operand.vmem [shape: f32[1,128], index: 2, kind: input, shape index: {}]
  %s3 = inlined_call_operand.vmem [shape: f32[98,128], index: 3, kind: output, shape index: {}]
  %s4 = sld [smem:[#allocation0]]
  $region22: #{cnn_forward.6} parent=0
    _
  %s6 = ssub.s32 1, %s4
  %s7 = scalar_select 0, %s6, %s4
  // Predicated region
  $region2: #{cnn_forward.6} parent=0 // pred_check
    _
  $region3: #{cnn_forward.6} parent=0 // pred_check_branch
    %9 = sbr.rel (0) target = $region5
  $region4: #{cnn_forward.6} parent=0 // pred_region
    _
  $region5: #{cnn_forward.6} parent=0 // pred_fallthru
    _
  // Predicated region
  $region6: #{cnn_forward.6} parent=0 // pred_check
    _
  $region7: #{cnn_forward.6} parent=0 // pred_check_branch
    %11 = sbr.rel (0) target = $region9
  $region8: #{cnn_forward.6} parent=0 // pred_region
    _
  $region9: #{cnn_forward.6} parent=0 // pred_fallthru
    _
  // Predicated region
  $region10: #{cnn_forward.6} parent=0 // pred_check
    _
  $region11: #{cnn_forward.6} parent=0 // pred_check_branch
    %13 = sbr.rel (0) target = $region13
  $region12: #{cnn_forward.6} parent=0 // pred_region
    _
  $region13: #{cnn_forward.6} parent=0 // pred_fallthru
    _
  %v14 = vld [vmem:[%s0] sm:$0xff]
  %v15 = vld [vmem:[%s0 + $0x8] sm:$0xff]
  %v16 = vld [vmem:[%s0 + $0x10] sm:$0xff]
  %v17 = vld [vmem:[%s0 + $0x18] sm:$0xff]
  %v18 = vld [vmem:[%s0 + $0x20] sm:$0xff]
  %v19 = vld [vmem:[%s0 + $0x28] sm:$0xff]
  %v20 = vld [vmem:[%s0 + $0x30] sm:$0xff]
  %v21 = vld [vmem:[%s0 + $0x38] sm:$0xff]
  %v22 = vld [vmem:[%s0 + $0x40] sm:$0xff]
  %v23 = vld [vmem:[%s0 + $0x48] sm:$0xff]
  %v24 = vld [vmem:[%s0 + $0x50] sm:$0xff]
  %v25 = vld [vmem:[%s0 + $0x58] sm:$0xff]
  %v26 = vld [vmem:[%s0 + $0x60] sm:$0xff]
  %v27 = vld [vmem:[%s0 + $0x68] sm:$0xff]
  %v28 = vld [vmem:[%s0 + $0x70] sm:$0xff]
  %v29 = vld [vmem:[%s0 + $0x78] sm:$0xff]
  %v30 = vld [vmem:[%s0 + $0x80] sm:$0xff]
  %v31 = vld [vmem:[%s0 + $0x88] sm:$0xff]
  %v32 = vld [vmem:[%s0 + $0x90] sm:$0xff]
  %v33 = vld [vmem:[%s0 + $0x98] sm:$0xff]
  %v34 = vld [vmem:[%s0 + $0xa0] sm:$0xff]
  %v35 = vld [vmem:[%s0 + $0xa8] sm:$0xff]
  %v36 = vld [vmem:[%s0 + $0xb0] sm:$0xff]
  %v37 = vld [vmem:[%s0 + $0xb8] sm:$0xff]
  %v38 = vld [vmem:[%s0 + $0xc0] sm:$0xff]
  %v39 = vld [vmem:[%s0 + $0xc8] sm:$0xff]
  %v40 = vld [vmem:[%s0 + $0xd0] sm:$0xff]
  %v41 = vld [vmem:[%s0 + $0xd8] sm:$0xff]
  %v42 = vld [vmem:[%s0 + $0xe0] sm:$0xff]
  %v43 = vld [vmem:[%s0 + $0xe8] sm:$0xff]
  %v44 = vld [vmem:[%s0 + $0xf0] sm:$0xff]
  %v45 = vld [vmem:[%s0 + $0xf8] sm:$0xff]
  %v46 = vld [vmem:[%s0 + $0x100] sm:$0xff]
  %v47 = vld [vmem:[%s0 + $0x108] sm:$0xff]
  %v48 = vld [vmem:[%s0 + $0x110] sm:$0xff]
  %v49 = vld [vmem:[%s0 + $0x118] sm:$0xff]
  %v50 = vld [vmem:[%s0 + $0x120] sm:$0xff]
  %v51 = vld [vmem:[%s0 + $0x128] sm:$0xff]
  %v52 = vld [vmem:[%s0 + $0x130] sm:$0xff]
  %v53 = vld [vmem:[%s0 + $0x138] sm:$0xff]
  %v54 = vld [vmem:[%s0 + $0x140] sm:$0xff]
  %v55 = vld [vmem:[%s0 + $0x148] sm:$0xff]
  %v56 = vld [vmem:[%s0 + $0x150] sm:$0xff]
  %v57 = vld [vmem:[%s0 + $0x158] sm:$0xff]
  %v58 = vld [vmem:[%s0 + $0x160] sm:$0xff]
  %v59 = vld [vmem:[%s0 + $0x168] sm:$0xff]
  %v60 = vld [vmem:[%s0 + $0x170] sm:$0xff]
  %v61 = vld [vmem:[%s0 + $0x178] sm:$0xff]
  %v62 = vld [vmem:[%s0 + $0x180] sm:$0xff]
  %v63 = vld [vmem:[%s0 + $0x188] sm:$0xff]
  %v64 = vld [vmem:[%s0 + $0x190] sm:$0xff]
  %v65 = vld [vmem:[%s0 + $0x198] sm:$0xff]
  %v66 = vld [vmem:[%s0 + $0x1a0] sm:$0xff]
  %v67 = vld [vmem:[%s0 + $0x1a8] sm:$0xff]
  %v68 = vld [vmem:[%s0 + $0x1b0] sm:$0xff]
  %v69 = vld [vmem:[%s0 + $0x1b8] sm:$0xff]
  %v70 = vld [vmem:[%s0 + $0x1c0] sm:$0xff]
  %v71 = vld [vmem:[%s0 + $0x1c8] sm:$0xff]
  %v72 = vld [vmem:[%s0 + $0x1d0] sm:$0xff]
  %v73 = vld [vmem:[%s0 + $0x1d8] sm:$0xff]
  %v74 = vld [vmem:[%s0 + $0x1e0] sm:$0x3]
  %v75 = vld [vmem:[%s0 + $0x1e8] sm:$0x3]
  %v76 = vld [vmem:[%s0 + $0x1f0] sm:$0x3]
  %v77 = vld [vmem:[%s0 + $0x1f8] sm:$0x3]
  %v78 = vld [vmem:[%s0 + $0x200] sm:$0x3]
  %v79 = vld [vmem:[%s1] sm:$0xff]
  %v80 = vld [vmem:[%s1 + $0x8] sm:$0xff]
  %v81 = vld [vmem:[%s1 + $0x10] sm:$0xff]
  %v82 = vld [vmem:[%s1 + $0x18] sm:$0xff]
  %v83 = vld [vmem:[%s1 + $0x20] sm:$0xff]
  %v84 = vld [vmem:[%s1 + $0x28] sm:$0xff]
  %v85 = vld [vmem:[%s1 + $0x30] sm:$0xff]
  %v86 = vld [vmem:[%s1 + $0x38] sm:$0xff]
  %v87 = vld [vmem:[%s1 + $0x40] sm:$0xff]
  %v88 = vld [vmem:[%s1 + $0x48] sm:$0xff]
  %v89 = vld [vmem:[%s1 + $0x50] sm:$0xff]
  %v90 = vld [vmem:[%s1 + $0x58] sm:$0xff]
  %v91 = vld [vmem:[%s1 + $0x60] sm:$0xff]
  %v92 = vld [vmem:[%s1 + $0x68] sm:$0xff]
  %v93 = vld [vmem:[%s1 + $0x70] sm:$0xff]
  %v94 = vld [vmem:[%s1 + $0x78] sm:$0xff]
  %v95 = vld [vmem:[%s1 + $0x80] sm:$0xff]
  %v96 = vld [vmem:[%s1 + $0x88] sm:$0xff]
  %v97 = vld [vmem:[%s1 + $0x90] sm:$0xff]
  %v98 = vld [vmem:[%s1 + $0x98] sm:$0xff]
  %v99 = vld [vmem:[%s1 + $0xa0] sm:$0xff]
  %v100 = vld [vmem:[%s1 + $0xa8] sm:$0xff]
  %v101 = vld [vmem:[%s1 + $0xb0] sm:$0xff]
  %v102 = vld [vmem:[%s1 + $0xb8] sm:$0xff]
  %v103 = vld [vmem:[%s1 + $0xc0] sm:$0xff]
  %v104 = vld [vmem:[%s1 + $0xc8] sm:$0xff]
  %v105 = vld [vmem:[%s1 + $0xd0] sm:$0xff]
  %v106 = vld [vmem:[%s1 + $0xd8] sm:$0xff]
  %v107 = vld [vmem:[%s1 + $0xe0] sm:$0xff]
  %v108 = vld [vmem:[%s1 + $0xe8] sm:$0xff]
  %v109 = vld [vmem:[%s1 + $0xf0] sm:$0xff]
  %v110 = vld [vmem:[%s1 + $0xf8] sm:$0xff]
  %v111 = vld [vmem:[%s1 + $0x100] sm:$0xff]
  %v112 = vld [vmem:[%s1 + $0x108] sm:$0xff]
  %v113 = vld [vmem:[%s1 + $0x110] sm:$0xff]
  %v114 = vld [vmem:[%s1 + $0x118] sm:$0xff]
  %v115 = vld [vmem:[%s1 + $0x120] sm:$0xff]
  %v116 = vld [vmem:[%s1 + $0x128] sm:$0xff]
  %v117 = vld [vmem:[%s1 + $0x130] sm:$0xff]
  %v118 = vld [vmem:[%s1 + $0x138] sm:$0xff]
  %v119 = vld [vmem:[%s1 + $0x140] sm:$0xff]
  %v120 = vld [vmem:[%s1 + $0x148] sm:$0xff]
  %v121 = vld [vmem:[%s1 + $0x150] sm:$0xff]
  %v122 = vld [vmem:[%s1 + $0x158] sm:$0xff]
  %v123 = vld [vmem:[%s1 + $0x160] sm:$0xff]
  %v124 = vld [vmem:[%s1 + $0x168] sm:$0xff]
  %v125 = vld [vmem:[%s1 + $0x170] sm:$0xff]
  %v126 = vld [vmem:[%s1 + $0x178] sm:$0xff]
  %v127 = vld [vmem:[%s1 + $0x180] sm:$0xff]
  %v128 = vld [vmem:[%s1 + $0x188] sm:$0xff]
  %v129 = vld [vmem:[%s1 + $0x190] sm:$0xff]
  %v130 = vld [vmem:[%s1 + $0x198] sm:$0xff]
  %v131 = vld [vmem:[%s1 + $0x1a0] sm:$0xff]
  %v132 = vld [vmem:[%s1 + $0x1a8] sm:$0xff]
  %v133 = vld [vmem:[%s1 + $0x1b0] sm:$0xff]
  %v134 = vld [vmem:[%s1 + $0x1b8] sm:$0xff]
  %v135 = vld [vmem:[%s1 + $0x1c0] sm:$0xff]
  %v136 = vld [vmem:[%s1 + $0x1c8] sm:$0xff]
  %v137 = vld [vmem:[%s1 + $0x1d0] sm:$0xff]
  %v138 = vld [vmem:[%s1 + $0x1d8] sm:$0xff]
  %v139 = vld [vmem:[%s1 + $0x1e0] sm:$0xff]
  %v140 = vld [vmem:[%s1 + $0x1e8] sm:$0xff]
  %v141 = vld [vmem:[%s1 + $0x1f0] sm:$0xff]
  %v142 = vld [vmem:[%s1 + $0x1f8] sm:$0xff]
  %v143 = vld [vmem:[%s1 + $0x200] sm:$0xff]
  %v144 = vld [vmem:[%s1 + $0x208] sm:$0xff]
  %v145 = vld [vmem:[%s1 + $0x210] sm:$0xff]
  %v146 = vld [vmem:[%s1 + $0x218] sm:$0xff]
  %v147 = vld [vmem:[%s1 + $0x220] sm:$0xff]
  %v148 = vld [vmem:[%s1 + $0x228] sm:$0xff]
  %v149 = vld [vmem:[%s1 + $0x230] sm:$0xff]
  %v150 = vld [vmem:[%s1 + $0x238] sm:$0xff]
  %v151 = vld [vmem:[%s2] sm:$0x1]
  %v153 = vlaneseq
  %v154 = vshrl.u32 %v153, 7
  %v155 = vsub.s32 0, %v154
  %v156 = vrot.slane %v151, %v155
  %vm158 = vcmask 523264
  %v160 = vsel %vm158, %v18, 0
  %v163 = vsel %vm158, %v23, 0
  %v166 = vsel %vm158, %v28, 0
  %v169 = vsel %vm158, %v33, 0
  %v172 = vsel %vm158, %v38, 0
  %v175 = vsel %vm158, %v43, 0
  %v178 = vsel %vm158, %v48, 0
  %v181 = vsel %vm158, %v53, 0
  %v184 = vsel %vm158, %v58, 0
  %v187 = vsel %vm158, %v63, 0
  %v190 = vsel %vm158, %v68, 0
  %v193 = vsel %vm158, %v73, 0
  %v196 = vsel %vm158, %v78, 0
  %198 = vmatprep.subr.mxu0 0.0
  %199 = vmatpush1.msra.mxu0 %v79
  %200 = vmatprep.subr.mxu0 0.0
  %201 = vmatpush1.msra.mxu0 %v80
  %202 = vmatprep.subr.mxu0 0.0
  %203 = vmatpush1.msra.mxu0 %v81
  %204 = vmatprep.subr.mxu0 0.0
  %205 = vmatpush1.msra.mxu0 %v82
  %206 = vmatprep.subr.mxu0 0.0
  %207 = vmatpush1.msra.mxu0 %v83
  %208 = vmatprep.subr.mxu0 0.0
  %209 = vmatpush1.msra.mxu0 %v84
  %210 = vmatprep.subr.mxu0 0.0
  %211 = vmatpush1.msra.mxu0 %v85
  %212 = vmatprep.subr.mxu0 0.0
  %213 = vmatpush1.msra.mxu0 %v86
  %214 = vmatprep.subr.mxu0 0.0
  %215 = vmatpush1.msra.mxu0 %v87
  %216 = vmatprep.subr.mxu0 0.0
  %217 = vmatpush1.msra.mxu0 %v88
  %218 = vmatprep.subr.mxu0 0.0
  %219 = vmatpush1.msra.mxu0 %v89
  %220 = vmatprep.subr.mxu0 0.0
  %221 = vmatpush1.msra.mxu0 %v90
  %222 = vmatprep.subr.mxu0 0.0
  %223 = vmatpush1.msra.mxu0 %v91
  %224 = vmatprep.subr.mxu0 0.0
  %225 = vmatpush1.msra.mxu0 %v92
  %226 = vmatprep.subr.mxu0 0.0
  %227 = vmatpush1.msra.mxu0 %v93
  %228 = vmatprep.subr.mxu0 0.0
  %229 = vmatpush1.msra.mxu0 %v94
  %230 = vmatprep.subr.mxu0 0.0
  %231 = vmatpush1.msra.mxu0 %v95
  %232 = vmatprep.subr.mxu0 0.0
  %233 = vmatpush1.msra.mxu0 %v96
  %234 = vmatprep.subr.mxu0 0.0
  %235 = vmatpush1.msra.mxu0 %v97
  %236 = vmatprep.subr.mxu0 0.0
  %237 = vmatpush1.msra.mxu0 %v98
  %238 = vmatprep.subr.mxu0 0.0
  %239 = vmatpush1.msra.mxu0 %v99
  %240 = vmatprep.subr.mxu0 0.0
  %241 = vmatpush1.msra.mxu0 %v100
  %242 = vmatprep.subr.mxu0 0.0
  %243 = vmatpush1.msra.mxu0 %v101
  %244 = vmatprep.subr.mxu0 0.0
  %245 = vmatpush1.msra.mxu0 %v102
  %246 = vmatprep.subr.mxu0 0.0
  %247 = vmatpush1.msra.mxu0 %v103
  %248 = vmatprep.subr.mxu0 0.0
  %249 = vmatpush1.msra.mxu0 %v104
  %250 = vmatprep.subr.mxu0 0.0
  %251 = vmatpush1.msra.mxu0 %v105
  %252 = vmatprep.subr.mxu0 0.0
  %253 = vmatpush1.msra.mxu0 %v106
  %254 = vmatprep.subr.mxu0 0.0
  %255 = vmatpush1.msra.mxu0 %v107
  %256 = vmatprep.subr.mxu0 0.0
  %257 = vmatpush1.msra.mxu0 %v108
  %258 = vmatprep.subr.mxu0 0.0
  %259 = vmatpush1.msra.mxu0 %v109
  %260 = vmatprep.subr.mxu0 0.0
  %261 = vmatpush1.msra.mxu0 %v110
  %262 = vmatprep.mubr.f32.mxu0 %v15
  %263 = vmatmul.mubr.f32.gmra.mrb[0].mxu0 %v14
  %v264 = vpop.f32.mrb[0].mxu0
  %v265 = vadd.f32 %v156, %v264
  %v266 = vpop.f32.mrb[0].mxu0
  %267 = vmatprep.mubr.f32.mxu0 %v20
  %268 = vmatmul.mubr.f32.gmra.mrb[0].mxu0 %v19
  %v269 = vpop.f32.mrb[0].mxu0
  %v270 = vadd.f32 %v156, %v269
  %v271 = vpop.f32.mrb[0].mxu0
  %272 = vmatprep.mubr.f32.mxu0 %v25
  %273 = vmatmul.mubr.f32.gmra.mrb[0].mxu0 %v24
  %v274 = vpop.f32.mrb[0].mxu0
  %v275 = vadd.f32 %v156, %v274
  %v276 = vpop.f32.mrb[0].mxu0
  %277 = vmatprep.mubr.f32.mxu0 %v30
  %278 = vmatmul.mubr.f32.gmra.mrb[0].mxu0 %v29
  %v279 = vpop.f32.mrb[0].mxu0
  %v280 = vadd.f32 %v156, %v279
  %v281 = vpop.f32.mrb[0].mxu0
  %282 = vmatprep.mubr.f32.mxu0 %v35
  %283 = vmatmul.mubr.f32.gmra.mrb[0].mxu0 %v34
  %v284 = vpop.f32.mrb[0].mxu0
  %v285 = vadd.f32 %v156, %v284
  %v286 = vpop.f32.mrb[0].mxu0
  %287 = vmatprep.mubr.f32.mxu0 %v40
  %288 = vmatmul.mubr.f32.gmra.mrb[0].mxu0 %v39
  %v289 = vpop.f32.mrb[0].mxu0
  %v290 = vadd.f32 %v156, %v289
  %v291 = vpop.f32.mrb[0].mxu0
  %292 = vmatprep.mubr.f32.mxu0 %v45
  %293 = vmatmul.mubr.f32.gmra.mrb[0].mxu0 %v44
  %v294 = vpop.f32.mrb[0].mxu0
  %v295 = vadd.f32 %v156, %v294
  %v296 = vpop.f32.mrb[0].mxu0
  %297 = vmatprep.mubr.f32.mxu0 %v50
  %298 = vmatmul.mubr.f32.gmra.mrb[0].mxu0 %v49
  %v299 = vpop.f32.mrb[0].mxu0
  %v300 = vadd.f32 %v156, %v299
  %v301 = vpop.f32.mrb[0].mxu0
  %302 = vmatprep.mubr.f32.mxu0 %v55
  %303 = vmatmul.mubr.f32.gmra.mrb[0].mxu0 %v54
  %v304 = vpop.f32.mrb[0].mxu0
  %v305 = vadd.f32 %v156, %v304
  %v306 = vpop.f32.mrb[0].mxu0
  %307 = vmatprep.mubr.f32.mxu0 %v60
  %308 = vmatmul.mubr.f32.gmra.mrb[0].mxu0 %v59
  %v309 = vpop.f32.mrb[0].mxu0
  %v310 = vadd.f32 %v156, %v309
  %v311 = vpop.f32.mrb[0].mxu0
  %312 = vmatprep.mubr.f32.mxu0 %v65
  %313 = vmatmul.mubr.f32.gmra.mrb[0].mxu0 %v64
  %v314 = vpop.f32.mrb[0].mxu0
  %v315 = vadd.f32 %v156, %v314
  %v316 = vpop.f32.mrb[0].mxu0
  %317 = vmatprep.mubr.f32.mxu0 %v70
  %318 = vmatmul.mubr.f32.gmra.mrb[0].mxu0 %v69
  %v319 = vpop.f32.mrb[0].mxu0
  %v320 = vadd.f32 %v156, %v319
  %v321 = vpop.f32.mrb[0].mxu0
  %322 = vmatprep.mubr.f32.mxu0 %v75
  %323 = vmatmul.mubr.f32.gmra.mrb[0].mxu0 %v74
  %v324 = vpop.f32.mrb[0].mxu0
  %v325 = vadd.f32 %v156, %v324
  %v326 = vpop.f32.mrb[0].mxu0
  %327 = vdwg.mxu0
  %328 = vmatprep.subr.mxu0 0.0
  %329 = vmatpush1.msra.mxu0 %v111
  %330 = vmatprep.subr.mxu0 0.0
  %331 = vmatpush1.msra.mxu0 %v112
  %332 = vmatprep.subr.mxu0 0.0
  %333 = vmatpush1.msra.mxu0 %v113
  %334 = vmatprep.subr.mxu0 0.0
  %335 = vmatpush1.msra.mxu0 %v114
  %336 = vmatprep.subr.mxu0 0.0
  %337 = vmatpush1.msra.mxu0 %v115
  %338 = vmatprep.subr.mxu0 0.0
  %339 = vmatpush1.msra.mxu0 %v116
  %340 = vmatprep.subr.mxu0 0.0
  %341 = vmatpush1.msra.mxu0 %v117
  %342 = vmatprep.subr.mxu0 0.0
  %343 = vmatpush1.msra.mxu0 %v118
  %344 = vmatprep.subr.mxu0 0.0
  %345 = vmatpush1.msra.mxu0 %v119
  %346 = vmatprep.subr.mxu0 0.0
  %347 = vmatpush1.msra.mxu0 %v120
  %348 = vmatprep.subr.mxu0 0.0
  %349 = vmatpush1.msra.mxu0 %v121
  %350 = vmatprep.subr.mxu0 0.0
  %351 = vmatpush1.msra.mxu0 %v122
  %352 = vmatprep.subr.mxu0 0.0
  %353 = vmatpush1.msra.mxu0 %v123
  %354 = vmatprep.subr.mxu0 0.0
  %355 = vmatpush1.msra.mxu0 %v124
  %356 = vmatprep.subr.mxu0 0.0
  %357 = vmatpush1.msra.mxu0 %v125
  %358 = vmatprep.subr.mxu0 0.0
  %359 = vmatpush1.msra.mxu0 %v126
  %360 = vmatprep.subr.mxu0 0.0
  %361 = vmatpush1.msra.mxu0 %v127
  %362 = vmatprep.subr.mxu0 0.0
  %363 = vmatpush1.msra.mxu0 %v128
  %364 = vmatprep.subr.mxu0 0.0
  %365 = vmatpush1.msra.mxu0 %v129
  %366 = vmatprep.subr.mxu0 0.0
  %367 = vmatpush1.msra.mxu0 %v130
  %368 = vmatprep.subr.mxu0 0.0
  %369 = vmatpush1.msra.mxu0 %v131
  %370 = vmatprep.subr.mxu0 0.0
  %371 = vmatpush1.msra.mxu0 %v132
  %372 = vmatprep.subr.mxu0 0.0
  %373 = vmatpush1.msra.mxu0 %v133
  %374 = vmatprep.subr.mxu0 0.0
  %375 = vmatpush1.msra.mxu0 %v134
  %376 = vmatprep.subr.mxu0 0.0
  %377 = vmatpush1.msra.mxu0 %v135
  %378 = vmatprep.subr.mxu0 0.0
  %379 = vmatpush1.msra.mxu0 %v136
  %380 = vmatprep.subr.mxu0 0.0
  %381 = vmatpush1.msra.mxu0 %v137
  %382 = vmatprep.subr.mxu0 0.0
  %383 = vmatpush1.msra.mxu0 %v138
  %384 = vmatprep.subr.mxu0 0.0
  %385 = vmatpush1.msra.mxu0 %v139
  %386 = vmatprep.subr.mxu0 0.0
  %387 = vmatpush1.msra.mxu0 %v140
  %388 = vmatprep.subr.mxu0 0.0
  %389 = vmatpush1.msra.mxu0 %v141
  %390 = vmatprep.subr.mxu0 0.0
  %391 = vmatpush1.msra.mxu0 %v142
  %392 = vmatprep.mubr.f32.mxu0 %v17
  %393 = vmatmul.mubr.f32.gmra.mrb[0].mxu0 %v16
  %v394 = vpop.f32.mrb[0].mxu0
  %v395 = vadd.f32 %v265, %v394
  %v396 = vpop.f32.mrb[0].mxu0
  %397 = vmatprep.mubr.f32.mxu0 %v22
  %398 = vmatmul.mubr.f32.gmra.mrb[0].mxu0 %v21
  %v399 = vpop.f32.mrb[0].mxu0
  %v400 = vadd.f32 %v270, %v399
  %v401 = vpop.f32.mrb[0].mxu0
  %402 = vmatprep.mubr.f32.mxu0 %v27
  %403 = vmatmul.mubr.f32.gmra.mrb[0].mxu0 %v26
  %v404 = vpop.f32.mrb[0].mxu0
  %v405 = vadd.f32 %v275, %v404
  %v406 = vpop.f32.mrb[0].mxu0
  %407 = vmatprep.mubr.f32.mxu0 %v32
  %408 = vmatmul.mubr.f32.gmra.mrb[0].mxu0 %v31
  %v409 = vpop.f32.mrb[0].mxu0
  %v410 = vadd.f32 %v280, %v409
  %v411 = vpop.f32.mrb[0].mxu0
  %412 = vmatprep.mubr.f32.mxu0 %v37
  %413 = vmatmul.mubr.f32.gmra.mrb[0].mxu0 %v36
  %v414 = vpop.f32.mrb[0].mxu0
  %v415 = vadd.f32 %v285, %v414
  %v416 = vpop.f32.mrb[0].mxu0
  %417 = vmatprep.mubr.f32.mxu0 %v42
  %418 = vmatmul.mubr.f32.gmra.mrb[0].mxu0 %v41
  %v419 = vpop.f32.mrb[0].mxu0
  %v420 = vadd.f32 %v290, %v419
  %v421 = vpop.f32.mrb[0].mxu0
  %422 = vmatprep.mubr.f32.mxu0 %v47
  %423 = vmatmul.mubr.f32.gmra.mrb[0].mxu0 %v46
  %v424 = vpop.f32.mrb[0].mxu0
  %v425 = vadd.f32 %v295, %v424
  %v426 = vpop.f32.mrb[0].mxu0
  %427 = vmatprep.mubr.f32.mxu0 %v52
  %428 = vmatmul.mubr.f32.gmra.mrb[0].mxu0 %v51
  %v429 = vpop.f32.mrb[0].mxu0
  %v430 = vadd.f32 %v300, %v429
  %v431 = vpop.f32.mrb[0].mxu0
  %432 = vmatprep.mubr.f32.mxu0 %v57
  %433 = vmatmul.mubr.f32.gmra.mrb[0].mxu0 %v56
  %v434 = vpop.f32.mrb[0].mxu0
  %v435 = vadd.f32 %v305, %v434
  %v436 = vpop.f32.mrb[0].mxu0
  %437 = vmatprep.mubr.f32.mxu0 %v62
  %438 = vmatmul.mubr.f32.gmra.mrb[0].mxu0 %v61
  %v439 = vpop.f32.mrb[0].mxu0
  %v440 = vadd.f32 %v310, %v439
  %v441 = vpop.f32.mrb[0].mxu0
  %442 = vmatprep.mubr.f32.mxu0 %v67
  %443 = vmatmul.mubr.f32.gmra.mrb[0].mxu0 %v66
  %v444 = vpop.f32.mrb[0].mxu0
  %v445 = vadd.f32 %v315, %v444
  %v446 = vpop.f32.mrb[0].mxu0
  %447 = vmatprep.mubr.f32.mxu0 %v72
  %448 = vmatmul.mubr.f32.gmra.mrb[0].mxu0 %v71
  %v449 = vpop.f32.mrb[0].mxu0
  %v450 = vadd.f32 %v320, %v449
  %v451 = vpop.f32.mrb[0].mxu0
  %452 = vmatprep.mubr.f32.mxu0 %v77
  %453 = vmatmul.mubr.f32.gmra.mrb[0].mxu0 %v76
  %v454 = vpop.f32.mrb[0].mxu0
  %v455 = vadd.f32 %v325, %v454
  %v456 = vpop.f32.mrb[0].mxu0
  %457 = vdwg.mxu0
  %458 = vmatprep.subr.mxu0 0.0
  %459 = vmatpush1.msra.mxu0 %v143
  %460 = vmatprep.subr.mxu0 0.0
  %461 = vmatpush1.msra.mxu0 %v144
  %462 = vmatprep.subr.mxu0 0.0
  %463 = vmatpush1.msra.mxu0 %v145
  %464 = vmatprep.subr.mxu0 0.0
  %465 = vmatpush1.msra.mxu0 %v146
  %466 = vmatprep.subr.mxu0 0.0
  %467 = vmatpush1.msra.mxu0 %v147
  %468 = vmatprep.subr.mxu0 0.0
  %469 = vmatpush1.msra.mxu0 %v148
  %470 = vmatprep.subr.mxu0 0.0
  %471 = vmatpush1.msra.mxu0 %v149
  %472 = vmatprep.subr.mxu0 0.0
  %473 = vmatpush1.msra.mxu0 %v150
  %474 = vmatprep.subr.mxu0 0.0
  %475 = vmatpush1.msra.mxu0 0.0
  %476 = vmatprep.subr.mxu0 0.0
  %477 = vmatpush1.msra.mxu0 0.0
  %478 = vmatprep.subr.mxu0 0.0
  %479 = vmatpush1.msra.mxu0 0.0
  %480 = vmatprep.subr.mxu0 0.0
  %481 = vmatpush1.msra.mxu0 0.0
  %482 = vmatprep.subr.mxu0 0.0
  %483 = vmatpush1.msra.mxu0 0.0
  %484 = vmatprep.subr.mxu0 0.0
  %485 = vmatpush1.msra.mxu0 0.0
  %486 = vmatprep.subr.mxu0 0.0
  %487 = vmatpush1.msra.mxu0 0.0
  %488 = vmatprep.subr.mxu0 0.0
  %489 = vmatpush1.msra.mxu0 0.0
  %490 = vmatprep.subr.mxu0 0.0
  %491 = vmatpush1.msra.mxu0 0.0
  %492 = vmatprep.subr.mxu0 0.0
  %493 = vmatpush1.msra.mxu0 0.0
  %494 = vmatprep.subr.mxu0 0.0
  %495 = vmatpush1.msra.mxu0 0.0
  %496 = vmatprep.subr.mxu0 0.0
  %497 = vmatpush1.msra.mxu0 0.0
  %498 = vmatprep.subr.mxu0 0.0
  %499 = vmatpush1.msra.mxu0 0.0
  %500 = vmatprep.subr.mxu0 0.0
  %501 = vmatpush1.msra.mxu0 0.0
  %502 = vmatprep.subr.mxu0 0.0
  %503 = vmatpush1.msra.mxu0 0.0
  %504 = vmatprep.subr.mxu0 0.0
  %505 = vmatpush1.msra.mxu0 0.0
  %506 = vmatprep.subr.mxu0 0.0
  %507 = vmatpush1.msra.mxu0 0.0
  %508 = vmatprep.subr.mxu0 0.0
  %509 = vmatpush1.msra.mxu0 0.0
  %510 = vmatprep.subr.mxu0 0.0
  %511 = vmatpush1.msra.mxu0 0.0
  %512 = vmatprep.subr.mxu0 0.0
  %513 = vmatpush1.msra.mxu0 0.0
  %514 = vmatprep.subr.mxu0 0.0
  %515 = vmatpush1.msra.mxu0 0.0
  %516 = vmatprep.subr.mxu0 0.0
  %517 = vmatpush1.msra.mxu0 0.0
  %518 = vmatprep.subr.mxu0 0.0
  %519 = vmatpush1.msra.mxu0 0.0
  %520 = vmatprep.subr.mxu0 0.0
  %521 = vmatpush1.msra.mxu0 0.0
  %522 = vmatprep.mubr.f32.mxu0 0.0
  %523 = vmatmul.mubr.f32.gmra.mrb[0].mxu0 %v160
  %v524 = vpop.f32.mrb[0].mxu0
  %v525 = vadd.f32 %v395, %v524
  %v526 = vpop.f32.mrb[0].mxu0
  %527 = vmatprep.mubr.f32.mxu0 0.0
  %528 = vmatmul.mubr.f32.gmra.mrb[0].mxu0 %v163
  %v529 = vpop.f32.mrb[0].mxu0
  %v530 = vadd.f32 %v400, %v529
  %v531 = vpop.f32.mrb[0].mxu0
  %532 = vmatprep.mubr.f32.mxu0 0.0
  %533 = vmatmul.mubr.f32.gmra.mrb[0].mxu0 %v166
  %v534 = vpop.f32.mrb[0].mxu0
  %v535 = vadd.f32 %v405, %v534
  %v536 = vpop.f32.mrb[0].mxu0
  %537 = vmatprep.mubr.f32.mxu0 0.0
  %538 = vmatmul.mubr.f32.gmra.mrb[0].mxu0 %v169
  %v539 = vpop.f32.mrb[0].mxu0
  %v540 = vadd.f32 %v410, %v539
  %v541 = vpop.f32.mrb[0].mxu0
  %542 = vmatprep.mubr.f32.mxu0 0.0
  %543 = vmatmul.mubr.f32.gmra.mrb[0].mxu0 %v172
  %v544 = vpop.f32.mrb[0].mxu0
  %v545 = vadd.f32 %v415, %v544
  %v546 = vpop.f32.mrb[0].mxu0
  %547 = vmatprep.mubr.f32.mxu0 0.0
  %548 = vmatmul.mubr.f32.gmra.mrb[0].mxu0 %v175
  %v549 = vpop.f32.mrb[0].mxu0
  %v550 = vadd.f32 %v420, %v549
  %v551 = vpop.f32.mrb[0].mxu0
  %552 = vmatprep.mubr.f32.mxu0 0.0
  %553 = vmatmul.mubr.f32.gmra.mrb[0].mxu0 %v178
  %v554 = vpop.f32.mrb[0].mxu0
  %v555 = vadd.f32 %v425, %v554
  %v556 = vpop.f32.mrb[0].mxu0
  %557 = vmatprep.mubr.f32.mxu0 0.0
  %558 = vmatmul.mubr.f32.gmra.mrb[0].mxu0 %v181
  %v559 = vpop.f32.mrb[0].mxu0
  %v560 = vadd.f32 %v430, %v559
  %v561 = vpop.f32.mrb[0].mxu0
  %562 = vmatprep.mubr.f32.mxu0 0.0
  %563 = vmatmul.mubr.f32.gmra.mrb[0].mxu0 %v184
  %v564 = vpop.f32.mrb[0].mxu0
  %v565 = vadd.f32 %v435, %v564
  %v566 = vpop.f32.mrb[0].mxu0
  %567 = vmatprep.mubr.f32.mxu0 0.0
  %568 = vmatmul.mubr.f32.gmra.mrb[0].mxu0 %v187
  %v569 = vpop.f32.mrb[0].mxu0
  %v570 = vadd.f32 %v440, %v569
  %v571 = vpop.f32.mrb[0].mxu0
  %572 = vmatprep.mubr.f32.mxu0 0.0
  %573 = vmatmul.mubr.f32.gmra.mrb[0].mxu0 %v190
  %v574 = vpop.f32.mrb[0].mxu0
  %v575 = vadd.f32 %v445, %v574
  %v576 = vpop.f32.mrb[0].mxu0
  %577 = vmatprep.mubr.f32.mxu0 0.0
  %578 = vmatmul.mubr.f32.gmra.mrb[0].mxu0 %v193
  %v579 = vpop.f32.mrb[0].mxu0
  %v580 = vadd.f32 %v450, %v579
  %v581 = vpop.f32.mrb[0].mxu0
  %582 = vmatprep.mubr.f32.mxu0 0.0
  %583 = vmatmul.mubr.f32.gmra.mrb[0].mxu0 %v196
  %v584 = vpop.f32.mrb[0].mxu0
  %v585 = vadd.f32 %v455, %v584
  %v586 = vpop.f32.mrb[0].mxu0
  %587 = vdwg.mxu0
  %v588 = vmax.f32 %v525, 0.0
  %v589 = vmax.f32 %v530, 0.0
  %v590 = vmax.f32 %v535, 0.0
  %v591 = vmax.f32 %v540, 0.0
  %v592 = vmax.f32 %v545, 0.0
  %v593 = vmax.f32 %v550, 0.0
  %v594 = vmax.f32 %v555, 0.0
  %v595 = vmax.f32 %v560, 0.0
  %v596 = vmax.f32 %v565, 0.0
  %v597 = vmax.f32 %v570, 0.0
  %v598 = vmax.f32 %v575, 0.0
  %v599 = vmax.f32 %v580, 0.0
  %v600 = vmax.f32 %v585, 0.0
  %601 = vst [vmem:[%s3] sm:$0xff] %v588
  %602 = vst [vmem:[%s3 + $0x8] sm:$0xff] %v589
  %603 = vst [vmem:[%s3 + $0x10] sm:$0xff] %v590
  %604 = vst [vmem:[%s3 + $0x18] sm:$0xff] %v591
  %605 = vst [vmem:[%s3 + $0x20] sm:$0xff] %v592
  %606 = vst [vmem:[%s3 + $0x28] sm:$0xff] %v593
  %607 = vst [vmem:[%s3 + $0x30] sm:$0xff] %v594
  %608 = vst [vmem:[%s3 + $0x38] sm:$0xff] %v595
  %609 = vst [vmem:[%s3 + $0x40] sm:$0xff] %v596
  %610 = vst [vmem:[%s3 + $0x48] sm:$0xff] %v597
  %611 = vst [vmem:[%s3 + $0x50] sm:$0xff] %v598
  %612 = vst [vmem:[%s3 + $0x58] sm:$0xff] %v599
  %613 = vst [vmem:[%s3 + $0x60] sm:$0x3] %v600
  // Predicated region
  $region14: #{cnn_forward.6} parent=0 // pred_check
    _
  $region15: #{cnn_forward.6} parent=0 // pred_check_branch
    %615 = sbr.rel (0) target = $region17
  $region16: #{cnn_forward.6} parent=0 // pred_region
    _
  $region17: #{cnn_forward.6} parent=0 // pred_fallthru
    _
  // Predicated region
  $region18: #{cnn_forward.6} parent=0 // pred_check
    _
  $region19: #{cnn_forward.6} parent=0 // pred_check_branch
    %617 = sbr.rel (0) target = $region21
  $region20: #{cnn_forward.6} parent=0 // pred_region
    _
  $region21: #{cnn_forward.6} parent=0 // pred_fallthru
    _

// kernel: cnn_forward.7
$region0: #{cnn_forward.7}
  #allocation0 [shape = 'u32[]', space=smem, size = 0x4, offset = 0x4, fixed_abs, tag = 'smem constant byte address 0x4 - core index']
  #allocation1 [shape = 'u32[144,128]{1,0:T(1,128)}', space=vmem, size = 0x12000, scoped, tag = 'internal scratch']
  %s0 = inlined_call_operand.vmem [shape: f32[2,3136], index: 0, kind: input, shape index: {}]
  %s1 = inlined_call_operand.vmem [shape: f32[3136,128], index: 1, kind: input, shape index: {}]
  %s2 = inlined_call_operand.vmem [shape: f32[1,128], index: 2, kind: input, shape index: {}]
  %s3 = inlined_call_operand.hbm [shape: f32[2,128], index: 3, kind: output, shape index: {}]
  %s4 = sld [smem:[#allocation0]]
  $region22: #{cnn_forward.7} parent=0
    _
  %s6 = ssub.s32 1, %s4
  %s7 = scalar_select 0, %s6, %s4
  $region1: #{cnn_forward.7} parent=0
    #allocation2 [shape = 'u8[1024]{0}', space=vmem, size = 0x400, scoped, tag = 'output window, operand 0, single buffered']
    #allocation3 [shape = 's32[1]{0}', space=sflag, size = 0x4, scoped, tag = 'scoped memory for cnn_forward.7']
    %8 = vsyncpa [#allocation3], 0
    // Predicated region
    $region2: #{cnn_forward.7} parent=1 // pred_check
      _
    $region3: #{cnn_forward.7} parent=1 // pred_check_branch
      %10 = sbr.rel (0) target = $region5
    $region4: #{cnn_forward.7} parent=1 // pred_region
      _
    $region5: #{cnn_forward.7} parent=1 // pred_fallthru
      _
    // Predicated region
    $region6: #{cnn_forward.7} parent=1 // pred_check
      _
    $region7: #{cnn_forward.7} parent=1 // pred_check_branch
      %12 = sbr.rel (0) target = $region9
    $region8: #{cnn_forward.7} parent=1 // pred_region
      _
    $region9: #{cnn_forward.7} parent=1 // pred_fallthru
      _
    // Predicated region
    $region10: #{cnn_forward.7} parent=1 // pred_check
      _
    $region11: #{cnn_forward.7} parent=1 // pred_check_branch
      %14 = sbr.rel (0) target = $region13
    $region12: #{cnn_forward.7} parent=1 // pred_region
      _
    $region13: #{cnn_forward.7} parent=1 // pred_fallthru
      _
    %v15 = vld [vmem:[%s0] sm:$0xff]
    %v16 = vld [vmem:[%s0 + $0x8] sm:$0xff]
    %v17 = vld [vmem:[%s0 + $0x10] sm:$0xff]
    %v18 = vld [vmem:[%s0 + $0x18] sm:$0xff]
    %v19 = vld [vmem:[%s0 + $0x20] sm:$0xff]
    %v20 = vld [vmem:[%s0 + $0x28] sm:$0xff]
    %v21 = vld [vmem:[%s0 + $0x30] sm:$0x3]
    %v22 = vld [vmem:[%s1] sm:$0xff]
    %v23 = vld [vmem:[%s1 + $0x8] sm:$0xff]
    %v24 = vld [vmem:[%s1 + $0x10] sm:$0xff]
    %v25 = vld [vmem:[%s1 + $0x18] sm:$0xff]
    %v26 = vld [vmem:[%s1 + $0x20] sm:$0xff]
    %v27 = vld [vmem:[%s1 + $0x28] sm:$0xff]
    %v28 = vld [vmem:[%s1 + $0x30] sm:$0xff]
    %v29 = vld [vmem:[%s1 + $0x38] sm:$0xff]
    %v30 = vld [vmem:[%s1 + $0x40] sm:$0xff]
    %v31 = vld [vmem:[%s1 + $0x48] sm:$0xff]
    %v32 = vld [vmem:[%s1 + $0x50] sm:$0xff]
    %v33 = vld [vmem:[%s1 + $0x58] sm:$0xff]
    %v34 = vld [vmem:[%s1 + $0x60] sm:$0xff]
    %v35 = vld [vmem:[%s1 + $0x68] sm:$0xff]
    %v36 = vld [vmem:[%s1 + $0x70] sm:$0xff]
    %v37 = vld [vmem:[%s1 + $0x78] sm:$0xff]
    %v38 = vld [vmem:[%s1 + $0x80] sm:$0xff]
    %v39 = vld [vmem:[%s1 + $0x88] sm:$0xff]
    %v40 = vld [vmem:[%s1 + $0x90] sm:$0xff]
    %v41 = vld [vmem:[%s1 + $0x98] sm:$0xff]
    %v42 = vld [vmem:[%s1 + $0xa0] sm:$0xff]
    %v43 = vld [vmem:[%s1 + $0xa8] sm:$0xff]
    %v44 = vld [vmem:[%s1 + $0xb0] sm:$0xff]
    %v45 = vld [vmem:[%s1 + $0xb8] sm:$0xff]
    %v46 = vld [vmem:[%s1 + $0xc0] sm:$0xff]
    %v47 = vld [vmem:[%s1 + $0xc8] sm:$0xff]
    %v48 = vld [vmem:[%s1 + $0xd0] sm:$0xff]
    %v49 = vld [vmem:[%s1 + $0xd8] sm:$0xff]
    %v50 = vld [vmem:[%s1 + $0xe0] sm:$0xff]
    %v51 = vld [vmem:[%s1 + $0xe8] sm:$0xff]
    %v52 = vld [vmem:[%s1 + $0xf0] sm:$0xff]
    %v53 = vld [vmem:[%s1 + $0xf8] sm:$0xff]
    %v54 = vld [vmem:[%s1 + $0x100] sm:$0xff]
    %v55 = vld [vmem:[%s1 + $0x108] sm:$0xff]
    %v56 = vld [vmem:[%s1 + $0x110] sm:$0xff]
    %v57 = vld [vmem:[%s1 + $0x118] sm:$0xff]
    %v58 = vld [vmem:[%s1 + $0x120] sm:$0xff]
    %v59 = vld [vmem:[%s1 + $0x128] sm:$0xff]
    %v60 = vld [vmem:[%s1 + $0x130] sm:$0xff]
    %v61 = vld [vmem:[%s1 + $0x138] sm:$0xff]
    %v62 = vld [vmem:[%s1 + $0x140] sm:$0xff]
    %v63 = vld [vmem:[%s1 + $0x148] sm:$0xff]
    %v64 = vld [vmem:[%s1 + $0x150] sm:$0xff]
    %v65 = vld [vmem:[%s1 + $0x158] sm:$0xff]
    %v66 = vld [vmem:[%s1 + $0x160] sm:$0xff]
    %v67 = vld [vmem:[%s1 + $0x168] sm:$0xff]
    %v68 = vld [vmem:[%s1 + $0x170] sm:$0xff]
    %v69 = vld [vmem:[%s1 + $0x178] sm:$0xff]
    %v70 = vld [vmem:[%s1 + $0x180] sm:$0xff]
    %v71 = vld [vmem:[%s1 + $0x188] sm:$0xff]
    %v72 = vld [vmem:[%s1 + $0x190] sm:$0xff]
    %v73 = vld [vmem:[%s1 + $0x198] sm:$0xff]
    %v74 = vld [vmem:[%s1 + $0x1a0] sm:$0xff]
    %v75 = vld [vmem:[%s1 + $0x1a8] sm:$0xff]
    %v76 = vld [vmem:[%s1 + $0x1b0] sm:$0xff]
    %v77 = vld [vmem:[%s1 + $0x1b8] sm:$0xff]
    %v78 = vld [vmem:[%s1 + $0x1c0] sm:$0xff]
    %v79 = vld [vmem:[%s1 + $0x1c8] sm:$0xff]
    %v80 = vld [vmem:[%s1 + $0x1d0] sm:$0xff]
    %v81 = vld [vmem:[%s1 + $0x1d8] sm:$0xff]
    %v82 = vld [vmem:[%s1 + $0x1e0] sm:$0xff]
    %v83 = vld [vmem:[%s1 + $0x1e8] sm:$0xff]
    %v84 = vld [vmem:[%s1 + $0x1f0] sm:$0xff]
    %v85 = vld [vmem:[%s1 + $0x1f8] sm:$0xff]
    %v86 = vld [vmem:[%s1 + $0x200] sm:$0xff]
    %v87 = vld [vmem:[%s1 + $0x208] sm:$0xff]
    %v88 = vld [vmem:[%s1 + $0x210] sm:$0xff]
    %v89 = vld [vmem:[%s1 + $0x218] sm:$0xff]
    %v90 = vld [vmem:[%s1 + $0x220] sm:$0xff]
    %v91 = vld [vmem:[%s1 + $0x228] sm:$0xff]
    %v92 = vld [vmem:[%s1 + $0x230] sm:$0xff]
    %v93 = vld [vmem:[%s1 + $0x238] sm:$0xff]
    %v94 = vld [vmem:[%s1 + $0x240] sm:$0xff]
    %v95 = vld [vmem:[%s1 + $0x248] sm:$0xff]
    %v96 = vld [vmem:[%s1 + $0x250] sm:$0xff]
    %v97 = vld [vmem:[%s1 + $0x258] sm:$0xff]
    %v98 = vld [vmem:[%s1 + $0x260] sm:$0xff]
    %v99 = vld [vmem:[%s1 + $0x268] sm:$0xff]
    %v100 = vld [vmem:[%s1 + $0x270] sm:$0xff]
    %v101 = vld [vmem:[%s1 + $0x278] sm:$0xff]
    %v102 = vld [vmem:[%s1 + $0x280] sm:$0xff]
    %v103 = vld [vmem:[%s1 + $0x288] sm:$0xff]
    %v104 = vld [vmem:[%s1 + $0x290] sm:$0xff]
    %v105 = vld [vmem:[%s1 + $0x298] sm:$0xff]
    %v106 = vld [vmem:[%s1 + $0x2a0] sm:$0xff]
    %v107 = vld [vmem:[%s1 + $0x2a8] sm:$0xff]
    %v108 = vld [vmem:[%s1 + $0x2b0] sm:$0xff]
    %v109 = vld [vmem:[%s1 + $0x2b8] sm:$0xff]
    %v110 = vld [vmem:[%s1 + $0x2c0] sm:$0xff]
    %v111 = vld [vmem:[%s1 + $0x2c8] sm:$0xff]
    %v112 = vld [vmem:[%s1 + $0x2d0] sm:$0xff]
    %v113 = vld [vmem:[%s1 + $0x2d8] sm:$0xff]
    %v114 = vld [vmem:[%s1 + $0x2e0] sm:$0xff]
    %v115 = vld [vmem:[%s1 + $0x2e8] sm:$0xff]
    %v116 = vld [vmem:[%s1 + $0x2f0] sm:$0xff]
    %v117 = vld [vmem:[%s1 + $0x2f8] sm:$0xff]
    %v118 = vld [vmem:[%s1 + $0x300] sm:$0xff]
    %v119 = vld [vmem:[%s1 + $0x308] sm:$0xff]
    %v120 = vld [vmem:[%s1 + $0x310] sm:$0xff]
    %v121 = vld [vmem:[%s1 + $0x318] sm:$0xff]
    %v122 = vld [vmem:[%s1 + $0x320] sm:$0xff]
    %v123 = vld [vmem:[%s1 + $0x328] sm:$0xff]
    %v124 = vld [vmem:[%s1 + $0x330] sm:$0xff]
    %v125 = vld [vmem:[%s1 + $0x338] sm:$0xff]
    %v126 = vld [vmem:[%s1 + $0x340] sm:$0xff]
    %v127 = vld [vmem:[%s1 + $0x348] sm:$0xff]
    %v128 = vld [vmem:[%s1 + $0x350] sm:$0xff]
    %v129 = vld [vmem:[%s1 + $0x358] sm:$0xff]
    %v130 = vld [vmem:[%s1 + $0x360] sm:$0xff]
    %v131 = vld [vmem:[%s1 + $0x368] sm:$0xff]
    %v132 = vld [vmem:[%s1 + $0x370] sm:$0xff]
    %v133 = vld [vmem:[%s1 + $0x378] sm:$0xff]
    %v134 = vld [vmem:[%s1 + $0x380] sm:$0xff]
    %v135 = vld [vmem:[%s1 + $0x388] sm:$0xff]
    %v136 = vld [vmem:[%s1 + $0x390] sm:$0xff]
    %v137 = vld [vmem:[%s1 + $0x398] sm:$0xff]
    %v138 = vld [vmem:[%s1 + $0x3a0] sm:$0xff]
    %v139 = vld [vmem:[%s1 + $0x3a8] sm:$0xff]
    %v140 = vld [vmem:[%s1 + $0x3b0] sm:$0xff]
    %v141 = vld [vmem:[%s1 + $0x3b8] sm:$0xff]
    %v142 = vld [vmem:[%s1 + $0x3c0] sm:$0xff]
    %v143 = vld [vmem:[%s1 + $0x3c8] sm:$0xff]
    %v144 = vld [vmem:[%s1 + $0x3d0] sm:$0xff]
    %v145 = vld [vmem:[%s1 + $0x3d8] sm:$0xff]
    %v146 = vld [vmem:[%s1 + $0x3e0] sm:$0xff]
    %v147 = vld [vmem:[%s1 + $0x3e8] sm:$0xff]
    %v148 = vld [vmem:[%s1 + $0x3f0] sm:$0xff]
    %v149 = vld [vmem:[%s1 + $0x3f8] sm:$0xff]
    %v150 = vld [vmem:[%s1 + $0x400] sm:$0xff]
    %v151 = vld [vmem:[%s1 + $0x408] sm:$0xff]
    %v152 = vld [vmem:[%s1 + $0x410] sm:$0xff]
    %v153 = vld [vmem:[%s1 + $0x418] sm:$0xff]
    %v154 = vld [vmem:[%s1 + $0x420] sm:$0xff]
    %v155 = vld [vmem:[%s1 + $0x428] sm:$0xff]
    %v156 = vld [vmem:[%s1 + $0x430] sm:$0xff]
    %v157 = vld [vmem:[%s1 + $0x438] sm:$0xff]
    %v158 = vld [vmem:[%s1 + $0x440] sm:$0xff]
    %v159 = vld [vmem:[%s1 + $0x448] sm:$0xff]
    %v160 = vld [vmem:[%s1 + $0x450] sm:$0xff]
    %v161 = vld [vmem:[%s1 + $0x458] sm:$0xff]
    %v162 = vld [vmem:[%s1 + $0x460] sm:$0xff]
    %v163 = vld [vmem:[%s1 + $0x468] sm:$0xff]
    %v164 = vld [vmem:[%s1 + $0x470] sm:$0xff]
    %v165 = vld [vmem:[%s1 + $0x478] sm:$0xff]
    %v166 = vld [vmem:[%s1 + $0x480] sm:$0xff]
    %v167 = vld [vmem:[%s1 + $0x488] sm:$0xff]
    %v168 = vld [vmem:[%s1 + $0x490] sm:$0xff]
    %v169 = vld [vmem:[%s1 + $0x498] sm:$0xff]
    %v170 = vld [vmem:[%s1 + $0x4a0] sm:$0xff]
    %v171 = vld [vmem:[%s1 + $0x4a8] sm:$0xff]
    %v172 = vld [vmem:[%s1 + $0x4b0] sm:$0xff]
    %v173 = vld [vmem:[%s1 + $0x4b8] sm:$0xff]
    %v174 = vld [vmem:[%s1 + $0x4c0] sm:$0xff]
    %v175 = vld [vmem:[%s1 + $0x4c8] sm:$0xff]
    %v176 = vld [vmem:[%s1 + $0x4d0] sm:$0xff]
    %v177 = vld [vmem:[%s1 + $0x4d8] sm:$0xff]
    %v178 = vld [vmem:[%s1 + $0x4e0] sm:$0xff]
    %v179 = vld [vmem:[%s1 + $0x4e8] sm:$0xff]
    %v180 = vld [vmem:[%s1 + $0x4f0] sm:$0xff]
    %v181 = vld [vmem:[%s1 + $0x4f8] sm:$0xff]
    %v182 = vld [vmem:[%s1 + $0x500] sm:$0xff]
    %v183 = vld [vmem:[%s1 + $0x508] sm:$0xff]
    %v184 = vld [vmem:[%s1 + $0x510] sm:$0xff]
    %v185 = vld [vmem:[%s1 + $0x518] sm:$0xff]
    %v186 = vld [vmem:[%s1 + $0x520] sm:$0xff]
    %v187 = vld [vmem:[%s1 + $0x528] sm:$0xff]
    %v188 = vld [vmem:[%s1 + $0x530] sm:$0xff]
    %v189 = vld [vmem:[%s1 + $0x538] sm:$0xff]
    %v190 = vld [vmem:[%s1 + $0x540] sm:$0xff]
    %v191 = vld [vmem:[%s1 + $0x548] sm:$0xff]
    %v192 = vld [vmem:[%s1 + $0x550] sm:$0xff]
    %v193 = vld [vmem:[%s1 + $0x558] sm:$0xff]
    %v194 = vld [vmem:[%s1 + $0x560] sm:$0xff]
    %v195 = vld [vmem:[%s1 + $0x568] sm:$0xff]
    %v196 = vld [vmem:[%s1 + $0x570] sm:$0xff]
    %v197 = vld [vmem:[%s1 + $0x578] sm:$0xff]
    %v198 = vld [vmem:[%s1 + $0x580] sm:$0xff]
    %v199 = vld [vmem:[%s1 + $0x588] sm:$0xff]
    %v200 = vld [vmem:[%s1 + $0x590] sm:$0xff]
    %v201 = vld [vmem:[%s1 + $0x598] sm:$0xff]
    %v202 = vld [vmem:[%s1 + $0x5a0] sm:$0xff]
    %v203 = vld [vmem:[%s1 + $0x5a8] sm:$0xff]
    %v204 = vld [vmem:[%s1 + $0x5b0] sm:$0xff]
    %v205 = vld [vmem:[%s1 + $0x5b8] sm:$0xff]
    %v206 = vld [vmem:[%s1 + $0x5c0] sm:$0xff]
    %v207 = vld [vmem:[%s1 + $0x5c8] sm:$0xff]
    %v208 = vld [vmem:[%s1 + $0x5d0] sm:$0xff]
    %v209 = vld [vmem:[%s1 + $0x5d8] sm:$0xff]
    %v210 = vld [vmem:[%s1 + $0x5e0] sm:$0xff]
    %v211 = vld [vmem:[%s1 + $0x5e8] sm:$0xff]
    %v212 = vld [vmem:[%s1 + $0x5f0] sm:$0xff]
    %v213 = vld [vmem:[%s1 + $0x5f8] sm:$0xff]
    %v214 = vld [vmem:[%s1 + $0x600] sm:$0xff]
    %v215 = vld [vmem:[%s1 + $0x608] sm:$0xff]
    %v216 = vld [vmem:[%s1 + $0x610] sm:$0xff]
    %v217 = vld [vmem:[%s1 + $0x618] sm:$0xff]
    %v218 = vld [vmem:[%s1 + $0x620] sm:$0xff]
    %v219 = vld [vmem:[%s1 + $0x628] sm:$0xff]
    %v220 = vld [vmem:[%s1 + $0x630] sm:$0xff]
    %v221 = vld [vmem:[%s1 + $0x638] sm:$0xff]
    %v222 = vld [vmem:[%s1 + $0x640] sm:$0xff]
    %v223 = vld [vmem:[%s1 + $0x648] sm:$0xff]
    %v224 = vld [vmem:[%s1 + $0x650] sm:$0xff]
    %v225 = vld [vmem:[%s1 + $0x658] sm:$0xff]
    %v226 = vld [vmem:[%s1 + $0x660] sm:$0xff]
    %v227 = vld [vmem:[%s1 + $0x668] sm:$0xff]
    %v228 = vld [vmem:[%s1 + $0x670] sm:$0xff]
    %v229 = vld [vmem:[%s1 + $0x678] sm:$0xff]
    %v230 = vld [vmem:[%s1 + $0x680] sm:$0xff]
    %v231 = vld [vmem:[%s1 + $0x688] sm:$0xff]
    %v232 = vld [vmem:[%s1 + $0x690] sm:$0xff]
    %v233 = vld [vmem:[%s1 + $0x698] sm:$0xff]
    %v234 = vld [vmem:[%s1 + $0x6a0] sm:$0xff]
    %v235 = vld [vmem:[%s1 + $0x6a8] sm:$0xff]
    %v236 = vld [vmem:[%s1 + $0x6b0] sm:$0xff]
    %v237 = vld [vmem:[%s1 + $0x6b8] sm:$0xff]
    %v238 = vld [vmem:[%s1 + $0x6c0] sm:$0xff]
    %v239 = vld [vmem:[%s1 + $0x6c8] sm:$0xff]
    %v240 = vld [vmem:[%s1 + $0x6d0] sm:$0xff]
    %v241 = vld [vmem:[%s1 + $0x6d8] sm:$0xff]
    %v242 = vld [vmem:[%s1 + $0x6e0] sm:$0xff]
    %v243 = vld [vmem:[%s1 + $0x6e8] sm:$0xff]
    %v244 = vld [vmem:[%s1 + $0x6f0] sm:$0xff]
    %v245 = vld [vmem:[%s1 + $0x6f8] sm:$0xff]
    %v246 = vld [vmem:[%s1 + $0x700] sm:$0xff]
    %v247 = vld [vmem:[%s1 + $0x708] sm:$0xff]
    %v248 = vld [vmem:[%s1 + $0x710] sm:$0xff]
    %v249 = vld [vmem:[%s1 + $0x718] sm:$0xff]
    %v250 = vld [vmem:[%s1 + $0x720] sm:$0xff]
    %v251 = vld [vmem:[%s1 + $0x728] sm:$0xff]
    %v252 = vld [vmem:[%s1 + $0x730] sm:$0xff]
    %v253 = vld [vmem:[%s1 + $0x738] sm:$0xff]
    %v254 = vld [vmem:[%s1 + $0x740] sm:$0xff]
    %v255 = vld [vmem:[%s1 + $0x748] sm:$0xff]
    %v256 = vld [vmem:[%s1 + $0x750] sm:$0xff]
    %v257 = vld [vmem:[%s1 + $0x758] sm:$0xff]
    %v258 = vld [vmem:[%s1 + $0x760] sm:$0xff]
    %v259 = vld [vmem:[%s1 + $0x768] sm:$0xff]
    %v260 = vld [vmem:[%s1 + $0x770] sm:$0xff]
    %v261 = vld [vmem:[%s1 + $0x778] sm:$0xff]
    %v262 = vld [vmem:[%s1 + $0x780] sm:$0xff]
    %v263 = vld [vmem:[%s1 + $0x788] sm:$0xff]
    %v264 = vld [vmem:[%s1 + $0x790] sm:$0xff]
    %v265 = vld [vmem:[%s1 + $0x798] sm:$0xff]
    %v266 = vld [vmem:[%s1 + $0x7a0] sm:$0xff]
    %v267 = vld [vmem:[%s1 + $0x7a8] sm:$0xff]
    %v268 = vld [vmem:[%s1 + $0x7b0] sm:$0xff]
    %v269 = vld [vmem:[%s1 + $0x7b8] sm:$0xff]
    %v270 = vld [vmem:[%s1 + $0x7c0] sm:$0xff]
    %v271 = vld [vmem:[%s1 + $0x7c8] sm:$0xff]
    %v272 = vld [vmem:[%s1 + $0x7d0] sm:$0xff]
    %v273 = vld [vmem:[%s1 + $0x7d8] sm:$0xff]
    %v274 = vld [vmem:[%s1 + $0x7e0] sm:$0xff]
    %v275 = vld [vmem:[%s1 + $0x7e8] sm:$0xff]
    %v276 = vld [vmem:[%s1 + $0x7f0] sm:$0xff]
    %v277 = vld [vmem:[%s1 + $0x7f8] sm:$0xff]
    %v278 = vld [vmem:[%s1 + $0x800] sm:$0xff]
    %v279 = vld [vmem:[%s1 + $0x808] sm:$0xff]
    %v280 = vld [vmem:[%s1 + $0x810] sm:$0xff]
    %v281 = vld [vmem:[%s1 + $0x818] sm:$0xff]
    %v282 = vld [vmem:[%s1 + $0x820] sm:$0xff]
    %v283 = vld [vmem:[%s1 + $0x828] sm:$0xff]
    %v284 = vld [vmem:[%s1 + $0x830] sm:$0xff]
    %v285 = vld [vmem:[%s1 + $0x838] sm:$0xff]
    %v286 = vld [vmem:[%s1 + $0x840] sm:$0xff]
    %v287 = vld [vmem:[%s1 + $0x848] sm:$0xff]
    %v288 = vld [vmem:[%s1 + $0x850] sm:$0xff]
    %v289 = vld [vmem:[%s1 + $0x858] sm:$0xff]
    %v290 = vld [vmem:[%s1 + $0x860] sm:$0xff]
    %v291 = vld [vmem:[%s1 + $0x868] sm:$0xff]
    %v292 = vld [vmem:[%s1 + $0x870] sm:$0xff]
    %v293 = vld [vmem:[%s1 + $0x878] sm:$0xff]
    %v294 = vld [vmem:[%s1 + $0x880] sm:$0xff]
    %v295 = vld [vmem:[%s1 + $0x888] sm:$0xff]
    %v296 = vld [vmem:[%s1 + $0x890] sm:$0xff]
    %v297 = vld [vmem:[%s1 + $0x898] sm:$0xff]
    %v298 = vld [vmem:[%s1 + $0x8a0] sm:$0xff]
    %v299 = vld [vmem:[%s1 + $0x8a8] sm:$0xff]
    %v300 = vld [vmem:[%s1 + $0x8b0] sm:$0xff]
    %v301 = vld [vmem:[%s1 + $0x8b8] sm:$0xff]
    %v302 = vld [vmem:[%s1 + $0x8c0] sm:$0xff]
    %v303 = vld [vmem:[%s1 + $0x8c8] sm:$0xff]
    %v304 = vld [vmem:[%s1 + $0x8d0] sm:$0xff]
    %v305 = vld [vmem:[%s1 + $0x8d8] sm:$0xff]
    %v306 = vld [vmem:[%s1 + $0x8e0] sm:$0xff]
    %v307 = vld [vmem:[%s1 + $0x8e8] sm:$0xff]
    %v308 = vld [vmem:[%s1 + $0x8f0] sm:$0xff]
    %v309 = vld [vmem:[%s1 + $0x8f8] sm:$0xff]
    %v310 = vld [vmem:[%s1 + $0x900] sm:$0xff]
    %v311 = vld [vmem:[%s1 + $0x908] sm:$0xff]
    %v312 = vld [vmem:[%s1 + $0x910] sm:$0xff]
    %v313 = vld [vmem:[%s1 + $0x918] sm:$0xff]
    %v314 = vld [vmem:[%s1 + $0x920] sm:$0xff]
    %v315 = vld [vmem:[%s1 + $0x928] sm:$0xff]
    %v316 = vld [vmem:[%s1 + $0x930] sm:$0xff]
    %v317 = vld [vmem:[%s1 + $0x938] sm:$0xff]
    %v318 = vld [vmem:[%s1 + $0x940] sm:$0xff]
    %v319 = vld [vmem:[%s1 + $0x948] sm:$0xff]
    %v320 = vld [vmem:[%s1 + $0x950] sm:$0xff]
    %v321 = vld [vmem:[%s1 + $0x958] sm:$0xff]
    %v322 = vld [vmem:[%s1 + $0x960] sm:$0xff]
    %v323 = vld [vmem:[%s1 + $0x968] sm:$0xff]
    %v324 = vld [vmem:[%s1 + $0x970] sm:$0xff]
    %v325 = vld [vmem:[%s1 + $0x978] sm:$0xff]
    %v326 = vld [vmem:[%s1 + $0x980] sm:$0xff]
    %v327 = vld [vmem:[%s1 + $0x988] sm:$0xff]
    %v328 = vld [vmem:[%s1 + $0x990] sm:$0xff]
    %v329 = vld [vmem:[%s1 + $0x998] sm:$0xff]
    %v330 = vld [vmem:[%s1 + $0x9a0] sm:$0xff]
    %v331 = vld [vmem:[%s1 + $0x9a8] sm:$0xff]
    %v332 = vld [vmem:[%s1 + $0x9b0] sm:$0xff]
    %v333 = vld [vmem:[%s1 + $0x9b8] sm:$0xff]
    %v334 = vld [vmem:[%s1 + $0x9c0] sm:$0xff]
    %v335 = vld [vmem:[%s1 + $0x9c8] sm:$0xff]
    %v336 = vld [vmem:[%s1 + $0x9d0] sm:$0xff]
    %v337 = vld [vmem:[%s1 + $0x9d8] sm:$0xff]
    %v338 = vld [vmem:[%s1 + $0x9e0] sm:$0xff]
    %v339 = vld [vmem:[%s1 + $0x9e8] sm:$0xff]
    %v340 = vld [vmem:[%s1 + $0x9f0] sm:$0xff]
    %v341 = vld [vmem:[%s1 + $0x9f8] sm:$0xff]
    %v342 = vld [vmem:[%s1 + $0xa00] sm:$0xff]
    %v343 = vld [vmem:[%s1 + $0xa08] sm:$0xff]
    %v344 = vld [vmem:[%s1 + $0xa10] sm:$0xff]
    %v345 = vld [vmem:[%s1 + $0xa18] sm:$0xff]
    %v346 = vld [vmem:[%s1 + $0xa20] sm:$0xff]
    %v347 = vld [vmem:[%s1 + $0xa28] sm:$0xff]
    %v348 = vld [vmem:[%s1 + $0xa30] sm:$0xff]
    %v349 = vld [vmem:[%s1 + $0xa38] sm:$0xff]
    %v350 = vld [vmem:[%s1 + $0xa40] sm:$0xff]
    %v351 = vld [vmem:[%s1 + $0xa48] sm:$0xff]
    %v352 = vld [vmem:[%s1 + $0xa50] sm:$0xff]
    %v353 = vld [vmem:[%s1 + $0xa58] sm:$0xff]
    %v354 = vld [vmem:[%s1 + $0xa60] sm:$0xff]
    %v355 = vld [vmem:[%s1 + $0xa68] sm:$0xff]
    %v356 = vld [vmem:[%s1 + $0xa70] sm:$0xff]
    %v357 = vld [vmem:[%s1 + $0xa78] sm:$0xff]
    %v358 = vld [vmem:[%s1 + $0xa80] sm:$0xff]
    %v359 = vld [vmem:[%s1 + $0xa88] sm:$0xff]
    %v360 = vld [vmem:[%s1 + $0xa90] sm:$0xff]
    %v361 = vld [vmem:[%s1 + $0xa98] sm:$0xff]
    %v362 = vld [vmem:[%s1 + $0xaa0] sm:$0xff]
    %v363 = vld [vmem:[%s1 + $0xaa8] sm:$0xff]
    %v364 = vld [vmem:[%s1 + $0xab0] sm:$0xff]
    %v365 = vld [vmem:[%s1 + $0xab8] sm:$0xff]
    %v366 = vld [vmem:[%s1 + $0xac0] sm:$0xff]
    %v367 = vld [vmem:[%s1 + $0xac8] sm:$0xff]
    %v368 = vld [vmem:[%s1 + $0xad0] sm:$0xff]
    %v369 = vld [vmem:[%s1 + $0xad8] sm:$0xff]
    %v370 = vld [vmem:[%s1 + $0xae0] sm:$0xff]
    %v371 = vld [vmem:[%s1 + $0xae8] sm:$0xff]
    %v372 = vld [vmem:[%s1 + $0xaf0] sm:$0xff]
    %v373 = vld [vmem:[%s1 + $0xaf8] sm:$0xff]
    %v374 = vld [vmem:[%s1 + $0xb00] sm:$0xff]
    %v375 = vld [vmem:[%s1 + $0xb08] sm:$0xff]
    %v376 = vld [vmem:[%s1 + $0xb10] sm:$0xff]
    %v377 = vld [vmem:[%s1 + $0xb18] sm:$0xff]
    %v378 = vld [vmem:[%s1 + $0xb20] sm:$0xff]
    %v379 = vld [vmem:[%s1 + $0xb28] sm:$0xff]
    %v380 = vld [vmem:[%s1 + $0xb30] sm:$0xff]
    %v381 = vld [vmem:[%s1 + $0xb38] sm:$0xff]
    %v382 = vld [vmem:[%s1 + $0xb40] sm:$0xff]
    %v383 = vld [vmem:[%s1 + $0xb48] sm:$0xff]
    %v384 = vld [vmem:[%s1 + $0xb50] sm:$0xff]
    %v385 = vld [vmem:[%s1 + $0xb58] sm:$0xff]
    %v386 = vld [vmem:[%s1 + $0xb60] sm:$0xff]
    %v387 = vld [vmem:[%s1 + $0xb68] sm:$0xff]
    %v388 = vld [vmem:[%s1 + $0xb70] sm:$0xff]
    %v389 = vld [vmem:[%s1 + $0xb78] sm:$0xff]
    %v390 = vld [vmem:[%s1 + $0xb80] sm:$0xff]
    %v391 = vld [vmem:[%s1 + $0xb88] sm:$0xff]
    %v392 = vld [vmem:[%s1 + $0xb90] sm:$0xff]
    %v393 = vld [vmem:[%s1 + $0xb98] sm:$0xff]
    %v394 = vld [vmem:[%s1 + $0xba0] sm:$0xff]
    %v395 = vld [vmem:[%s1 + $0xba8] sm:$0xff]
    %v396 = vld [vmem:[%s1 + $0xbb0] sm:$0xff]
    %v397 = vld [vmem:[%s1 + $0xbb8] sm:$0xff]
    %v398 = vld [vmem:[%s1 + $0xbc0] sm:$0xff]
    %v399 = vld [vmem:[%s1 + $0xbc8] sm:$0xff]
    %v400 = vld [vmem:[%s1 + $0xbd0] sm:$0xff]
    %v401 = vld [vmem:[%s1 + $0xbd8] sm:$0xff]
    %v402 = vld [vmem:[%s1 + $0xbe0] sm:$0xff]
    %v403 = vld [vmem:[%s1 + $0xbe8] sm:$0xff]
    %v404 = vld [vmem:[%s1 + $0xbf0] sm:$0xff]
    %v405 = vld [vmem:[%s1 + $0xbf8] sm:$0xff]
    %v406 = vld [vmem:[%s1 + $0xc00] sm:$0xff]
    %v407 = vld [vmem:[%s1 + $0xc08] sm:$0xff]
    %v408 = vld [vmem:[%s1 + $0xc10] sm:$0xff]
    %v409 = vld [vmem:[%s1 + $0xc18] sm:$0xff]
    %v410 = vld [vmem:[%s1 + $0xc20] sm:$0xff]
    %v411 = vld [vmem:[%s1 + $0xc28] sm:$0xff]
    %v412 = vld [vmem:[%s1 + $0xc30] sm:$0xff]
    %v413 = vld [vmem:[%s1 + $0xc38] sm:$0xff]
    %v414 = vld [vmem:[%s2] sm:$0x1]
    %v416 = vlaneseq
    %v417 = vshrl.u32 %v416, 7
    %v418 = vsub.s32 0, %v417
    %v419 = vrot.slane %v414, %v418
    %v428 = vcombine.high %v15, %v15
    %v430 = vunpack.c.l.s4 1983009808
    %v431 = vunpack.c.0.s8 %v430
    %v432 = vlaneseq
    %v433 = vshrl.u32 %v432, 7
    %v434 = vsub.s32 %v431, %v433
    %v435 = vrot.slane %v15, %v434
    %v437 = vunpack.c.l.s4 1983009808
    %v438 = vunpack.c.0.s8 %v437
    %v439 = vlaneseq
    %v440 = vshrl.u32 %v439, 7
    %v441 = vsub.s32 %v438, %v440
    %v442 = vrot.slane %v428, %v441
    %v443 = vcombine.high %v435, %v435
    %v444 = vcombine.high %v442, %v442
    %v445 = vcombine.high %v16, %v16
    %v447 = vunpack.c.l.s4 1983009808
    %v448 = vunpack.c.0.s8 %v447
    %v449 = vlaneseq
    %v450 = vshrl.u32 %v449, 7
    %v451 = vsub.s32 %v448, %v450
    %v452 = vrot.slane %v16, %v451
    %v454 = vunpack.c.l.s4 1983009808
    %v455 = vunpack.c.0.s8 %v454
    %v456 = vlaneseq
    %v457 = vshrl.u32 %v456, 7
    %v458 = vsub.s32 %v455, %v457
    %v459 = vrot.slane %v445, %v458
    %v460 = vcombine.high %v452, %v452
    %v461 = vcombine.high %v459, %v459
    %v462 = vcombine.high %v17, %v17
    %v464 = vunpack.c.l.s4 1983009808
    %v465 = vunpack.c.0.s8 %v464
    %v466 = vlaneseq
    %v467 = vshrl.u32 %v466, 7
    %v468 = vsub.s32 %v465, %v467
    %v469 = vrot.slane %v17, %v468
    %v471 = vunpack.c.l.s4 1983009808
    %v472 = vunpack.c.0.s8 %v471
    %v473 = vlaneseq
    %v474 = vshrl.u32 %v473, 7
    %v475 = vsub.s32 %v472, %v474
    %v476 = vrot.slane %v462, %v475
    %v477 = vcombine.high %v469, %v469
    %v478 = vcombine.high %v476, %v476
    %v479 = vcombine.high %v18, %v18
    %v481 = vunpack.c.l.s4 1983009808
    %v482 = vunpack.c.0.s8 %v481
    %v483 = vlaneseq
    %v484 = vshrl.u32 %v483, 7
    %v485 = vsub.s32 %v482, %v484
    %v486 = vrot.slane %v18, %v485
    %v488 = vunpack.c.l.s4 1983009808
    %v489 = vunpack.c.0.s8 %v488
    %v490 = vlaneseq
    %v491 = vshrl.u32 %v490, 7
    %v492 = vsub.s32 %v489, %v491
    %v493 = vrot.slane %v479, %v492
    %v494 = vcombine.high %v486, %v486
    %v495 = vcombine.high %v493, %v493
    %v496 = vcombine.high %v19, %v19
    %v498 = vunpack.c.l.s4 1983009808
    %v499 = vunpack.c.0.s8 %v498
    %v500 = vlaneseq
    %v501 = vshrl.u32 %v500, 7
    %v502 = vsub.s32 %v499, %v501
    %v503 = vrot.slane %v19, %v502
    %v505 = vunpack.c.l.s4 1983009808
    %v506 = vunpack.c.0.s8 %v505
    %v507 = vlaneseq
    %v508 = vshrl.u32 %v507, 7
    %v509 = vsub.s32 %v506, %v508
    %v510 = vrot.slane %v496, %v509
    %v511 = vcombine.high %v503, %v503
    %v512 = vcombine.high %v510, %v510
    %v513 = vcombine.high %v20, %v20
    %v515 = vunpack.c.l.s4 1983009808
    %v516 = vunpack.c.0.s8 %v515
    %v517 = vlaneseq
    %v518 = vshrl.u32 %v517, 7
    %v519 = vsub.s32 %v516, %v518
    %v520 = vrot.slane %v20, %v519
    %v522 = vunpack.c.l.s4 1983009808
    %v523 = vunpack.c.0.s8 %v522
    %v524 = vlaneseq
    %v525 = vshrl.u32 %v524, 7
    %v526 = vsub.s32 %v523, %v525
    %v527 = vrot.slane %v513, %v526
    %v528 = vcombine.high %v520, %v520
    %v529 = vcombine.high %v527, %v527
    %v531 = vunpack.c.l.s4 1983009808
    %v532 = vunpack.c.0.s8 %v531
    %v533 = vlaneseq
    %v534 = vshrl.u32 %v533, 7
    %v535 = vsub.s32 %v532, %v534
    %v536 = vrot.slane %v21, %v535
    %vm561 = vcmask 523264
    %v562 = vsel %vm561, %v536, 0
    %564 = vmatprep.subr.mxu0 0.0
    %565 = vmatpush1.msra.mxu0 %v22
    %566 = vmatprep.subr.mxu0 0.0
    %567 = vmatpush1.msra.mxu0 %v23
    %568 = vmatprep.subr.mxu0 0.0
    %569 = vmatpush1.msra.mxu0 %v24
    %570 = vmatprep.subr.mxu0 0.0
    %571 = vmatpush1.msra.mxu0 %v25
    %572 = vmatprep.subr.mxu0 0.0
    %573 = vmatpush1.msra.mxu0 %v26
    %574 = vmatprep.subr.mxu0 0.0
    %575 = vmatpush1.msra.mxu0 %v27
    %576 = vmatprep.subr.mxu0 0.0
    %577 = vmatpush1.msra.mxu0 %v28
    %578 = vmatprep.subr.mxu0 0.0
    %579 = vmatpush1.msra.mxu0 %v29
    %580 = vmatprep.subr.mxu0 0.0
    %581 = vmatpush1.msra.mxu0 %v30
    %582 = vmatprep.subr.mxu0 0.0
    %583 = vmatpush1.msra.mxu0 %v31
    %584 = vmatprep.subr.mxu0 0.0
    %585 = vmatpush1.msra.mxu0 %v32
    %586 = vmatprep.subr.mxu0 0.0
    %587 = vmatpush1.msra.mxu0 %v33
    %588 = vmatprep.subr.mxu0 0.0
    %589 = vmatpush1.msra.mxu0 %v34
    %590 = vmatprep.subr.mxu0 0.0
    %591 = vmatpush1.msra.mxu0 %v35
    %592 = vmatprep.subr.mxu0 0.0
    %593 = vmatpush1.msra.mxu0 %v36
    %594 = vmatprep.subr.mxu0 0.0
    %595 = vmatpush1.msra.mxu0 %v37
    %596 = vmatprep.subr.mxu0 0.0
    %597 = vmatpush1.msra.mxu0 %v38
    %598 = vmatprep.subr.mxu0 0.0
    %599 = vmatpush1.msra.mxu0 %v39
    %600 = vmatprep.subr.mxu0 0.0
    %601 = vmatpush1.msra.mxu0 %v40
    %602 = vmatprep.subr.mxu0 0.0
    %603 = vmatpush1.msra.mxu0 %v41
    %604 = vmatprep.subr.mxu0 0.0
    %605 = vmatpush1.msra.mxu0 %v42
    %606 = vmatprep.subr.mxu0 0.0
    %607 = vmatpush1.msra.mxu0 %v43
    %608 = vmatprep.subr.mxu0 0.0
    %609 = vmatpush1.msra.mxu0 %v44
    %610 = vmatprep.subr.mxu0 0.0
    %611 = vmatpush1.msra.mxu0 %v45
    %612 = vmatprep.subr.mxu0 0.0
    %613 = vmatpush1.msra.mxu0 %v46
    %614 = vmatprep.subr.mxu0 0.0
    %615 = vmatpush1.msra.mxu0 %v47
    %616 = vmatprep.subr.mxu0 0.0
    %617 = vmatpush1.msra.mxu0 %v48
    %618 = vmatprep.subr.mxu0 0.0
    %619 = vmatpush1.msra.mxu0 %v49
    %620 = vmatprep.subr.mxu0 0.0
    %621 = vmatpush1.msra.mxu0 %v50
    %622 = vmatprep.subr.mxu0 0.0
    %623 = vmatpush1.msra.mxu0 %v51
    %624 = vmatprep.subr.mxu0 0.0
    %625 = vmatpush1.msra.mxu0 %v52
    %626 = vmatprep.subr.mxu0 0.0
    %627 = vmatpush1.msra.mxu0 %v53
    %628 = vmatprep.mubr.f32.mxu0 %v443
    %629 = vmatmul.mubr.f32.gmra.mrb[0].mxu0 %v435
    %v630 = vpop.f32.mrb[0].mxu0
    %v631 = vadd.f32 %v419, %v630
    %v632 = vpop.f32.mrb[0].mxu0
    %633 = vdwg.mxu0
    %634 = vmatprep.subr.mxu0 0.0
    %635 = vmatpush1.msra.mxu0 %v54
    %636 = vmatprep.subr.mxu0 0.0
    %637 = vmatpush1.msra.mxu0 %v55
    %638 = vmatprep.subr.mxu0 0.0
    %639 = vmatpush1.msra.mxu0 %v56
    %640 = vmatprep.subr.mxu0 0.0
    %641 = vmatpush1.msra.mxu0 %v57
    %642 = vmatprep.subr.mxu0 0.0
    %643 = vmatpush1.msra.mxu0 %v58
    %644 = vmatprep.subr.mxu0 0.0
    %645 = vmatpush1.msra.mxu0 %v59
    %646 = vmatprep.subr.mxu0 0.0
    %647 = vmatpush1.msra.mxu0 %v60
    %648 = vmatprep.subr.mxu0 0.0
    %649 = vmatpush1.msra.mxu0 %v61
    %650 = vmatprep.subr.mxu0 0.0
    %651 = vmatpush1.msra.mxu0 %v62
    %652 = vmatprep.subr.mxu0 0.0
    %653 = vmatpush1.msra.mxu0 %v63
    %654 = vmatprep.subr.mxu0 0.0
    %655 = vmatpush1.msra.mxu0 %v64
    %656 = vmatprep.subr.mxu0 0.0
    %657 = vmatpush1.msra.mxu0 %v65
    %658 = vmatprep.subr.mxu0 0.0
    %659 = vmatpush1.msra.mxu0 %v66
    %660 = vmatprep.subr.mxu0 0.0
    %661 = vmatpush1.msra.mxu0 %v67
    %662 = vmatprep.subr.mxu0 0.0
    %663 = vmatpush1.msra.mxu0 %v68
    %664 = vmatprep.subr.mxu0 0.0
    %665 = vmatpush1.msra.mxu0 %v69
    %666 = vmatprep.subr.mxu0 0.0
    %667 = vmatpush1.msra.mxu0 %v70
    %668 = vmatprep.subr.mxu0 0.0
    %669 = vmatpush1.msra.mxu0 %v71
    %670 = vmatprep.subr.mxu0 0.0
    %671 = vmatpush1.msra.mxu0 %v72
    %672 = vmatprep.subr.mxu0 0.0
    %673 = vmatpush1.msra.mxu0 %v73
    %674 = vmatprep.subr.mxu0 0.0
    %675 = vmatpush1.msra.mxu0 %v74
    %676 = vmatprep.subr.mxu0 0.0
    %677 = vmatpush1.msra.mxu0 %v75
    %678 = vmatprep.subr.mxu0 0.0
    %679 = vmatpush1.msra.mxu0 %v76
    %680 = vmatprep.subr.mxu0 0.0
    %681 = vmatpush1.msra.mxu0 %v77
    %682 = vmatprep.subr.mxu0 0.0
    %683 = vmatpush1.msra.mxu0 %v78
    %684 = vmatprep.subr.mxu0 0.0
    %685 = vmatpush1.msra.mxu0 %v79
    %686 = vmatprep.subr.mxu0 0.0
    %687 = vmatpush1.msra.mxu0 %v80
    %688 = vmatprep.subr.mxu0 0.0
    %689 = vmatpush1.msra.mxu0 %v81
    %690 = vmatprep.subr.mxu0 0.0
    %691 = vmatpush1.msra.mxu0 %v82
    %692 = vmatprep.subr.mxu0 0.0
    %693 = vmatpush1.msra.mxu0 %v83
    %694 = vmatprep.subr.mxu0 0.0
    %695 = vmatpush1.msra.mxu0 %v84
    %696 = vmatprep.subr.mxu0 0.0
    %697 = vmatpush1.msra.mxu0 %v85
    %698 = vmatprep.mubr.f32.mxu0 %v444
    %699 = vmatmul.mubr.f32.gmra.mrb[0].mxu0 %v442
    %v700 = vpop.f32.mrb[0].mxu0
    %v701 = vadd.f32 %v631, %v700
    %v702 = vpop.f32.mrb[0].mxu0
    %703 = vdwg.mxu0
    %704 = vmatprep.subr.mxu0 0.0
    %705 = vmatpush1.msra.mxu0 %v86
    %706 = vmatprep.subr.mxu0 0.0
    %707 = vmatpush1.msra.mxu0 %v87
    %708 = vmatprep.subr.mxu0 0.0
    %709 = vmatpush1.msra.mxu0 %v88
    %710 = vmatprep.subr.mxu0 0.0
    %711 = vmatpush1.msra.mxu0 %v89
    %712 = vmatprep.subr.mxu0 0.0
    %713 = vmatpush1.msra.mxu0 %v90
    %714 = vmatprep.subr.mxu0 0.0
    %715 = vmatpush1.msra.mxu0 %v91
    %716 = vmatprep.subr.mxu0 0.0
    %717 = vmatpush1.msra.mxu0 %v92
    %718 = vmatprep.subr.mxu0 0.0
    %719 = vmatpush1.msra.mxu0 %v93
    %720 = vmatprep.subr.mxu0 0.0
    %721 = vmatpush1.msra.mxu0 %v94
    %722 = vmatprep.subr.mxu0 0.0
    %723 = vmatpush1.msra.mxu0 %v95
    %724 = vmatprep.subr.mxu0 0.0
    %725 = vmatpush1.msra.mxu0 %v96
    %726 = vmatprep.subr.mxu0 0.0
    %727 = vmatpush1.msra.mxu0 %v97
    %728 = vmatprep.subr.mxu0 0.0
    %729 = vmatpush1.msra.mxu0 %v98
    %730 = vmatprep.subr.mxu0 0.0
    %731 = vmatpush1.msra.mxu0 %v99
    %732 = vmatprep.subr.mxu0 0.0
    %733 = vmatpush1.msra.mxu0 %v100
    %734 = vmatprep.subr.mxu0 0.0
    %735 = vmatpush1.msra.mxu0 %v101
    %736 = vmatprep.subr.mxu0 0.0
    %737 = vmatpush1.msra.mxu0 %v102
    %738 = vmatprep.subr.mxu0 0.0
    %739 = vmatpush1.msra.mxu0 %v103
    %740 = vmatprep.subr.mxu0 0.0
    %741 = vmatpush1.msra.mxu0 %v104
    %742 = vmatprep.subr.mxu0 0.0
    %743 = vmatpush1.msra.mxu0 %v105
    %744 = vmatprep.subr.mxu0 0.0
    %745 = vmatpush1.msra.mxu0 %v106
    %746 = vmatprep.subr.mxu0 0.0
    %747 = vmatpush1.msra.mxu0 %v107
    %748 = vmatprep.subr.mxu0 0.0
    %749 = vmatpush1.msra.mxu0 %v108
    %750 = vmatprep.subr.mxu0 0.0
    %751 = vmatpush1.msra.mxu0 %v109
    %752 = vmatprep.subr.mxu0 0.0
    %753 = vmatpush1.msra.mxu0 %v110
    %754 = vmatprep.subr.mxu0 0.0
    %755 = vmatpush1.msra.mxu0 %v111
    %756 = vmatprep.subr.mxu0 0.0
    %757 = vmatpush1.msra.mxu0 %v112
    %758 = vmatprep.subr.mxu0 0.0
    %759 = vmatpush1.msra.mxu0 %v113
    %760 = vmatprep.subr.mxu0 0.0
    %761 = vmatpush1.msra.mxu0 %v114
    %762 = vmatprep.subr.mxu0 0.0
    %763 = vmatpush1.msra.mxu0 %v115
    %764 = vmatprep.subr.mxu0 0.0
    %765 = vmatpush1.msra.mxu0 %v116
    %766 = vmatprep.subr.mxu0 0.0
    %767 = vmatpush1.msra.mxu0 %v117
    %768 = vmatprep.mubr.f32.mxu0 %v460
    %769 = vmatmul.mubr.f32.gmra.mrb[0].mxu0 %v452
    %v770 = vpop.f32.mrb[0].mxu0
    %v771 = vadd.f32 %v701, %v770
    %v772 = vpop.f32.mrb[0].mxu0
    %773 = vdwg.mxu0
    %774 = vmatprep.subr.mxu0 0.0
    %775 = vmatpush1.msra.mxu0 %v118
    %776 = vmatprep.subr.mxu0 0.0
    %777 = vmatpush1.msra.mxu0 %v119
    %778 = vmatprep.subr.mxu0 0.0
    %779 = vmatpush1.msra.mxu0 %v120
    %780 = vmatprep.subr.mxu0 0.0
    %781 = vmatpush1.msra.mxu0 %v121
    %782 = vmatprep.subr.mxu0 0.0
    %783 = vmatpush1.msra.mxu0 %v122
    %784 = vmatprep.subr.mxu0 0.0
    %785 = vmatpush1.msra.mxu0 %v123
    %786 = vmatprep.subr.mxu0 0.0
    %787 = vmatpush1.msra.mxu0 %v124
    %788 = vmatprep.subr.mxu0 0.0
    %789 = vmatpush1.msra.mxu0 %v125
    %790 = vmatprep.subr.mxu0 0.0
    %791 = vmatpush1.msra.mxu0 %v126
    %792 = vmatprep.subr.mxu0 0.0
    %793 = vmatpush1.msra.mxu0 %v127
    %794 = vmatprep.subr.mxu0 0.0
    %795 = vmatpush1.msra.mxu0 %v128
    %796 = vmatprep.subr.mxu0 0.0
    %797 = vmatpush1.msra.mxu0 %v129
    %798 = vmatprep.subr.mxu0 0.0
    %799 = vmatpush1.msra.mxu0 %v130
    %800 = vmatprep.subr.mxu0 0.0
    %801 = vmatpush1.msra.mxu0 %v131
    %802 = vmatprep.subr.mxu0 0.0
    %803 = vmatpush1.msra.mxu0 %v132
    %804 = vmatprep.subr.mxu0 0.0
    %805 = vmatpush1.msra.mxu0 %v133
    %806 = vmatprep.subr.mxu0 0.0
    %807 = vmatpush1.msra.mxu0 %v134
    %808 = vmatprep.subr.mxu0 0.0
    %809 = vmatpush1.msra.mxu0 %v135
    %810 = vmatprep.subr.mxu0 0.0
    %811 = vmatpush1.msra.mxu0 %v136
    %812 = vmatprep.subr.mxu0 0.0
    %813 = vmatpush1.msra.mxu0 %v137
    %814 = vmatprep.subr.mxu0 0.0
    %815 = vmatpush1.msra.mxu0 %v138
    %816 = vmatprep.subr.mxu0 0.0
    %817 = vmatpush1.msra.mxu0 %v139
    %818 = vmatprep.subr.mxu0 0.0
    %819 = vmatpush1.msra.mxu0 %v140
    %820 = vmatprep.subr.mxu0 0.0
    %821 = vmatpush1.msra.mxu0 %v141
    %822 = vmatprep.subr.mxu0 0.0
    %823 = vmatpush1.msra.mxu0 %v142
    %824 = vmatprep.subr.mxu0 0.0
    %825 = vmatpush1.msra.mxu0 %v143
    %826 = vmatprep.subr.mxu0 0.0
    %827 = vmatpush1.msra.mxu0 %v144
    %828 = vmatprep.subr.mxu0 0.0
    %829 = vmatpush1.msra.mxu0 %v145
    %830 = vmatprep.subr.mxu0 0.0
    %831 = vmatpush1.msra.mxu0 %v146
    %832 = vmatprep.subr.mxu0 0.0
    %833 = vmatpush1.msra.mxu0 %v147
    %834 = vmatprep.subr.mxu0 0.0
    %835 = vmatpush1.msra.mxu0 %v148
    %836 = vmatprep.subr.mxu0 0.0
    %837 = vmatpush1.msra.mxu0 %v149
    %838 = vmatprep.mubr.f32.mxu0 %v461
    %839 = vmatmul.mubr.f32.gmra.mrb[0].mxu0 %v459
    %v840 = vpop.f32.mrb[0].mxu0
    %v841 = vadd.f32 %v771, %v840
    %v842 = vpop.f32.mrb[0].mxu0
    %843 = vdwg.mxu0
    %844 = vmatprep.subr.mxu0 0.0
    %845 = vmatpush1.msra.mxu0 %v150
    %846 = vmatprep.subr.mxu0 0.0
    %847 = vmatpush1.msra.mxu0 %v151
    %848 = vmatprep.subr.mxu0 0.0
    %849 = vmatpush1.msra.mxu0 %v152
    %850 = vmatprep.subr.mxu0 0.0
    %851 = vmatpush1.msra.mxu0 %v153
    %852 = vmatprep.subr.mxu0 0.0
    %853 = vmatpush1.msra.mxu0 %v154
    %854 = vmatprep.subr.mxu0 0.0
    %855 = vmatpush1.msra.mxu0 %v155
    %856 = vmatprep.subr.mxu0 0.0
    %857 = vmatpush1.msra.mxu0 %v156
    %858 = vmatprep.subr.mxu0 0.0
    %859 = vmatpush1.msra.mxu0 %v157
    %860 = vmatprep.subr.mxu0 0.0
    %861 = vmatpush1.msra.mxu0 %v158
    %862 = vmatprep.subr.mxu0 0.0
    %863 = vmatpush1.msra.mxu0 %v159
    %864 = vmatprep.subr.mxu0 0.0
    %865 = vmatpush1.msra.mxu0 %v160
    %866 = vmatprep.subr.mxu0 0.0
    %867 = vmatpush1.msra.mxu0 %v161
    %868 = vmatprep.subr.mxu0 0.0
    %869 = vmatpush1.msra.mxu0 %v162
    %870 = vmatprep.subr.mxu0 0.0
    %871 = vmatpush1.msra.mxu0 %v163
    %872 = vmatprep.subr.mxu0 0.0
    %873 = vmatpush1.msra.mxu0 %v164
    %874 = vmatprep.subr.mxu0 0.0
    %875 = vmatpush1.msra.mxu0 %v165
    %876 = vmatprep.subr.mxu0 0.0
    %877 = vmatpush1.msra.mxu0 %v166
    %878 = vmatprep.subr.mxu0 0.0
    %879 = vmatpush1.msra.mxu0 %v167
    %880 = vmatprep.subr.mxu0 0.0
    %881 = vmatpush1.msra.mxu0 %v168
    %882 = vmatprep.subr.mxu0 0.0
    %883 = vmatpush1.msra.mxu0 %v169
    %884 = vmatprep.subr.mxu0 0.0
    %885 = vmatpush1.msra.mxu0 %v170
    %886 = vmatprep.subr.mxu0 0.0
    %887 = vmatpush1.msra.mxu0 %v171
    %888 = vmatprep.subr.mxu0 0.0
    %889 = vmatpush1.msra.mxu0 %v172
    %890 = vmatprep.subr.mxu0 0.0
    %891 = vmatpush1.msra.mxu0 %v173
    %892 = vmatprep.subr.mxu0 0.0
    %893 = vmatpush1.msra.mxu0 %v174
    %894 = vmatprep.subr.mxu0 0.0
    %895 = vmatpush1.msra.mxu0 %v175
    %896 = vmatprep.subr.mxu0 0.0
    %897 = vmatpush1.msra.mxu0 %v176
    %898 = vmatprep.subr.mxu0 0.0
    %899 = vmatpush1.msra.mxu0 %v177
    %900 = vmatprep.subr.mxu0 0.0
    %901 = vmatpush1.msra.mxu0 %v178
    %902 = vmatprep.subr.mxu0 0.0
    %903 = vmatpush1.msra.mxu0 %v179
    %904 = vmatprep.subr.mxu0 0.0
    %905 = vmatpush1.msra.mxu0 %v180
    %906 = vmatprep.subr.mxu0 0.0
    %907 = vmatpush1.msra.mxu0 %v181
    %908 = vmatprep.mubr.f32.mxu0 %v477
    %909 = vmatmul.mubr.f32.gmra.mrb[0].mxu0 %v469
    %v910 = vpop.f32.mrb[0].mxu0
    %v911 = vadd.f32 %v841, %v910
    %v912 = vpop.f32.mrb[0].mxu0
    %913 = vdwg.mxu0
    %914 = vmatprep.subr.mxu0 0.0
    %915 = vmatpush1.msra.mxu0 %v182
    %916 = vmatprep.subr.mxu0 0.0
    %917 = vmatpush1.msra.mxu0 %v183
    %918 = vmatprep.subr.mxu0 0.0
    %919 = vmatpush1.msra.mxu0 %v184
    %920 = vmatprep.subr.mxu0 0.0
    %921 = vmatpush1.msra.mxu0 %v185
    %922 = vmatprep.subr.mxu0 0.0
    %923 = vmatpush1.msra.mxu0 %v186
    %924 = vmatprep.subr.mxu0 0.0
    %925 = vmatpush1.msra.mxu0 %v187
    %926 = vmatprep.subr.mxu0 0.0
    %927 = vmatpush1.msra.mxu0 %v188
    %928 = vmatprep.subr.mxu0 0.0
    %929 = vmatpush1.msra.mxu0 %v189
    %930 = vmatprep.subr.mxu0 0.0
    %931 = vmatpush1.msra.mxu0 %v190
    %932 = vmatprep.subr.mxu0 0.0
    %933 = vmatpush1.msra.mxu0 %v191
    %934 = vmatprep.subr.mxu0 0.0
    %935 = vmatpush1.msra.mxu0 %v192
    %936 = vmatprep.subr.mxu0 0.0
    %937 = vmatpush1.msra.mxu0 %v193
    %938 = vmatprep.subr.mxu0 0.0
    %939 = vmatpush1.msra.mxu0 %v194
    %940 = vmatprep.subr.mxu0 0.0
    %941 = vmatpush1.msra.mxu0 %v195
    %942 = vmatprep.subr.mxu0 0.0
    %943 = vmatpush1.msra.mxu0 %v196
    %944 = vmatprep.subr.mxu0 0.0
    %945 = vmatpush1.msra.mxu0 %v197
    %946 = vmatprep.subr.mxu0 0.0
    %947 = vmatpush1.msra.mxu0 %v198
    %948 = vmatprep.subr.mxu0 0.0
    %949 = vmatpush1.msra.mxu0 %v199
    %950 = vmatprep.subr.mxu0 0.0
    %951 = vmatpush1.msra.mxu0 %v200
    %952 = vmatprep.subr.mxu0 0.0
    %953 = vmatpush1.msra.mxu0 %v201
    %954 = vmatprep.subr.mxu0 0.0
    %955 = vmatpush1.msra.mxu0 %v202
    %956 = vmatprep.subr.mxu0 0.0
    %957 = vmatpush1.msra.mxu0 %v203
    %958 = vmatprep.subr.mxu0 0.0
    %959 = vmatpush1.msra.mxu0 %v204
    %960 = vmatprep.subr.mxu0 0.0
    %961 = vmatpush1.msra.mxu0 %v205
    %962 = vmatprep.subr.mxu0 0.0
    %963 = vmatpush1.msra.mxu0 %v206
    %964 = vmatprep.subr.mxu0 0.0
    %965 = vmatpush1.msra.mxu0 %v207
    %966 = vmatprep.subr.mxu0 0.0
    %967 = vmatpush1.msra.mxu0 %v208
    %968 = vmatprep.subr.mxu0 0.0
    %969 = vmatpush1.msra.mxu0 %v209
    %970 = vmatprep.subr.mxu0 0.0
    %971 = vmatpush1.msra.mxu0 %v210
    %972 = vmatprep.subr.mxu0 0.0
    %973 = vmatpush1.msra.mxu0 %v211
    %974 = vmatprep.subr.mxu0 0.0
    %975 = vmatpush1.msra.mxu0 %v212
    %976 = vmatprep.subr.mxu0 0.0
    %977 = vmatpush1.msra.mxu0 %v213
    %978 = vmatprep.mubr.f32.mxu0 %v478
    %979 = vmatmul.mubr.f32.gmra.mrb[0].mxu0 %v476
    %v980 = vpop.f32.mrb[0].mxu0
    %v981 = vadd.f32 %v911, %v980
    %v982 = vpop.f32.mrb[0].mxu0
    %983 = vdwg.mxu0
    %984 = vmatprep.subr.mxu0 0.0
    %985 = vmatpush1.msra.mxu0 %v214
    %986 = vmatprep.subr.mxu0 0.0
    %987 = vmatpush1.msra.mxu0 %v215
    %988 = vmatprep.subr.mxu0 0.0
    %989 = vmatpush1.msra.mxu0 %v216
    %990 = vmatprep.subr.mxu0 0.0
    %991 = vmatpush1.msra.mxu0 %v217
    %992 = vmatprep.subr.mxu0 0.0
    %993 = vmatpush1.msra.mxu0 %v218
    %994 = vmatprep.subr.mxu0 0.0
    %995 = vmatpush1.msra.mxu0 %v219
    %996 = vmatprep.subr.mxu0 0.0
    %997 = vmatpush1.msra.mxu0 %v220
    %998 = vmatprep.subr.mxu0 0.0
    %999 = vmatpush1.msra.mxu0 %v221
    %1000 = vmatprep.subr.mxu0 0.0
    %1001 = vmatpush1.msra.mxu0 %v222
    %1002 = vmatprep.subr.mxu0 0.0
    %1003 = vmatpush1.msra.mxu0 %v223
    %1004 = vmatprep.subr.mxu0 0.0
    %1005 = vmatpush1.msra.mxu0 %v224
    %1006 = vmatprep.subr.mxu0 0.0
    %1007 = vmatpush1.msra.mxu0 %v225
    %1008 = vmatprep.subr.mxu0 0.0
    %1009 = vmatpush1.msra.mxu0 %v226
    %1010 = vmatprep.subr.mxu0 0.0
    %1011 = vmatpush1.msra.mxu0 %v227
    %1012 = vmatprep.subr.mxu0 0.0
    %1013 = vmatpush1.msra.mxu0 %v228
    %1014 = vmatprep.subr.mxu0 0.0
    %1015 = vmatpush1.msra.mxu0 %v229
    %1016 = vmatprep.subr.mxu0 0.0
    %1017 = vmatpush1.msra.mxu0 %v230
    %1018 = vmatprep.subr.mxu0 0.0
    %1019 = vmatpush1.msra.mxu0 %v231
    %1020 = vmatprep.subr.mxu0 0.0
    %1021 = vmatpush1.msra.mxu0 %v232
    %1022 = vmatprep.subr.mxu0 0.0
    %1023 = vmatpush1.msra.mxu0 %v233
    %1024 = vmatprep.subr.mxu0 0.0
    %1025 = vmatpush1.msra.mxu0 %v234
    %1026 = vmatprep.subr.mxu0 0.0
    %1027 = vmatpush1.msra.mxu0 %v235
    %1028 = vmatprep.subr.mxu0 0.0
    %1029 = vmatpush1.msra.mxu0 %v236
    %1030 = vmatprep.subr.mxu0 0.0
    %1031 = vmatpush1.msra.mxu0 %v237
    %1032 = vmatprep.subr.mxu0 0.0
    %1033 = vmatpush1.msra.mxu0 %v238
    %1034 = vmatprep.subr.mxu0 0.0
    %1035 = vmatpush1.msra.mxu0 %v239
    %1036 = vmatprep.subr.mxu0 0.0
    %1037 = vmatpush1.msra.mxu0 %v240
    %1038 = vmatprep.subr.mxu0 0.0
    %1039 = vmatpush1.msra.mxu0 %v241
    %1040 = vmatprep.subr.mxu0 0.0
    %1041 = vmatpush1.msra.mxu0 %v242
    %1042 = vmatprep.subr.mxu0 0.0
    %1043 = vmatpush1.msra.mxu0 %v243
    %1044 = vmatprep.subr.mxu0 0.0
    %1045 = vmatpush1.msra.mxu0 %v244
    %1046 = vmatprep.subr.mxu0 0.0
    %1047 = vmatpush1.msra.mxu0 %v245
    %1048 = vmatprep.mubr.f32.mxu0 %v494
    %1049 = vmatmul.mubr.f32.gmra.mrb[0].mxu0 %v486
    %v1050 = vpop.f32.mrb[0].mxu0
    %v1051 = vadd.f32 %v981, %v1050
    %v1052 = vpop.f32.mrb[0].mxu0
    %1053 = vdwg.mxu0
    %1054 = vmatprep.subr.mxu0 0.0
    %1055 = vmatpush1.msra.mxu0 %v246
    %1056 = vmatprep.subr.mxu0 0.0
    %1057 = vmatpush1.msra.mxu0 %v247
    %1058 = vmatprep.subr.mxu0 0.0
    %1059 = vmatpush1.msra.mxu0 %v248
    %1060 = vmatprep.subr.mxu0 0.0
    %1061 = vmatpush1.msra.mxu0 %v249
    %1062 = vmatprep.subr.mxu0 0.0
    %1063 = vmatpush1.msra.mxu0 %v250
    %1064 = vmatprep.subr.mxu0 0.0
    %1065 = vmatpush1.msra.mxu0 %v251
    %1066 = vmatprep.subr.mxu0 0.0
    %1067 = vmatpush1.msra.mxu0 %v252
    %1068 = vmatprep.subr.mxu0 0.0
    %1069 = vmatpush1.msra.mxu0 %v253
    %1070 = vmatprep.subr.mxu0 0.0
    %1071 = vmatpush1.msra.mxu0 %v254
    %1072 = vmatprep.subr.mxu0 0.0
    %1073 = vmatpush1.msra.mxu0 %v255
    %1074 = vmatprep.subr.mxu0 0.0
    %1075 = vmatpush1.msra.mxu0 %v256
    %1076 = vmatprep.subr.mxu0 0.0
    %1077 = vmatpush1.msra.mxu0 %v257
    %1078 = vmatprep.subr.mxu0 0.0
    %1079 = vmatpush1.msra.mxu0 %v258
    %1080 = vmatprep.subr.mxu0 0.0
    %1081 = vmatpush1.msra.mxu0 %v259
    %1082 = vmatprep.subr.mxu0 0.0
    %1083 = vmatpush1.msra.mxu0 %v260
    %1084 = vmatprep.subr.mxu0 0.0
    %1085 = vmatpush1.msra.mxu0 %v261
    %1086 = vmatprep.subr.mxu0 0.0
    %1087 = vmatpush1.msra.mxu0 %v262
    %1088 = vmatprep.subr.mxu0 0.0
    %1089 = vmatpush1.msra.mxu0 %v263
    %1090 = vmatprep.subr.mxu0 0.0
    %1091 = vmatpush1.msra.mxu0 %v264
    %1092 = vmatprep.subr.mxu0 0.0
    %1093 = vmatpush1.msra.mxu0 %v265
    %1094 = vmatprep.subr.mxu0 0.0
    %1095 = vmatpush1.msra.mxu0 %v266
    %1096 = vmatprep.subr.mxu0 0.0
    %1097 = vmatpush1.msra.mxu0 %v267
    %1098 = vmatprep.subr.mxu0 0.0
    %1099 = vmatpush1.msra.mxu0 %v268
    %1100 = vmatprep.subr.mxu0 0.0
    %1101 = vmatpush1.msra.mxu0 %v269
    %1102 = vmatprep.subr.mxu0 0.0
    %1103 = vmatpush1.msra.mxu0 %v270
    %1104 = vmatprep.subr.mxu0 0.0
    %1105 = vmatpush1.msra.mxu0 %v271
    %1106 = vmatprep.subr.mxu0 0.0
    %1107 = vmatpush1.msra.mxu0 %v272
    %1108 = vmatprep.subr.mxu0 0.0
    %1109 = vmatpush1.msra.mxu0 %v273
    %1110 = vmatprep.subr.mxu0 0.0
    %1111 = vmatpush1.msra.mxu0 %v274
    %1112 = vmatprep.subr.mxu0 0.0
    %1113 = vmatpush1.msra.mxu0 %v275
    %1114 = vmatprep.subr.mxu0 0.0
    %1115 = vmatpush1.msra.mxu0 %v276
    %1116 = vmatprep.subr.mxu0 0.0
    %1117 = vmatpush1.msra.mxu0 %v277
    %1118 = vmatprep.mubr.f32.mxu0 %v495
    %1119 = vmatmul.mubr.f32.gmra.mrb[0].mxu0 %v493
    %v1120 = vpop.f32.mrb[0].mxu0
    %v1121 = vadd.f32 %v1051, %v1120
    %v1122 = vpop.f32.mrb[0].mxu0
    %1123 = vdwg.mxu0
    %1124 = vmatprep.subr.mxu0 0.0
    %1125 = vmatpush1.msra.mxu0 %v278
    %1126 = vmatprep.subr.mxu0 0.0
    %1127 = vmatpush1.msra.mxu0 %v279
    %1128 = vmatprep.subr.mxu0 0.0
    %1129 = vmatpush1.msra.mxu0 %v280
    %1130 = vmatprep.subr.mxu0 0.0
    %1131 = vmatpush1.msra.mxu0 %v281
    %1132 = vmatprep.subr.mxu0 0.0
    %1133 = vmatpush1.msra.mxu0 %v282
    %1134 = vmatprep.subr.mxu0 0.0
    %1135 = vmatpush1.msra.mxu0 %v283
    %1136 = vmatprep.subr.mxu0 0.0
    %1137 = vmatpush1.msra.mxu0 %v284
    %1138 = vmatprep.subr.mxu0 0.0
    %1139 = vmatpush1.msra.mxu0 %v285
    %1140 = vmatprep.subr.mxu0 0.0
    %1141 = vmatpush1.msra.mxu0 %v286
    %1142 = vmatprep.subr.mxu0 0.0
    %1143 = vmatpush1.msra.mxu0 %v287
    %1144 = vmatprep.subr.mxu0 0.0
    %1145 = vmatpush1.msra.mxu0 %v288
    %1146 = vmatprep.subr.mxu0 0.0
    %1147 = vmatpush1.msra.mxu0 %v289
    %1148 = vmatprep.subr.mxu0 0.0
    %1149 = vmatpush1.msra.mxu0 %v290
    %1150 = vmatprep.subr.mxu0 0.0
    %1151 = vmatpush1.msra.mxu0 %v291
    %1152 = vmatprep.subr.mxu0 0.0
    %1153 = vmatpush1.msra.mxu0 %v292
    %1154 = vmatprep.subr.mxu0 0.0
    %1155 = vmatpush1.msra.mxu0 %v293
    %1156 = vmatprep.subr.mxu0 0.0
    %1157 = vmatpush1.msra.mxu0 %v294
    %1158 = vmatprep.subr.mxu0 0.0
    %1159 = vmatpush1.msra.mxu0 %v295
    %1160 = vmatprep.subr.mxu0 0.0
    %1161 = vmatpush1.msra.mxu0 %v296
    %1162 = vmatprep.subr.mxu0 0.0
    %1163 = vmatpush1.msra.mxu0 %v297
    %1164 = vmatprep.subr.mxu0 0.0
    %1165 = vmatpush1.msra.mxu0 %v298
    %1166 = vmatprep.subr.mxu0 0.0
    %1167 = vmatpush1.msra.mxu0 %v299
    %1168 = vmatprep.subr.mxu0 0.0
    %1169 = vmatpush1.msra.mxu0 %v300
    %1170 = vmatprep.subr.mxu0 0.0
    %1171 = vmatpush1.msra.mxu0 %v301
    %1172 = vmatprep.subr.mxu0 0.0
    %1173 = vmatpush1.msra.mxu0 %v302
    %1174 = vmatprep.subr.mxu0 0.0
    %1175 = vmatpush1.msra.mxu0 %v303
    %1176 = vmatprep.subr.mxu0 0.0
    %1177 = vmatpush1.msra.mxu0 %v304
    %1178 = vmatprep.subr.mxu0 0.0
    %1179 = vmatpush1.msra.mxu0 %v305
    %1180 = vmatprep.subr.mxu0 0.0
    %1181 = vmatpush1.msra.mxu0 %v306
    %1182 = vmatprep.subr.mxu0 0.0
    %1183 = vmatpush1.msra.mxu0 %v307
    %1184 = vmatprep.subr.mxu0 0.0
    %1185 = vmatpush1.msra.mxu0 %v308
    %1186 = vmatprep.subr.mxu0 0.0
    %1187 = vmatpush1.msra.mxu0 %v309
    %1188 = vmatprep.mubr.f32.mxu0 %v511
    %1189 = vmatmul.mubr.f32.gmra.mrb[0].mxu0 %v503
    %v1190 = vpop.f32.mrb[0].mxu0
    %v1191 = vadd.f32 %v1121, %v1190
    %v1192 = vpop.f32.mrb[0].mxu0
    %1193 = vdwg.mxu0
    %1194 = vmatprep.subr.mxu0 0.0
    %1195 = vmatpush1.msra.mxu0 %v310
    %1196 = vmatprep.subr.mxu0 0.0
    %1197 = vmatpush1.msra.mxu0 %v311
    %1198 = vmatprep.subr.mxu0 0.0
    %1199 = vmatpush1.msra.mxu0 %v312
    %1200 = vmatprep.subr.mxu0 0.0
    %1201 = vmatpush1.msra.mxu0 %v313
    %1202 = vmatprep.subr.mxu0 0.0
    %1203 = vmatpush1.msra.mxu0 %v314
    %1204 = vmatprep.subr.mxu0 0.0
    %1205 = vmatpush1.msra.mxu0 %v315
    %1206 = vmatprep.subr.mxu0 0.0
    %1207 = vmatpush1.msra.mxu0 %v316
    %1208 = vmatprep.subr.mxu0 0.0
    %1209 = vmatpush1.msra.mxu0 %v317
    %1210 = vmatprep.subr.mxu0 0.0
    %1211 = vmatpush1.msra.mxu0 %v318
    %1212 = vmatprep.subr.mxu0 0.0
    %1213 = vmatpush1.msra.mxu0 %v319
    %1214 = vmatprep.subr.mxu0 0.0
    %1215 = vmatpush1.msra.mxu0 %v320
    %1216 = vmatprep.subr.mxu0 0.0
    %1217 = vmatpush1.msra.mxu0 %v321
    %1218 = vmatprep.subr.mxu0 0.0
    %1219 = vmatpush1.msra.mxu0 %v322
    %1220 = vmatprep.subr.mxu0 0.0
    %1221 = vmatpush1.msra.mxu0 %v323
    %1222 = vmatprep.subr.mxu0 0.0
    %1223 = vmatpush1.msra.mxu0 %v324
    %1224 = vmatprep.subr.mxu0 0.0
    %1225 = vmatpush1.msra.mxu0 %v325
    %1226 = vmatprep.subr.mxu0 0.0
    %1227 = vmatpush1.msra.mxu0 %v326
    %1228 = vmatprep.subr.mxu0 0.0
    %1229 = vmatpush1.msra.mxu0 %v327
    %1230 = vmatprep.subr.mxu0 0.0
    %1231 = vmatpush1.msra.mxu0 %v328
    %1232 = vmatprep.subr.mxu0 0.0
    %1233 = vmatpush1.msra.mxu0 %v329
    %1234 = vmatprep.subr.mxu0 0.0
    %1235 = vmatpush1.msra.mxu0 %v330
    %1236 = vmatprep.subr.mxu0 0.0
    %1237 = vmatpush1.msra.mxu0 %v331
    %1238 = vmatprep.subr.mxu0 0.0
    %1239 = vmatpush1.msra.mxu0 %v332
    %1240 = vmatprep.subr.mxu0 0.0
    %1241 = vmatpush1.msra.mxu0 %v333
    %1242 = vmatprep.subr.mxu0 0.0
    %1243 = vmatpush1.msra.mxu0 %v334
    %1244 = vmatprep.subr.mxu0 0.0
    %1245 = vmatpush1.msra.mxu0 %v335
    %1246 = vmatprep.subr.mxu0 0.0
    %1247 = vmatpush1.msra.mxu0 %v336
    %1248 = vmatprep.subr.mxu0 0.0
    %1249 = vmatpush1.msra.mxu0 %v337
    %1250 = vmatprep.subr.mxu0 0.0
    %1251 = vmatpush1.msra.mxu0 %v338
    %1252 = vmatprep.subr.mxu0 0.0
    %1253 = vmatpush1.msra.mxu0 %v339
    %1254 = vmatprep.subr.mxu0 0.0
    %1255 = vmatpush1.msra.mxu0 %v340
    %1256 = vmatprep.subr.mxu0 0.0
    %1257 = vmatpush1.msra.mxu0 %v341
    %1258 = vmatprep.mubr.f32.mxu0 %v512
    %1259 = vmatmul.mubr.f32.gmra.mrb[0].mxu0 %v510
    %v1260 = vpop.f32.mrb[0].mxu0
    %v1261 = vadd.f32 %v1191, %v1260
    %v1262 = vpop.f32.mrb[0].mxu0
    %1263 = vdwg.mxu0
    %1264 = vmatprep.subr.mxu0 0.0
    %1265 = vmatpush1.msra.mxu0 %v342
    %1266 = vmatprep.subr.mxu0 0.0
    %1267 = vmatpush1.msra.mxu0 %v343
    %1268 = vmatprep.subr.mxu0 0.0
    %1269 = vmatpush1.msra.mxu0 %v344
    %1270 = vmatprep.subr.mxu0 0.0
    %1271 = vmatpush1.msra.mxu0 %v345
    %1272 = vmatprep.subr.mxu0 0.0
    %1273 = vmatpush1.msra.mxu0 %v346
    %1274 = vmatprep.subr.mxu0 0.0
    %1275 = vmatpush1.msra.mxu0 %v347
    %1276 = vmatprep.subr.mxu0 0.0
    %1277 = vmatpush1.msra.mxu0 %v348
    %1278 = vmatprep.subr.mxu0 0.0
    %1279 = vmatpush1.msra.mxu0 %v349
    %1280 = vmatprep.subr.mxu0 0.0
    %1281 = vmatpush1.msra.mxu0 %v350
    %1282 = vmatprep.subr.mxu0 0.0
    %1283 = vmatpush1.msra.mxu0 %v351
    %1284 = vmatprep.subr.mxu0 0.0
    %1285 = vmatpush1.msra.mxu0 %v352
    %1286 = vmatprep.subr.mxu0 0.0
    %1287 = vmatpush1.msra.mxu0 %v353
    %1288 = vmatprep.subr.mxu0 0.0
    %1289 = vmatpush1.msra.mxu0 %v354
    %1290 = vmatprep.subr.mxu0 0.0
    %1291 = vmatpush1.msra.mxu0 %v355
    %1292 = vmatprep.subr.mxu0 0.0
    %1293 = vmatpush1.msra.mxu0 %v356
    %1294 = vmatprep.subr.mxu0 0.0
    %1295 = vmatpush1.msra.mxu0 %v357
    %1296 = vmatprep.subr.mxu0 0.0
    %1297 = vmatpush1.msra.mxu0 %v358
    %1298 = vmatprep.subr.mxu0 0.0
    %1299 = vmatpush1.msra.mxu0 %v359
    %1300 = vmatprep.subr.mxu0 0.0
    %1301 = vmatpush1.msra.mxu0 %v360
    %1302 = vmatprep.subr.mxu0 0.0
    %1303 = vmatpush1.msra.mxu0 %v361
    %1304 = vmatprep.subr.mxu0 0.0
    %1305 = vmatpush1.msra.mxu0 %v362
    %1306 = vmatprep.subr.mxu0 0.0
    %1307 = vmatpush1.msra.mxu0 %v363
    %1308 = vmatprep.subr.mxu0 0.0
    %1309 = vmatpush1.msra.mxu0 %v364
    %1310 = vmatprep.subr.mxu0 0.0
    %1311 = vmatpush1.msra.mxu0 %v365
    %1312 = vmatprep.subr.mxu0 0.0
    %1313 = vmatpush1.msra.mxu0 %v366
    %1314 = vmatprep.subr.mxu0 0.0
    %1315 = vmatpush1.msra.mxu0 %v367
    %1316 = vmatprep.subr.mxu0 0.0
    %1317 = vmatpush1.msra.mxu0 %v368
    %1318 = vmatprep.subr.mxu0 0.0
    %1319 = vmatpush1.msra.mxu0 %v369
    %1320 = vmatprep.subr.mxu0 0.0
    %1321 = vmatpush1.msra.mxu0 %v370
    %1322 = vmatprep.subr.mxu0 0.0
    %1323 = vmatpush1.msra.mxu0 %v371
    %1324 = vmatprep.subr.mxu0 0.0
    %1325 = vmatpush1.msra.mxu0 %v372
    %1326 = vmatprep.subr.mxu0 0.0
    %1327 = vmatpush1.msra.mxu0 %v373
    %1328 = vmatprep.mubr.f32.mxu0 %v528
    %1329 = vmatmul.mubr.f32.gmra.mrb[0].mxu0 %v520
    %v1330 = vpop.f32.mrb[0].mxu0
    %v1331 = vadd.f32 %v1261, %v1330
    %v1332 = vpop.f32.mrb[0].mxu0
    %1333 = vdwg.mxu0
    %1334 = vmatprep.subr.mxu0 0.0
    %1335 = vmatpush1.msra.mxu0 %v374
    %1336 = vmatprep.subr.mxu0 0.0
    %1337 = vmatpush1.msra.mxu0 %v375
    %1338 = vmatprep.subr.mxu0 0.0
    %1339 = vmatpush1.msra.mxu0 %v376
    %1340 = vmatprep.subr.mxu0 0.0
    %1341 = vmatpush1.msra.mxu0 %v377
    %1342 = vmatprep.subr.mxu0 0.0
    %1343 = vmatpush1.msra.mxu0 %v378
    %1344 = vmatprep.subr.mxu0 0.0
    %1345 = vmatpush1.msra.mxu0 %v379
    %1346 = vmatprep.subr.mxu0 0.0
    %1347 = vmatpush1.msra.mxu0 %v380
    %1348 = vmatprep.subr.mxu0 0.0
    %1349 = vmatpush1.msra.mxu0 %v381
    %1350 = vmatprep.subr.mxu0 0.0
    %1351 = vmatpush1.msra.mxu0 %v382
    %1352 = vmatprep.subr.mxu0 0.0
    %1353 = vmatpush1.msra.mxu0 %v383
    %1354 = vmatprep.subr.mxu0 0.0
    %1355 = vmatpush1.msra.mxu0 %v384
    %1356 = vmatprep.subr.mxu0 0.0
    %1357 = vmatpush1.msra.mxu0 %v385
    %1358 = vmatprep.subr.mxu0 0.0
    %1359 = vmatpush1.msra.mxu0 %v386
    %1360 = vmatprep.subr.mxu0 0.0
    %1361 = vmatpush1.msra.mxu0 %v387
    %1362 = vmatprep.subr.mxu0 0.0
    %1363 = vmatpush1.msra.mxu0 %v388
    %1364 = vmatprep.subr.mxu0 0.0
    %1365 = vmatpush1.msra.mxu0 %v389
    %1366 = vmatprep.subr.mxu0 0.0
    %1367 = vmatpush1.msra.mxu0 %v390
    %1368 = vmatprep.subr.mxu0 0.0
    %1369 = vmatpush1.msra.mxu0 %v391
    %1370 = vmatprep.subr.mxu0 0.0
    %1371 = vmatpush1.msra.mxu0 %v392
    %1372 = vmatprep.subr.mxu0 0.0
    %1373 = vmatpush1.msra.mxu0 %v393
    %1374 = vmatprep.subr.mxu0 0.0
    %1375 = vmatpush1.msra.mxu0 %v394
    %1376 = vmatprep.subr.mxu0 0.0
    %1377 = vmatpush1.msra.mxu0 %v395
    %1378 = vmatprep.subr.mxu0 0.0
    %1379 = vmatpush1.msra.mxu0 %v396
    %1380 = vmatprep.subr.mxu0 0.0
    %1381 = vmatpush1.msra.mxu0 %v397
    %1382 = vmatprep.subr.mxu0 0.0
    %1383 = vmatpush1.msra.mxu0 %v398
    %1384 = vmatprep.subr.mxu0 0.0
    %1385 = vmatpush1.msra.mxu0 %v399
    %1386 = vmatprep.subr.mxu0 0.0
    %1387 = vmatpush1.msra.mxu0 %v400
    %1388 = vmatprep.subr.mxu0 0.0
    %1389 = vmatpush1.msra.mxu0 %v401
    %1390 = vmatprep.subr.mxu0 0.0
    %1391 = vmatpush1.msra.mxu0 %v402
    %1392 = vmatprep.subr.mxu0 0.0
    %1393 = vmatpush1.msra.mxu0 %v403
    %1394 = vmatprep.subr.mxu0 0.0
    %1395 = vmatpush1.msra.mxu0 %v404
    %1396 = vmatprep.subr.mxu0 0.0
    %1397 = vmatpush1.msra.mxu0 %v405
    %1398 = vmatprep.mubr.f32.mxu0 %v529
    %1399 = vmatmul.mubr.f32.gmra.mrb[0].mxu0 %v527
    %v1400 = vpop.f32.mrb[0].mxu0
    %v1401 = vadd.f32 %v1331, %v1400
    %v1402 = vpop.f32.mrb[0].mxu0
    %1403 = vdwg.mxu0
    %1404 = vmatprep.subr.mxu0 0.0
    %1405 = vmatpush1.msra.mxu0 %v406
    %1406 = vmatprep.subr.mxu0 0.0
    %1407 = vmatpush1.msra.mxu0 %v407
    %1408 = vmatprep.subr.mxu0 0.0
    %1409 = vmatpush1.msra.mxu0 %v408
    %1410 = vmatprep.subr.mxu0 0.0
    %1411 = vmatpush1.msra.mxu0 %v409
    %1412 = vmatprep.subr.mxu0 0.0
    %1413 = vmatpush1.msra.mxu0 %v410
    %1414 = vmatprep.subr.mxu0 0.0
    %1415 = vmatpush1.msra.mxu0 %v411
    %1416 = vmatprep.subr.mxu0 0.0
    %1417 = vmatpush1.msra.mxu0 %v412
    %1418 = vmatprep.subr.mxu0 0.0
    %1419 = vmatpush1.msra.mxu0 %v413
    %1420 = vmatprep.subr.mxu0 0.0
    %1421 = vmatpush1.msra.mxu0 0.0
    %1422 = vmatprep.subr.mxu0 0.0
    %1423 = vmatpush1.msra.mxu0 0.0
    %1424 = vmatprep.subr.mxu0 0.0
    %1425 = vmatpush1.msra.mxu0 0.0
    %1426 = vmatprep.subr.mxu0 0.0
    %1427 = vmatpush1.msra.mxu0 0.0
    %1428 = vmatprep.subr.mxu0 0.0
    %1429 = vmatpush1.msra.mxu0 0.0
    %1430 = vmatprep.subr.mxu0 0.0
    %1431 = vmatpush1.msra.mxu0 0.0
    %1432 = vmatprep.subr.mxu0 0.0
    %1433 = vmatpush1.msra.mxu0 0.0
    %1434 = vmatprep.subr.mxu0 0.0
    %1435 = vmatpush1.msra.mxu0 0.0
    %1436 = vmatprep.subr.mxu0 0.0
    %1437 = vmatpush1.msra.mxu0 0.0
    %1438 = vmatprep.subr.mxu0 0.0
    %1439 = vmatpush1.msra.mxu0 0.0
    %1440 = vmatprep.subr.mxu0 0.0
    %1441 = vmatpush1.msra.mxu0 0.0
    %1442 = vmatprep.subr.mxu0 0.0
    %1443 = vmatpush1.msra.mxu0 0.0
    %1444 = vmatprep.subr.mxu0 0.0
    %1445 = vmatpush1.msra.mxu0 0.0
    %1446 = vmatprep.subr.mxu0 0.0
    %1447 = vmatpush1.msra.mxu0 0.0
    %1448 = vmatprep.subr.mxu0 0.0
    %1449 = vmatpush1.msra.mxu0 0.0
    %1450 = vmatprep.subr.mxu0 0.0
    %1451 = vmatpush1.msra.mxu0 0.0
    %1452 = vmatprep.subr.mxu0 0.0
    %1453 = vmatpush1.msra.mxu0 0.0
    %1454 = vmatprep.subr.mxu0 0.0
    %1455 = vmatpush1.msra.mxu0 0.0
    %1456 = vmatprep.subr.mxu0 0.0
    %1457 = vmatpush1.msra.mxu0 0.0
    %1458 = vmatprep.subr.mxu0 0.0
    %1459 = vmatpush1.msra.mxu0 0.0
    %1460 = vmatprep.subr.mxu0 0.0
    %1461 = vmatpush1.msra.mxu0 0.0
    %1462 = vmatprep.subr.mxu0 0.0
    %1463 = vmatpush1.msra.mxu0 0.0
    %1464 = vmatprep.subr.mxu0 0.0
    %1465 = vmatpush1.msra.mxu0 0.0
    %1466 = vmatprep.subr.mxu0 0.0
    %1467 = vmatpush1.msra.mxu0 0.0
    %1468 = vmatprep.mubr.f32.mxu0 0.0
    %1469 = vmatmul.mubr.f32.gmra.mrb[0].mxu0 %v562
    %v1470 = vpop.f32.mrb[0].mxu0
    %v1471 = vadd.f32 %v1401, %v1470
    %v1472 = vpop.f32.mrb[0].mxu0
    %1473 = vdwg.mxu0
    %1474 = vst [vmem:[#allocation2] sm:$0x3] %v1471
    // Predicated region
    $region14: #{cnn_forward.7} parent=1 // pred_check
      _
    $region15: #{cnn_forward.7} parent=1 // pred_check_branch
      %1476 = sbr.rel (0) target = $region17
    $region16: #{cnn_forward.7} parent=1 // pred_region
      %s1478 = ssub.s32 32, 32
      %1479 = vsyncadd [#allocation3], %s1478
      %s1481 = sshll.u32 [#allocation2], 4
      %s1482 = int_to_ptr.vmem [resolvable:$true] %s1481
      %1484 = dma.vmem_to_hbm [thread:$0]  %s1482, 32, %s3, [#allocation3]
    $region17: #{cnn_forward.7} parent=1 // pred_fallthru
      _
    // Predicated region
    $region18: #{cnn_forward.7} parent=1 // pred_check
      _
    $region19: #{cnn_forward.7} parent=1 // pred_check_branch
      %1486 = sbr.rel (0) target = $region21
    $region20: #{cnn_forward.7} parent=1 // pred_region
      %1487 = dma.done [#allocation3], 32
    $region21: #{cnn_forward.7} parent=1 // pred_fallthru
      _
    %1488 = vsyncpa [#allocation3], 1

</llo_original>
